<compile_context>
chip_gen: v6e
topology: v6e:2x2x1
jax: 0.10.0
libtpu: 0.0.40
codegen_flags: <defaults>
</compile_context>

<pallas_src>
import functools
import math

import jax
import jax.numpy as jnp
from jax.experimental import pallas as pl
from jax.experimental.pallas import tpu as pltpu

EPS = 1e-5  # nn.LayerNorm default


def _layer_norm(x, gamma, beta):
    # x: (S, E); gamma/beta: (1, E). Biased variance like torch.nn.LayerNorm.
    mu = jnp.mean(x, axis=-1, keepdims=True)
    var = jnp.mean((x - mu) ** 2, axis=-1, keepdims=True)
    return (x - mu) * jax.lax.rsqrt(var + EPS) * gamma + beta


def fused_encoder_kernel(num_heads, num_layers,
                         ids_ref, emb_ref, pe_ref,
                         wqkv_ref, bqkv_ref, wo_ref, bo_ref,
                         g1_ref, be1_ref,
                         w1_ref, bf1_ref, w2_ref, bf2_ref,
                         g2_ref, be2_ref,
                         wout_ref, bout_ref,
                         o_ref):
    S, E = pe_ref.shape
    V = emb_ref.shape[0]
    H = num_heads
    dh = E // H

    # ---- nn.Embedding lookup as a one-hot matmul (fused, MXU-friendly) ----
    ids = ids_ref[...]                                        # (S, 1) int32
    lane = jax.lax.broadcasted_iota(jnp.int32, (S, V), 1)
    onehot = (lane == ids).astype(jnp.float32)                # (S, V)
    x = jnp.dot(onehot, emb_ref[...],
                preferred_element_type=jnp.float32)           # (S, E)

    # ---- positional encoding ----------------------------------------------
    # TODO(synk): dropout inside PositionalEncoding omitted (eval/deterministic).
    x = x + pe_ref[...]

    # ---- encoder layers (post-LN), statically unrolled ---------------------
    for l in range(num_layers):
        # Fused QKV projection. 1/sqrt(dh) is pre-folded into Wq / bq.
        qkv = jnp.dot(x, wqkv_ref[l],
                      preferred_element_type=jnp.float32) + bqkv_ref[l]   # (S, 3E)
        q = qkv[:, 0 * E:1 * E]
        k = qkv[:, 1 * E:2 * E]
        v = qkv[:, 2 * E:3 * E]

        qh = q.reshape(S, H, dh).transpose(1, 0, 2)           # (H, S, dh)
        kh = k.reshape(S, H, dh).transpose(1, 0, 2)
        vh = v.reshape(S, H, dh).transpose(1, 0, 2)

        # TODO(synk): attention mask not applied (reference forward uses mask=None).
        s = jnp.einsum('hqd,hkd->hqk', qh, kh,
                       preferred_element_type=jnp.float32)    # (H, S, S)
        s = s - jnp.max(s, axis=-1, keepdims=True)
        p = jnp.exp(s)
        p = p * pl.reciprocal(jnp.sum(p, axis=-1, keepdims=True), approx=True)
        ctx = jnp.einsum('hqk,hkd->hqd', p, vh,
                         preferred_element_type=jnp.float32)  # (H, S, dh)
        ctx = ctx.transpose(1, 0, 2).reshape(S, E)

        attn = jnp.dot(ctx, wo_ref[l],
                       preferred_element_type=jnp.float32) + bo_ref[l]

        # residual + LayerNorm 1
        y = _layer_norm(x + attn, g1_ref[l], be1_ref[l])

        # position-wise feed-forward (ReLU)
        hid = jnp.maximum(
            jnp.dot(y, w1_ref[l], preferred_element_type=jnp.float32) + bf1_ref[l],
            0.0)
        ff = jnp.dot(hid, w2_ref[l],
                     preferred_element_type=jnp.float32) + bf2_ref[l]

        # residual + LayerNorm 2
        x = _layer_norm(y + ff, g2_ref[l], be2_ref[l])

    # ---- final vocab projection --------------------------------------------
    o_ref[...] = jnp.dot(x, wout_ref[...],
                         preferred_element_type=jnp.float32) + bout_ref[...]


# --------------------------- pallas wrapper ----------------------------------


def sinusoidal_pe(seq_len, embed_dim):
    pos = jnp.arange(seq_len, dtype=jnp.float32)[:, None]
    div = jnp.exp(jnp.arange(0, embed_dim, 2, dtype=jnp.float32)
                  * (-math.log(10000.0) / embed_dim))
    pe = jnp.zeros((seq_len, embed_dim), jnp.float32)
    pe = pe.at[:, 0::2].set(jnp.sin(pos * div))
    pe = pe.at[:, 1::2].set(jnp.cos(pos * div))
    return pe


def transformer_encoder(ids, params, num_heads):
    B, S = ids.shape
    emb = params['embedding']                    # (V, E)
    V, E = emb.shape
    L = params['wqkv'].shape[0]

    pe = sinusoidal_pe(S, E)                     # (S, E)
    ids2 = ids.reshape(B * S, 1).astype(jnp.int32)

    def full(shape):
        return pl.BlockSpec(shape, lambda b, _s=shape: (0,) * len(_s))

    weights = (params['wqkv'], params['bqkv'], params['wo'], params['bo'],
               params['g1'], params['be1'],
               params['w1'], params['bf1'], params['w2'], params['bf2'],
               params['g2'], params['be2'],
               params['w_out'], params['b_out'])

    in_specs = ([pl.BlockSpec((S, 1), lambda b: (b, 0)),     # ids (per-batch row block)
                 full((V, E)),                               # embedding table
                 full((S, E))]                               # positional encoding
                + [full(w.shape) for w in weights])

    out = pl.pallas_call(
        functools.partial(fused_encoder_kernel, num_heads, L),
        out_shape=jax.ShapeDtypeStruct((B * S, V), jnp.float32),
        grid=(B,),
        in_specs=in_specs,
        out_specs=pl.BlockSpec((S, V), lambda b: (b, 0)),
        compiler_params=pltpu.CompilerParams(
            dimension_semantics=("parallel",)),
    )(ids2, emb, pe, *weights)
    return out.reshape(B, S, V)


# --------------------------- parameter init ----------------------------------


def init_params(key, vocab_size, embed_dim, hidden_dim, num_layers, num_heads):
    E, F, L, V = embed_dim, hidden_dim, num_layers, vocab_size
    scale = 1.0 / math.sqrt(E // num_heads)

    def nrm(k, shape, s=0.02):
        return s * jax.random.normal(k, shape, jnp.float32)

    keys = iter(jax.random.split(key, 32))
    params = {'embedding': jax.random.normal(next(keys), (V, E), jnp.float32)}

    wq = nrm(next(keys), (L, E, E)); bq = nrm(next(keys), (L, 1, E), 0.01)
    wk = nrm(next(keys), (L, E, E)); bk = nrm(next(keys), (L, 1, E), 0.01)
    wv = nrm(next(keys), (L, E, E)); bv = nrm(next(keys), (L, 1, E), 0.01)
    # fold the attention 1/sqrt(dh) scale into the Q projection (free at init)
    params['wqkv'] = jnp.concatenate([wq * scale, wk, wv], axis=2)   # (L, E, 3E)
    params['bqkv'] = jnp.concatenate([bq * scale, bk, bv], axis=2)   # (L, 1, 3E)

    params['wo'] = nrm(next(keys), (L, E, E))
    params['bo'] = nrm(next(keys), (L, 1, E), 0.01)
    params['g1'] = 1.0 + nrm(next(keys), (L, 1, E), 0.01)
    params['be1'] = nrm(next(keys), (L, 1, E), 0.01)
    params['w1'] = nrm(next(keys), (L, E, F))
    params['bf1'] = nrm(next(keys), (L, 1, F), 0.01)
    params['w2'] = nrm(next(keys), (L, F, E))
    params['bf2'] = nrm(next(keys), (L, 1, E), 0.01)
    params['g2'] = 1.0 + nrm(next(keys), (L, 1, E), 0.01)
    params['be2'] = nrm(next(keys), (L, 1, E), 0.01)
    params['w_out'] = nrm(next(keys), (E, V))
    params['b_out'] = nrm(next(keys), (1, V), 0.01)
    return params


# ------------------------------- main -----------------------------------------

if __name__ == "__main__":
    vocab_size, embed_dim, num_heads, hidden_dim, num_layers = 64, 32, 4, 64, 2
    B, S = 2, 8

    key = jax.random.PRNGKey(0)
    k_ids, k_params = jax.random.split(key)
    ids = jax.random.randint(k_ids, (B, S), 0, vocab_size, dtype=jnp.int32)
    params = init_params(k_params, vocab_size, embed_dim, hidden_dim,
                         num_layers, num_heads)

    out = transformer_encoder(ids, params, num_heads)
    out = jax.block_until_ready(out)

    assert out.shape == (B, S, vocab_size), out.shape
    assert bool(jnp.all(jnp.isfinite(out)))
    print("KERNEL_OK")
</pallas_src>

<mosaic_0001>
module attributes {stable_mosaic.version = 11 : i64} {
  func.func @fused_encoder_kernel(%arg0: i32, %arg1: memref<8x1xi32, #tpu.memory_space<vmem>>, %arg2: memref<64x32xf32, #tpu.memory_space<vmem>>, %arg3: memref<8x32xf32, #tpu.memory_space<vmem>>, %arg4: memref<2x32x96xf32, #tpu.memory_space<vmem>>, %arg5: memref<2x1x96xf32, #tpu.memory_space<vmem>>, %arg6: memref<2x32x32xf32, #tpu.memory_space<vmem>>, %arg7: memref<2x1x32xf32, #tpu.memory_space<vmem>>, %arg8: memref<2x1x32xf32, #tpu.memory_space<vmem>>, %arg9: memref<2x1x32xf32, #tpu.memory_space<vmem>>, %arg10: memref<2x32x64xf32, #tpu.memory_space<vmem>>, %arg11: memref<2x1x64xf32, #tpu.memory_space<vmem>>, %arg12: memref<2x64x32xf32, #tpu.memory_space<vmem>>, %arg13: memref<2x1x32xf32, #tpu.memory_space<vmem>>, %arg14: memref<2x1x32xf32, #tpu.memory_space<vmem>>, %arg15: memref<2x1x32xf32, #tpu.memory_space<vmem>>, %arg16: memref<32x64xf32, #tpu.memory_space<vmem>>, %arg17: memref<1x64xf32, #tpu.memory_space<vmem>>, %arg18: memref<8x64xf32, #tpu.memory_space<vmem>>) attributes {dimension_semantics = [#tpu.dimension_semantics<parallel>], iteration_bounds = array<i64: 2>, scalar_prefetch = 0 : i64, scratch_operands = 0 : i64, tpu.core_type = #tpu.core_type<tc>, window_params = [{transform_indices = @transform_0, window_bounds = array<i64: 8, 1>}, {pipeline_mode = #tpu.pipeline_mode<synchronous>, transform_indices = @transform_1, window_bounds = array<i64: 64, 32>}, {pipeline_mode = #tpu.pipeline_mode<synchronous>, transform_indices = @transform_2, window_bounds = array<i64: 8, 32>}, {pipeline_mode = #tpu.pipeline_mode<synchronous>, transform_indices = @transform_3, window_bounds = array<i64: 2, 32, 96>}, {pipeline_mode = #tpu.pipeline_mode<synchronous>, transform_indices = @transform_4, window_bounds = array<i64: 2, 1, 96>}, {pipeline_mode = #tpu.pipeline_mode<synchronous>, transform_indices = @transform_5, window_bounds = array<i64: 2, 32, 32>}, {pipeline_mode = #tpu.pipeline_mode<synchronous>, transform_indices = @transform_6, window_bounds = array<i64: 2, 1, 32>}, {pipeline_mode = #tpu.pipeline_mode<synchronous>, transform_indices = @transform_7, window_bounds = array<i64: 2, 1, 32>}, {pipeline_mode = #tpu.pipeline_mode<synchronous>, transform_indices = @transform_8, window_bounds = array<i64: 2, 1, 32>}, {pipeline_mode = #tpu.pipeline_mode<synchronous>, transform_indices = @transform_9, window_bounds = array<i64: 2, 32, 64>}, {pipeline_mode = #tpu.pipeline_mode<synchronous>, transform_indices = @transform_10, window_bounds = array<i64: 2, 1, 64>}, {pipeline_mode = #tpu.pipeline_mode<synchronous>, transform_indices = @transform_11, window_bounds = array<i64: 2, 64, 32>}, {pipeline_mode = #tpu.pipeline_mode<synchronous>, transform_indices = @transform_12, window_bounds = array<i64: 2, 1, 32>}, {pipeline_mode = #tpu.pipeline_mode<synchronous>, transform_indices = @transform_13, window_bounds = array<i64: 2, 1, 32>}, {pipeline_mode = #tpu.pipeline_mode<synchronous>, transform_indices = @transform_14, window_bounds = array<i64: 2, 1, 32>}, {pipeline_mode = #tpu.pipeline_mode<synchronous>, transform_indices = @transform_15, window_bounds = array<i64: 32, 64>}, {pipeline_mode = #tpu.pipeline_mode<synchronous>, transform_indices = @transform_16, window_bounds = array<i64: 1, 64>}, {transform_indices = @transform_17, window_bounds = array<i64: 8, 64>}]} {
    %c0 = arith.constant 0 : index
    %c0_0 = arith.constant 0 : index
    %0 = vector.load %arg1[%c0, %c0_0] : memref<8x1xi32, #tpu.memory_space<vmem>>, vector<8x1xi32>
    %1 = tpu.iota {dimensions = array<i32: 1>} : vector<8x64xi32>
    %2 = vector.broadcast %0 : vector<8x1xi32> to vector<8x64xi32>
    %3 = arith.cmpi eq, %1, %2 : vector<8x64xi32>
    %4 = arith.extui %3 : vector<8x64xi1> to vector<8x64xi32>
    %5 = arith.sitofp %4 : vector<8x64xi32> to vector<8x64xf32>
    %c0_1 = arith.constant 0 : index
    %c0_2 = arith.constant 0 : index
    %6 = vector.load %arg2[%c0_1, %c0_2] : memref<64x32xf32, #tpu.memory_space<vmem>>, vector<64x32xf32>
    %cst = arith.constant dense<0.000000e+00> : vector<8x32xf32>
    %7 = tpu.matmul %5, %6, %cst {dimension_numbers = #tpu.dot_dimension_numbers<[1], [0], [0], [1], [0, 0, 1, 1], [], []>} : vector<8x64xf32>, vector<64x32xf32>, vector<8x32xf32> -> vector<8x32xf32>
    %c0_3 = arith.constant 0 : index
    %c0_4 = arith.constant 0 : index
    %8 = vector.load %arg3[%c0_3, %c0_4] : memref<8x32xf32, #tpu.memory_space<vmem>>, vector<8x32xf32>
    %9 = arith.addf %7, %8 : vector<8x32xf32>
    %c0_5 = arith.constant 0 : index
    %c0_6 = arith.constant 0 : index
    %c0_7 = arith.constant 0 : index
    %10 = vector.load %arg4[%c0_5, %c0_6, %c0_7] : memref<2x32x96xf32, #tpu.memory_space<vmem>>, vector<1x32x96xf32>
    %11 = vector.shape_cast %10 : vector<1x32x96xf32> to vector<32x96xf32>
    %cst_8 = arith.constant dense<0.000000e+00> : vector<8x96xf32>
    %12 = tpu.matmul %9, %11, %cst_8 {dimension_numbers = #tpu.dot_dimension_numbers<[1], [0], [0], [1], [0, 0, 1, 1], [], []>} : vector<8x32xf32>, vector<32x96xf32>, vector<8x96xf32> -> vector<8x96xf32>
    %c0_9 = arith.constant 0 : index
    %c0_10 = arith.constant 0 : index
    %c0_11 = arith.constant 0 : index
    %13 = vector.load %arg5[%c0_9, %c0_10, %c0_11] : memref<2x1x96xf32, #tpu.memory_space<vmem>>, vector<1x1x96xf32>
    %14 = vector.shape_cast %13 : vector<1x1x96xf32> to vector<1x96xf32>
    %15 = vector.broadcast %14 : vector<1x96xf32> to vector<8x96xf32>
    %16 = arith.addf %12, %15 : vector<8x96xf32>
    %17 = vector.extract_strided_slice %16 {offsets = [0, 0], sizes = [8, 32], strides = [1, 1]} : vector<8x96xf32> to vector<8x32xf32>
    %18 = vector.extract_strided_slice %16 {offsets = [0, 32], sizes = [8, 32], strides = [1, 1]} : vector<8x96xf32> to vector<8x32xf32>
    %19 = vector.extract_strided_slice %16 {offsets = [0, 64], sizes = [8, 32], strides = [1, 1]} : vector<8x96xf32> to vector<8x32xf32>
    %20 = vector.shape_cast %17 : vector<8x32xf32> to vector<8x4x8xf32>
    %21 = tpu.transpose %20, [1, 0, 2] : vector<8x4x8xf32> -> vector<4x8x8xf32>
    %22 = vector.shape_cast %18 : vector<8x32xf32> to vector<8x4x8xf32>
    %23 = tpu.transpose %22, [1, 0, 2] : vector<8x4x8xf32> -> vector<4x8x8xf32>
    %24 = vector.shape_cast %19 : vector<8x32xf32> to vector<8x4x8xf32>
    %25 = tpu.transpose %24, [1, 0, 2] : vector<8x4x8xf32> -> vector<4x8x8xf32>
    "tpu.trace_start"() <{level = 10 : i32, message = "hqd,hkd->hqk"}> : () -> ()
    %cst_12 = arith.constant dense<0.000000e+00> : vector<4x8x8xf32>
    %26 = tpu.matmul %21, %23, %cst_12 {dimension_numbers = #tpu.dot_dimension_numbers<[2], [2], [1], [1], [0, 0, 0, 1, 1, 1], [0], [0]>} : vector<4x8x8xf32>, vector<4x8x8xf32>, vector<4x8x8xf32> -> vector<4x8x8xf32>
    "tpu.trace_stop"() : () -> ()
    %cst_13 = arith.constant dense<0xFF800000> : vector<4x8xf32>
    %27 = vector.multi_reduction <maximumf>, %26, %cst_13 [2] : vector<4x8x8xf32> to vector<4x8xf32>
    %28 = vector.shape_cast %27 : vector<4x8xf32> to vector<4x8x1xf32>
    %29 = vector.broadcast %28 : vector<4x8x1xf32> to vector<4x8x8xf32>
    %30 = arith.subf %26, %29 : vector<4x8x8xf32>
    %31 = math.exp %30 : vector<4x8x8xf32>
    %cst_14 = arith.constant dense<0.000000e+00> : vector<4x8xf32>
    %32 = vector.multi_reduction <add>, %31, %cst_14 [2] : vector<4x8x8xf32> to vector<4x8xf32>
    %33 = vector.shape_cast %32 : vector<4x8xf32> to vector<4x8x1xf32>
    %34 = tpu.reciprocal %33 {approx = true} : vector<4x8x1xf32> -> vector<4x8x1xf32>
    %35 = vector.broadcast %34 : vector<4x8x1xf32> to vector<4x8x8xf32>
    %36 = arith.mulf %31, %35 : vector<4x8x8xf32>
    "tpu.trace_start"() <{level = 10 : i32, message = "hqk,hkd->hqd"}> : () -> ()
    %cst_15 = arith.constant dense<0.000000e+00> : vector<4x8x8xf32>
    %37 = tpu.matmul %36, %25, %cst_15 {dimension_numbers = #tpu.dot_dimension_numbers<[2], [1], [1], [2], [0, 0, 0, 1, 1, 2], [0], [0]>} : vector<4x8x8xf32>, vector<4x8x8xf32>, vector<4x8x8xf32> -> vector<4x8x8xf32>
    "tpu.trace_stop"() : () -> ()
    %38 = tpu.transpose %37, [1, 0, 2] : vector<4x8x8xf32> -> vector<8x4x8xf32>
    %39 = vector.shape_cast %38 : vector<8x4x8xf32> to vector<8x32xf32>
    %c0_16 = arith.constant 0 : index
    %c0_17 = arith.constant 0 : index
    %c0_18 = arith.constant 0 : index
    %40 = vector.load %arg6[%c0_16, %c0_17, %c0_18] : memref<2x32x32xf32, #tpu.memory_space<vmem>>, vector<1x32x32xf32>
    %41 = vector.shape_cast %40 : vector<1x32x32xf32> to vector<32x32xf32>
    %cst_19 = arith.constant dense<0.000000e+00> : vector<8x32xf32>
    %42 = tpu.matmul %39, %41, %cst_19 {dimension_numbers = #tpu.dot_dimension_numbers<[1], [0], [0], [1], [0, 0, 1, 1], [], []>} : vector<8x32xf32>, vector<32x32xf32>, vector<8x32xf32> -> vector<8x32xf32>
    %c0_20 = arith.constant 0 : index
    %c0_21 = arith.constant 0 : index
    %c0_22 = arith.constant 0 : index
    %43 = vector.load %arg7[%c0_20, %c0_21, %c0_22] : memref<2x1x32xf32, #tpu.memory_space<vmem>>, vector<1x1x32xf32>
    %44 = vector.shape_cast %43 : vector<1x1x32xf32> to vector<1x32xf32>
    %45 = vector.broadcast %44 : vector<1x32xf32> to vector<8x32xf32>
    %46 = arith.addf %42, %45 : vector<8x32xf32>
    %47 = arith.addf %9, %46 : vector<8x32xf32>
    %c0_23 = arith.constant 0 : index
    %c0_24 = arith.constant 0 : index
    %c0_25 = arith.constant 0 : index
    %48 = vector.load %arg8[%c0_23, %c0_24, %c0_25] : memref<2x1x32xf32, #tpu.memory_space<vmem>>, vector<1x1x32xf32>
    %49 = vector.shape_cast %48 : vector<1x1x32xf32> to vector<1x32xf32>
    %c0_26 = arith.constant 0 : index
    %c0_27 = arith.constant 0 : index
    %c0_28 = arith.constant 0 : index
    %50 = vector.load %arg9[%c0_26, %c0_27, %c0_28] : memref<2x1x32xf32, #tpu.memory_space<vmem>>, vector<1x1x32xf32>
    %51 = vector.shape_cast %50 : vector<1x1x32xf32> to vector<1x32xf32>
    %cst_29 = arith.constant dense<0.000000e+00> : vector<8xf32>
    %52 = vector.multi_reduction <add>, %47, %cst_29 [1] : vector<8x32xf32> to vector<8xf32>
    %53 = vector.shape_cast %52 : vector<8xf32> to vector<8x1xf32>
    %cst_30 = arith.constant 3.200000e+01 : f32
    %54 = vector.broadcast %cst_30 : f32 to vector<8x1xf32>
    %55 = arith.divf %53, %54 : vector<8x1xf32>
    %56 = vector.broadcast %55 : vector<8x1xf32> to vector<8x32xf32>
    %57 = arith.subf %47, %56 : vector<8x32xf32>
    %58 = arith.mulf %57, %57 : vector<8x32xf32>
    %cst_31 = arith.constant dense<0.000000e+00> : vector<8xf32>
    %59 = vector.multi_reduction <add>, %58, %cst_31 [1] : vector<8x32xf32> to vector<8xf32>
    %60 = vector.shape_cast %59 : vector<8xf32> to vector<8x1xf32>
    %cst_32 = arith.constant 3.200000e+01 : f32
    %61 = vector.broadcast %cst_32 : f32 to vector<8x1xf32>
    %62 = arith.divf %60, %61 : vector<8x1xf32>
    %63 = vector.broadcast %55 : vector<8x1xf32> to vector<8x32xf32>
    %64 = arith.subf %47, %63 : vector<8x32xf32>
    %cst_33 = arith.constant 9.99999974E-6 : f32
    %65 = vector.broadcast %cst_33 : f32 to vector<8x1xf32>
    %66 = arith.addf %62, %65 : vector<8x1xf32>
    %67 = math.rsqrt %66 : vector<8x1xf32>
    %68 = vector.broadcast %67 : vector<8x1xf32> to vector<8x32xf32>
    %69 = arith.mulf %64, %68 : vector<8x32xf32>
    %70 = vector.broadcast %49 : vector<1x32xf32> to vector<8x32xf32>
    %71 = arith.mulf %69, %70 : vector<8x32xf32>
    %72 = vector.broadcast %51 : vector<1x32xf32> to vector<8x32xf32>
    %73 = arith.addf %71, %72 : vector<8x32xf32>
    %c0_34 = arith.constant 0 : index
    %c0_35 = arith.constant 0 : index
    %c0_36 = arith.constant 0 : index
    %74 = vector.load %arg10[%c0_34, %c0_35, %c0_36] : memref<2x32x64xf32, #tpu.memory_space<vmem>>, vector<1x32x64xf32>
    %75 = vector.shape_cast %74 : vector<1x32x64xf32> to vector<32x64xf32>
    %cst_37 = arith.constant dense<0.000000e+00> : vector<8x64xf32>
    %76 = tpu.matmul %73, %75, %cst_37 {dimension_numbers = #tpu.dot_dimension_numbers<[1], [0], [0], [1], [0, 0, 1, 1], [], []>} : vector<8x32xf32>, vector<32x64xf32>, vector<8x64xf32> -> vector<8x64xf32>
    %c0_38 = arith.constant 0 : index
    %c0_39 = arith.constant 0 : index
    %c0_40 = arith.constant 0 : index
    %77 = vector.load %arg11[%c0_38, %c0_39, %c0_40] : memref<2x1x64xf32, #tpu.memory_space<vmem>>, vector<1x1x64xf32>
    %78 = vector.shape_cast %77 : vector<1x1x64xf32> to vector<1x64xf32>
    %79 = vector.broadcast %78 : vector<1x64xf32> to vector<8x64xf32>
    %80 = arith.addf %76, %79 : vector<8x64xf32>
    %cst_41 = arith.constant 0.000000e+00 : f32
    %81 = vector.broadcast %cst_41 : f32 to vector<8x64xf32>
    %82 = arith.maximumf %80, %81 : vector<8x64xf32>
    %c0_42 = arith.constant 0 : index
    %c0_43 = arith.constant 0 : index
    %c0_44 = arith.constant 0 : index
    %83 = vector.load %arg12[%c0_42, %c0_43, %c0_44] : memref<2x64x32xf32, #tpu.memory_space<vmem>>, vector<1x64x32xf32>
    %84 = vector.shape_cast %83 : vector<1x64x32xf32> to vector<64x32xf32>
    %cst_45 = arith.constant dense<0.000000e+00> : vector<8x32xf32>
    %85 = tpu.matmul %82, %84, %cst_45 {dimension_numbers = #tpu.dot_dimension_numbers<[1], [0], [0], [1], [0, 0, 1, 1], [], []>} : vector<8x64xf32>, vector<64x32xf32>, vector<8x32xf32> -> vector<8x32xf32>
    %c0_46 = arith.constant 0 : index
    %c0_47 = arith.constant 0 : index
    %c0_48 = arith.constant 0 : index
    %86 = vector.load %arg13[%c0_46, %c0_47, %c0_48] : memref<2x1x32xf32, #tpu.memory_space<vmem>>, vector<1x1x32xf32>
    %87 = vector.shape_cast %86 : vector<1x1x32xf32> to vector<1x32xf32>
    %88 = vector.broadcast %87 : vector<1x32xf32> to vector<8x32xf32>
    %89 = arith.addf %85, %88 : vector<8x32xf32>
    %90 = arith.addf %73, %89 : vector<8x32xf32>
    %c0_49 = arith.constant 0 : index
    %c0_50 = arith.constant 0 : index
    %c0_51 = arith.constant 0 : index
    %91 = vector.load %arg14[%c0_49, %c0_50, %c0_51] : memref<2x1x32xf32, #tpu.memory_space<vmem>>, vector<1x1x32xf32>
    %92 = vector.shape_cast %91 : vector<1x1x32xf32> to vector<1x32xf32>
    %c0_52 = arith.constant 0 : index
    %c0_53 = arith.constant 0 : index
    %c0_54 = arith.constant 0 : index
    %93 = vector.load %arg15[%c0_52, %c0_53, %c0_54] : memref<2x1x32xf32, #tpu.memory_space<vmem>>, vector<1x1x32xf32>
    %94 = vector.shape_cast %93 : vector<1x1x32xf32> to vector<1x32xf32>
    %cst_55 = arith.constant dense<0.000000e+00> : vector<8xf32>
    %95 = vector.multi_reduction <add>, %90, %cst_55 [1] : vector<8x32xf32> to vector<8xf32>
    %96 = vector.shape_cast %95 : vector<8xf32> to vector<8x1xf32>
    %cst_56 = arith.constant 3.200000e+01 : f32
    %97 = vector.broadcast %cst_56 : f32 to vector<8x1xf32>
    %98 = arith.divf %96, %97 : vector<8x1xf32>
    %99 = vector.broadcast %98 : vector<8x1xf32> to vector<8x32xf32>
    %100 = arith.subf %90, %99 : vector<8x32xf32>
    %101 = arith.mulf %100, %100 : vector<8x32xf32>
    %cst_57 = arith.constant dense<0.000000e+00> : vector<8xf32>
    %102 = vector.multi_reduction <add>, %101, %cst_57 [1] : vector<8x32xf32> to vector<8xf32>
    %103 = vector.shape_cast %102 : vector<8xf32> to vector<8x1xf32>
    %cst_58 = arith.constant 3.200000e+01 : f32
    %104 = vector.broadcast %cst_58 : f32 to vector<8x1xf32>
    %105 = arith.divf %103, %104 : vector<8x1xf32>
    %106 = vector.broadcast %98 : vector<8x1xf32> to vector<8x32xf32>
    %107 = arith.subf %90, %106 : vector<8x32xf32>
    %cst_59 = arith.constant 9.99999974E-6 : f32
    %108 = vector.broadcast %cst_59 : f32 to vector<8x1xf32>
    %109 = arith.addf %105, %108 : vector<8x1xf32>
    %110 = math.rsqrt %109 : vector<8x1xf32>
    %111 = vector.broadcast %110 : vector<8x1xf32> to vector<8x32xf32>
    %112 = arith.mulf %107, %111 : vector<8x32xf32>
    %113 = vector.broadcast %92 : vector<1x32xf32> to vector<8x32xf32>
    %114 = arith.mulf %112, %113 : vector<8x32xf32>
    %115 = vector.broadcast %94 : vector<1x32xf32> to vector<8x32xf32>
    %116 = arith.addf %114, %115 : vector<8x32xf32>
    %c1 = arith.constant 1 : index
    %c0_60 = arith.constant 0 : index
    %c0_61 = arith.constant 0 : index
    %117 = vector.load %arg4[%c1, %c0_60, %c0_61] : memref<2x32x96xf32, #tpu.memory_space<vmem>>, vector<1x32x96xf32>
    %118 = vector.shape_cast %117 : vector<1x32x96xf32> to vector<32x96xf32>
    %cst_62 = arith.constant dense<0.000000e+00> : vector<8x96xf32>
    %119 = tpu.matmul %116, %118, %cst_62 {dimension_numbers = #tpu.dot_dimension_numbers<[1], [0], [0], [1], [0, 0, 1, 1], [], []>} : vector<8x32xf32>, vector<32x96xf32>, vector<8x96xf32> -> vector<8x96xf32>
    %c1_63 = arith.constant 1 : index
    %c0_64 = arith.constant 0 : index
    %c0_65 = arith.constant 0 : index
    %120 = vector.load %arg5[%c1_63, %c0_64, %c0_65] : memref<2x1x96xf32, #tpu.memory_space<vmem>>, vector<1x1x96xf32>
    %121 = vector.shape_cast %120 : vector<1x1x96xf32> to vector<1x96xf32>
    %122 = vector.broadcast %121 : vector<1x96xf32> to vector<8x96xf32>
    %123 = arith.addf %119, %122 : vector<8x96xf32>
    %124 = vector.extract_strided_slice %123 {offsets = [0, 0], sizes = [8, 32], strides = [1, 1]} : vector<8x96xf32> to vector<8x32xf32>
    %125 = vector.extract_strided_slice %123 {offsets = [0, 32], sizes = [8, 32], strides = [1, 1]} : vector<8x96xf32> to vector<8x32xf32>
    %126 = vector.extract_strided_slice %123 {offsets = [0, 64], sizes = [8, 32], strides = [1, 1]} : vector<8x96xf32> to vector<8x32xf32>
    %127 = vector.shape_cast %124 : vector<8x32xf32> to vector<8x4x8xf32>
    %128 = tpu.transpose %127, [1, 0, 2] : vector<8x4x8xf32> -> vector<4x8x8xf32>
    %129 = vector.shape_cast %125 : vector<8x32xf32> to vector<8x4x8xf32>
    %130 = tpu.transpose %129, [1, 0, 2] : vector<8x4x8xf32> -> vector<4x8x8xf32>
    %131 = vector.shape_cast %126 : vector<8x32xf32> to vector<8x4x8xf32>
    %132 = tpu.transpose %131, [1, 0, 2] : vector<8x4x8xf32> -> vector<4x8x8xf32>
    "tpu.trace_start"() <{level = 10 : i32, message = "hqd,hkd->hqk"}> : () -> ()
    %cst_66 = arith.constant dense<0.000000e+00> : vector<4x8x8xf32>
    %133 = tpu.matmul %128, %130, %cst_66 {dimension_numbers = #tpu.dot_dimension_numbers<[2], [2], [1], [1], [0, 0, 0, 1, 1, 1], [0], [0]>} : vector<4x8x8xf32>, vector<4x8x8xf32>, vector<4x8x8xf32> -> vector<4x8x8xf32>
    "tpu.trace_stop"() : () -> ()
    %cst_67 = arith.constant dense<0xFF800000> : vector<4x8xf32>
    %134 = vector.multi_reduction <maximumf>, %133, %cst_67 [2] : vector<4x8x8xf32> to vector<4x8xf32>
    %135 = vector.shape_cast %134 : vector<4x8xf32> to vector<4x8x1xf32>
    %136 = vector.broadcast %135 : vector<4x8x1xf32> to vector<4x8x8xf32>
    %137 = arith.subf %133, %136 : vector<4x8x8xf32>
    %138 = math.exp %137 : vector<4x8x8xf32>
    %cst_68 = arith.constant dense<0.000000e+00> : vector<4x8xf32>
    %139 = vector.multi_reduction <add>, %138, %cst_68 [2] : vector<4x8x8xf32> to vector<4x8xf32>
    %140 = vector.shape_cast %139 : vector<4x8xf32> to vector<4x8x1xf32>
    %141 = tpu.reciprocal %140 {approx = true} : vector<4x8x1xf32> -> vector<4x8x1xf32>
    %142 = vector.broadcast %141 : vector<4x8x1xf32> to vector<4x8x8xf32>
    %143 = arith.mulf %138, %142 : vector<4x8x8xf32>
    "tpu.trace_start"() <{level = 10 : i32, message = "hqk,hkd->hqd"}> : () -> ()
    %cst_69 = arith.constant dense<0.000000e+00> : vector<4x8x8xf32>
    %144 = tpu.matmul %143, %132, %cst_69 {dimension_numbers = #tpu.dot_dimension_numbers<[2], [1], [1], [2], [0, 0, 0, 1, 1, 2], [0], [0]>} : vector<4x8x8xf32>, vector<4x8x8xf32>, vector<4x8x8xf32> -> vector<4x8x8xf32>
    "tpu.trace_stop"() : () -> ()
    %145 = tpu.transpose %144, [1, 0, 2] : vector<4x8x8xf32> -> vector<8x4x8xf32>
    %146 = vector.shape_cast %145 : vector<8x4x8xf32> to vector<8x32xf32>
    %c1_70 = arith.constant 1 : index
    %c0_71 = arith.constant 0 : index
    %c0_72 = arith.constant 0 : index
    %147 = vector.load %arg6[%c1_70, %c0_71, %c0_72] : memref<2x32x32xf32, #tpu.memory_space<vmem>>, vector<1x32x32xf32>
    %148 = vector.shape_cast %147 : vector<1x32x32xf32> to vector<32x32xf32>
    %cst_73 = arith.constant dense<0.000000e+00> : vector<8x32xf32>
    %149 = tpu.matmul %146, %148, %cst_73 {dimension_numbers = #tpu.dot_dimension_numbers<[1], [0], [0], [1], [0, 0, 1, 1], [], []>} : vector<8x32xf32>, vector<32x32xf32>, vector<8x32xf32> -> vector<8x32xf32>
    %c1_74 = arith.constant 1 : index
    %c0_75 = arith.constant 0 : index
    %c0_76 = arith.constant 0 : index
    %150 = vector.load %arg7[%c1_74, %c0_75, %c0_76] : memref<2x1x32xf32, #tpu.memory_space<vmem>>, vector<1x1x32xf32>
    %151 = vector.shape_cast %150 : vector<1x1x32xf32> to vector<1x32xf32>
    %152 = vector.broadcast %151 : vector<1x32xf32> to vector<8x32xf32>
    %153 = arith.addf %149, %152 : vector<8x32xf32>
    %154 = arith.addf %116, %153 : vector<8x32xf32>
    %c1_77 = arith.constant 1 : index
    %c0_78 = arith.constant 0 : index
    %c0_79 = arith.constant 0 : index
    %155 = vector.load %arg8[%c1_77, %c0_78, %c0_79] : memref<2x1x32xf32, #tpu.memory_space<vmem>>, vector<1x1x32xf32>
    %156 = vector.shape_cast %155 : vector<1x1x32xf32> to vector<1x32xf32>
    %c1_80 = arith.constant 1 : index
    %c0_81 = arith.constant 0 : index
    %c0_82 = arith.constant 0 : index
    %157 = vector.load %arg9[%c1_80, %c0_81, %c0_82] : memref<2x1x32xf32, #tpu.memory_space<vmem>>, vector<1x1x32xf32>
    %158 = vector.shape_cast %157 : vector<1x1x32xf32> to vector<1x32xf32>
    %cst_83 = arith.constant dense<0.000000e+00> : vector<8xf32>
    %159 = vector.multi_reduction <add>, %154, %cst_83 [1] : vector<8x32xf32> to vector<8xf32>
    %160 = vector.shape_cast %159 : vector<8xf32> to vector<8x1xf32>
    %cst_84 = arith.constant 3.200000e+01 : f32
    %161 = vector.broadcast %cst_84 : f32 to vector<8x1xf32>
    %162 = arith.divf %160, %161 : vector<8x1xf32>
    %163 = vector.broadcast %162 : vector<8x1xf32> to vector<8x32xf32>
    %164 = arith.subf %154, %163 : vector<8x32xf32>
    %165 = arith.mulf %164, %164 : vector<8x32xf32>
    %cst_85 = arith.constant dense<0.000000e+00> : vector<8xf32>
    %166 = vector.multi_reduction <add>, %165, %cst_85 [1] : vector<8x32xf32> to vector<8xf32>
    %167 = vector.shape_cast %166 : vector<8xf32> to vector<8x1xf32>
    %cst_86 = arith.constant 3.200000e+01 : f32
    %168 = vector.broadcast %cst_86 : f32 to vector<8x1xf32>
    %169 = arith.divf %167, %168 : vector<8x1xf32>
    %170 = vector.broadcast %162 : vector<8x1xf32> to vector<8x32xf32>
    %171 = arith.subf %154, %170 : vector<8x32xf32>
    %cst_87 = arith.constant 9.99999974E-6 : f32
    %172 = vector.broadcast %cst_87 : f32 to vector<8x1xf32>
    %173 = arith.addf %169, %172 : vector<8x1xf32>
    %174 = math.rsqrt %173 : vector<8x1xf32>
    %175 = vector.broadcast %174 : vector<8x1xf32> to vector<8x32xf32>
    %176 = arith.mulf %171, %175 : vector<8x32xf32>
    %177 = vector.broadcast %156 : vector<1x32xf32> to vector<8x32xf32>
    %178 = arith.mulf %176, %177 : vector<8x32xf32>
    %179 = vector.broadcast %158 : vector<1x32xf32> to vector<8x32xf32>
    %180 = arith.addf %178, %179 : vector<8x32xf32>
    %c1_88 = arith.constant 1 : index
    %c0_89 = arith.constant 0 : index
    %c0_90 = arith.constant 0 : index
    %181 = vector.load %arg10[%c1_88, %c0_89, %c0_90] : memref<2x32x64xf32, #tpu.memory_space<vmem>>, vector<1x32x64xf32>
    %182 = vector.shape_cast %181 : vector<1x32x64xf32> to vector<32x64xf32>
    %cst_91 = arith.constant dense<0.000000e+00> : vector<8x64xf32>
    %183 = tpu.matmul %180, %182, %cst_91 {dimension_numbers = #tpu.dot_dimension_numbers<[1], [0], [0], [1], [0, 0, 1, 1], [], []>} : vector<8x32xf32>, vector<32x64xf32>, vector<8x64xf32> -> vector<8x64xf32>
    %c1_92 = arith.constant 1 : index
    %c0_93 = arith.constant 0 : index
    %c0_94 = arith.constant 0 : index
    %184 = vector.load %arg11[%c1_92, %c0_93, %c0_94] : memref<2x1x64xf32, #tpu.memory_space<vmem>>, vector<1x1x64xf32>
    %185 = vector.shape_cast %184 : vector<1x1x64xf32> to vector<1x64xf32>
    %186 = vector.broadcast %185 : vector<1x64xf32> to vector<8x64xf32>
    %187 = arith.addf %183, %186 : vector<8x64xf32>
    %cst_95 = arith.constant 0.000000e+00 : f32
    %188 = vector.broadcast %cst_95 : f32 to vector<8x64xf32>
    %189 = arith.maximumf %187, %188 : vector<8x64xf32>
    %c1_96 = arith.constant 1 : index
    %c0_97 = arith.constant 0 : index
    %c0_98 = arith.constant 0 : index
    %190 = vector.load %arg12[%c1_96, %c0_97, %c0_98] : memref<2x64x32xf32, #tpu.memory_space<vmem>>, vector<1x64x32xf32>
    %191 = vector.shape_cast %190 : vector<1x64x32xf32> to vector<64x32xf32>
    %cst_99 = arith.constant dense<0.000000e+00> : vector<8x32xf32>
    %192 = tpu.matmul %189, %191, %cst_99 {dimension_numbers = #tpu.dot_dimension_numbers<[1], [0], [0], [1], [0, 0, 1, 1], [], []>} : vector<8x64xf32>, vector<64x32xf32>, vector<8x32xf32> -> vector<8x32xf32>
    %c1_100 = arith.constant 1 : index
    %c0_101 = arith.constant 0 : index
    %c0_102 = arith.constant 0 : index
    %193 = vector.load %arg13[%c1_100, %c0_101, %c0_102] : memref<2x1x32xf32, #tpu.memory_space<vmem>>, vector<1x1x32xf32>
    %194 = vector.shape_cast %193 : vector<1x1x32xf32> to vector<1x32xf32>
    %195 = vector.broadcast %194 : vector<1x32xf32> to vector<8x32xf32>
    %196 = arith.addf %192, %195 : vector<8x32xf32>
    %197 = arith.addf %180, %196 : vector<8x32xf32>
    %c1_103 = arith.constant 1 : index
    %c0_104 = arith.constant 0 : index
    %c0_105 = arith.constant 0 : index
    %198 = vector.load %arg14[%c1_103, %c0_104, %c0_105] : memref<2x1x32xf32, #tpu.memory_space<vmem>>, vector<1x1x32xf32>
    %199 = vector.shape_cast %198 : vector<1x1x32xf32> to vector<1x32xf32>
    %c1_106 = arith.constant 1 : index
    %c0_107 = arith.constant 0 : index
    %c0_108 = arith.constant 0 : index
    %200 = vector.load %arg15[%c1_106, %c0_107, %c0_108] : memref<2x1x32xf32, #tpu.memory_space<vmem>>, vector<1x1x32xf32>
    %201 = vector.shape_cast %200 : vector<1x1x32xf32> to vector<1x32xf32>
    %cst_109 = arith.constant dense<0.000000e+00> : vector<8xf32>
    %202 = vector.multi_reduction <add>, %197, %cst_109 [1] : vector<8x32xf32> to vector<8xf32>
    %203 = vector.shape_cast %202 : vector<8xf32> to vector<8x1xf32>
    %cst_110 = arith.constant 3.200000e+01 : f32
    %204 = vector.broadcast %cst_110 : f32 to vector<8x1xf32>
    %205 = arith.divf %203, %204 : vector<8x1xf32>
    %206 = vector.broadcast %205 : vector<8x1xf32> to vector<8x32xf32>
    %207 = arith.subf %197, %206 : vector<8x32xf32>
    %208 = arith.mulf %207, %207 : vector<8x32xf32>
    %cst_111 = arith.constant dense<0.000000e+00> : vector<8xf32>
    %209 = vector.multi_reduction <add>, %208, %cst_111 [1] : vector<8x32xf32> to vector<8xf32>
    %210 = vector.shape_cast %209 : vector<8xf32> to vector<8x1xf32>
    %cst_112 = arith.constant 3.200000e+01 : f32
    %211 = vector.broadcast %cst_112 : f32 to vector<8x1xf32>
    %212 = arith.divf %210, %211 : vector<8x1xf32>
    %213 = vector.broadcast %205 : vector<8x1xf32> to vector<8x32xf32>
    %214 = arith.subf %197, %213 : vector<8x32xf32>
    %cst_113 = arith.constant 9.99999974E-6 : f32
    %215 = vector.broadcast %cst_113 : f32 to vector<8x1xf32>
    %216 = arith.addf %212, %215 : vector<8x1xf32>
    %217 = math.rsqrt %216 : vector<8x1xf32>
    %218 = vector.broadcast %217 : vector<8x1xf32> to vector<8x32xf32>
    %219 = arith.mulf %214, %218 : vector<8x32xf32>
    %220 = vector.broadcast %199 : vector<1x32xf32> to vector<8x32xf32>
    %221 = arith.mulf %219, %220 : vector<8x32xf32>
    %222 = vector.broadcast %201 : vector<1x32xf32> to vector<8x32xf32>
    %223 = arith.addf %221, %222 : vector<8x32xf32>
    %c0_114 = arith.constant 0 : index
    %c0_115 = arith.constant 0 : index
    %224 = vector.load %arg16[%c0_114, %c0_115] : memref<32x64xf32, #tpu.memory_space<vmem>>, vector<32x64xf32>
    %cst_116 = arith.constant dense<0.000000e+00> : vector<8x64xf32>
    %225 = tpu.matmul %223, %224, %cst_116 {dimension_numbers = #tpu.dot_dimension_numbers<[1], [0], [0], [1], [0, 0, 1, 1], [], []>} : vector<8x32xf32>, vector<32x64xf32>, vector<8x64xf32> -> vector<8x64xf32>
    %c0_117 = arith.constant 0 : index
    %c0_118 = arith.constant 0 : index
    %226 = vector.load %arg17[%c0_117, %c0_118] : memref<1x64xf32, #tpu.memory_space<vmem>>, vector<1x64xf32>
    %227 = vector.broadcast %226 : vector<1x64xf32> to vector<8x64xf32>
    %228 = arith.addf %225, %227 : vector<8x64xf32>
    %c0_119 = arith.constant 0 : index
    %c0_120 = arith.constant 0 : index
    %229 = vector.load %arg18[%c0_119, %c0_120] : memref<8x64xf32, #tpu.memory_space<vmem>>, vector<8x64xf32>
    tpu.vector_store %arg18[%c0_119, %c0_120], %228 {strides = array<i32>} : memref<8x64xf32, #tpu.memory_space<vmem>>, vector<8x64xf32>,
    return
  }
  func.func @transform_0(%arg0: i32) -> (i32, i32) {
    %c0_i32 = arith.constant 0 : i32
    %c0_i32_0 = arith.constant 0 : i32
    return %arg0, %c0_i32 : i32, i32
  }
  func.func @transform_1(%arg0: i32) -> (i32, i32) {
    %c0_i32 = arith.constant 0 : i32
    %c0_i32_0 = arith.constant 0 : i32
    %c0_i32_1 = arith.constant 0 : i32
    return %c0_i32, %c0_i32_0 : i32, i32
  }
  func.func @transform_2(%arg0: i32) -> (i32, i32) {
    %c0_i32 = arith.constant 0 : i32
    %c0_i32_0 = arith.constant 0 : i32
    %c0_i32_1 = arith.constant 0 : i32
    return %c0_i32, %c0_i32_0 : i32, i32
  }
  func.func @transform_3(%arg0: i32) -> (i32, i32, i32) {
    %c0_i32 = arith.constant 0 : i32
    %c0_i32_0 = arith.constant 0 : i32
    %c0_i32_1 = arith.constant 0 : i32
    %c0_i32_2 = arith.constant 0 : i32
    return %c0_i32, %c0_i32_0, %c0_i32_1 : i32, i32, i32
  }
  func.func @transform_4(%arg0: i32) -> (i32, i32, i32) {
    %c0_i32 = arith.constant 0 : i32
    %c0_i32_0 = arith.constant 0 : i32
    %c0_i32_1 = arith.constant 0 : i32
    %c0_i32_2 = arith.constant 0 : i32
    return %c0_i32, %c0_i32_0, %c0_i32_1 : i32, i32, i32
  }
  func.func @transform_5(%arg0: i32) -> (i32, i32, i32) {
    %c0_i32 = arith.constant 0 : i32
    %c0_i32_0 = arith.constant 0 : i32
    %c0_i32_1 = arith.constant 0 : i32
    %c0_i32_2 = arith.constant 0 : i32
    return %c0_i32, %c0_i32_0, %c0_i32_1 : i32, i32, i32
  }
  func.func @transform_6(%arg0: i32) -> (i32, i32, i32) {
    %c0_i32 = arith.constant 0 : i32
    %c0_i32_0 = arith.constant 0 : i32
    %c0_i32_1 = arith.constant 0 : i32
    %c0_i32_2 = arith.constant 0 : i32
    return %c0_i32, %c0_i32_0, %c0_i32_1 : i32, i32, i32
  }
  func.func @transform_7(%arg0: i32) -> (i32, i32, i32) {
    %c0_i32 = arith.constant 0 : i32
    %c0_i32_0 = arith.constant 0 : i32
    %c0_i32_1 = arith.constant 0 : i32
    %c0_i32_2 = arith.constant 0 : i32
    return %c0_i32, %c0_i32_0, %c0_i32_1 : i32, i32, i32
  }
  func.func @transform_8(%arg0: i32) -> (i32, i32, i32) {
    %c0_i32 = arith.constant 0 : i32
    %c0_i32_0 = arith.constant 0 : i32
    %c0_i32_1 = arith.constant 0 : i32
    %c0_i32_2 = arith.constant 0 : i32
    return %c0_i32, %c0_i32_0, %c0_i32_1 : i32, i32, i32
  }
  func.func @transform_9(%arg0: i32) -> (i32, i32, i32) {
    %c0_i32 = arith.constant 0 : i32
    %c0_i32_0 = arith.constant 0 : i32
    %c0_i32_1 = arith.constant 0 : i32
    %c0_i32_2 = arith.constant 0 : i32
    return %c0_i32, %c0_i32_0, %c0_i32_1 : i32, i32, i32
  }
  func.func @transform_10(%arg0: i32) -> (i32, i32, i32) {
    %c0_i32 = arith.constant 0 : i32
    %c0_i32_0 = arith.constant 0 : i32
    %c0_i32_1 = arith.constant 0 : i32
    %c0_i32_2 = arith.constant 0 : i32
    return %c0_i32, %c0_i32_0, %c0_i32_1 : i32, i32, i32
  }
  func.func @transform_11(%arg0: i32) -> (i32, i32, i32) {
    %c0_i32 = arith.constant 0 : i32
    %c0_i32_0 = arith.constant 0 : i32
    %c0_i32_1 = arith.constant 0 : i32
    %c0_i32_2 = arith.constant 0 : i32
    return %c0_i32, %c0_i32_0, %c0_i32_1 : i32, i32, i32
  }
  func.func @transform_12(%arg0: i32) -> (i32, i32, i32) {
    %c0_i32 = arith.constant 0 : i32
    %c0_i32_0 = arith.constant 0 : i32
    %c0_i32_1 = arith.constant 0 : i32
    %c0_i32_2 = arith.constant 0 : i32
    return %c0_i32, %c0_i32_0, %c0_i32_1 : i32, i32, i32
  }
  func.func @transform_13(%arg0: i32) -> (i32, i32, i32) {
    %c0_i32 = arith.constant 0 : i32
    %c0_i32_0 = arith.constant 0 : i32
    %c0_i32_1 = arith.constant 0 : i32
    %c0_i32_2 = arith.constant 0 : i32
    return %c0_i32, %c0_i32_0, %c0_i32_1 : i32, i32, i32
  }
  func.func @transform_14(%arg0: i32) -> (i32, i32, i32) {
    %c0_i32 = arith.constant 0 : i32
    %c0_i32_0 = arith.constant 0 : i32
    %c0_i32_1 = arith.constant 0 : i32
    %c0_i32_2 = arith.constant 0 : i32
    return %c0_i32, %c0_i32_0, %c0_i32_1 : i32, i32, i32
  }
  func.func @transform_15(%arg0: i32) -> (i32, i32) {
    %c0_i32 = arith.constant 0 : i32
    %c0_i32_0 = arith.constant 0 : i32
    %c0_i32_1 = arith.constant 0 : i32
    return %c0_i32, %c0_i32_0 : i32, i32
  }
  func.func @transform_16(%arg0: i32) -> (i32, i32) {
    %c0_i32 = arith.constant 0 : i32
    %c0_i32_0 = arith.constant 0 : i32
    %c0_i32_1 = arith.constant 0 : i32
    return %c0_i32, %c0_i32_0 : i32, i32
  }
  func.func @transform_17(%arg0: i32) -> (i32, i32) {
    %c0_i32 = arith.constant 0 : i32
    %c0_i32_0 = arith.constant 0 : i32
    return %arg0, %c0_i32 : i32, i32
  }
}

</mosaic_0001>

<llo_original>
// kernel: tpu_custom_call.1
$region0: #{tpu_custom_call.1}
  #allocation0 [shape = 'u32[]', space=smem, size = 0x4, offset = 0x4, fixed_abs, tag = 'smem constant byte address 0x4 - core index']
  #allocation1 [shape = 'u32[144,128]{1,0:T(1,128)}', space=vmem, size = 0x12000, scoped, tag = 'internal scratch']
  %s0 = inlined_call_operand.vmem [shape: s32[16,1], index: 0, kind: input, shape index: {}]
  %s1 = inlined_call_operand.vmem [shape: f32[64,32], index: 1, kind: input, shape index: {}]
  %s2 = inlined_call_operand.vmem [shape: f32[8,32], index: 2, kind: input, shape index: {}]
  %s3 = inlined_call_operand.vmem [shape: f32[2,32,96], index: 3, kind: input, shape index: {}]
  %s4 = inlined_call_operand.vmem [shape: f32[2,1,96], index: 4, kind: input, shape index: {}]
  %s5 = inlined_call_operand.vmem [shape: f32[2,32,32], index: 5, kind: input, shape index: {}]
  %s6 = inlined_call_operand.vmem [shape: f32[2,1,32], index: 6, kind: input, shape index: {}]
  %s7 = inlined_call_operand.vmem [shape: f32[2,1,32], index: 7, kind: input, shape index: {}]
  %s8 = inlined_call_operand.vmem [shape: f32[2,1,32], index: 8, kind: input, shape index: {}]
  %s9 = inlined_call_operand.vmem [shape: f32[2,32,64], index: 9, kind: input, shape index: {}]
  %s10 = inlined_call_operand.vmem [shape: f32[2,1,64], index: 10, kind: input, shape index: {}]
  %s11 = inlined_call_operand.vmem [shape: f32[2,64,32], index: 11, kind: input, shape index: {}]
  %s12 = inlined_call_operand.vmem [shape: f32[2,1,32], index: 12, kind: input, shape index: {}]
  %s13 = inlined_call_operand.vmem [shape: f32[2,1,32], index: 13, kind: input, shape index: {}]
  %s14 = inlined_call_operand.vmem [shape: f32[2,1,32], index: 14, kind: input, shape index: {}]
  %s15 = inlined_call_operand.vmem [shape: f32[32,64], index: 15, kind: input, shape index: {}]
  %s16 = inlined_call_operand.vmem [shape: f32[1,64], index: 16, kind: input, shape index: {}]
  %s17 = inlined_call_operand.hbm [shape: f32[16,64], index: 17, kind: output, shape index: {}]
  %s18 = sld [smem:[#allocation0]]
  $region101: #{tpu_custom_call.1} parent=0
    _
  %s20 = ssub.s32 1, %s18
  %s21 = scalar_select 0, %s20, %s18
  $region1: #{tpu_custom_call.1} parent=0
    #allocation2 [shape = 'u8[8192]{0}', space=vmem, size = 0x2000, scoped, tag = 'output window, operand 0']
    #allocation3 [shape = 's32[2]{0}', space=sflag, size = 0x8, scoped, tag = 'scoped memory for tpu_custom_call.1']
    %22 = vsyncpa [#allocation3], 0
    %s23 = scalar_lea.sflag [#allocation3], 1
    %24 = vsyncpa %s23, 0
    loop: start=0, step=1, limit=4
    $region2: #{tpu_custom_call.1} parent=1 // loop_pre_header
      _
    $region3: #{tpu_custom_call.1} parent=1 // loop_header
      %s26 = sphi 0, %s30
      %p27 = scmp.ge.s32.totalorder %s26, 4
      %s36 = sphi 0, %s38
      %s39 = sphi 0, %s36
      %s40 = sphi 0, %s39
      %s56 = sphi 0, %s40
      %s60 = sphi 0, %s60
      %s62 = sphi 0, %s60
      %s63 = sphi 0, %s62
      %s77 = sphi 0, %s63
      %s81 = sphi 0, %s81
      %s83 = sphi 0, %s81
      %s84 = sphi 0, %s83
      %s98 = sphi 0, %s84
      %s102 = sphi 0, %s102
      %s104 = sphi 0, %s102
      %s105 = sphi 0, %s104
      %s119 = sphi 0, %s105
      %s123 = sphi 0, %s123
      %s125 = sphi 0, %s123
      %s126 = sphi 0, %s125
      %s140 = sphi 0, %s126
      %s144 = sphi 0, %s144
      %s146 = sphi 0, %s144
      %s147 = sphi 0, %s146
      %s161 = sphi 0, %s147
      %s165 = sphi 0, %s165
      %s167 = sphi 0, %s165
      %s168 = sphi 0, %s167
      %s182 = sphi 0, %s168
      %s186 = sphi 0, %s186
      %s188 = sphi 0, %s186
      %s189 = sphi 0, %s188
      %s203 = sphi 0, %s189
      %s207 = sphi 0, %s207
      %s209 = sphi 0, %s207
      %s210 = sphi 0, %s209
      %s224 = sphi 0, %s210
      %s228 = sphi 0, %s228
      %s230 = sphi 0, %s228
      %s231 = sphi 0, %s230
      %s245 = sphi 0, %s231
      %s249 = sphi 0, %s249
      %s251 = sphi 0, %s249
      %s252 = sphi 0, %s251
      %s266 = sphi 0, %s252
      %s270 = sphi 0, %s270
      %s272 = sphi 0, %s270
      %s273 = sphi 0, %s272
      %s287 = sphi 0, %s273
      %s291 = sphi 0, %s291
      %s293 = sphi 0, %s291
      %s294 = sphi 0, %s293
      %s308 = sphi 0, %s294
      %s312 = sphi 0, %s312
      %s314 = sphi 0, %s312
      %s315 = sphi 0, %s314
      %s329 = sphi 0, %s315
      %s333 = sphi 0, %s333
      %s335 = sphi 0, %s333
      %s336 = sphi 0, %s335
      %s350 = sphi 0, %s336
      %s354 = sphi 0, %s354
      %s356 = sphi 0, %s354
      %s357 = sphi 0, %s356
      %s371 = sphi 0, %s357
      %s375 = sphi 0, %s375
      %s377 = sphi 0, %s375
      %s378 = sphi 0, %s377
      %s392 = sphi 0, %s378
      %s398 = sphi 0, %s400
      %s401 = sphi 0, %s398
      %s402 = sphi 0, %s401
      %s418 = sphi 0, %s402
    $region4: #{tpu_custom_call.1} parent=1 // loop_header_branch
      %29 = sbr.rel (%p27) target = $region8
    $region5: #{tpu_custom_call.1} parent=1 // loop_body
      %s31 = ssub.s32 %s26, 1
      %s32 = ssub.s32 %s26, 2
      %s33 = sadd.s32 %s26, 1
      %s34 = ssub.s32 %s26, %s33
      %p35 = scmp.eq.s32.totalorder %s34, 0
      %s37 = sadd.s32 %s36, 1
      %s38 = scalar_select %p35, %s36, %s37
      %p41 = pneg %p35
      %p42 = scmp.eq.s32.totalorder %s26, 1
      %p43 = por %p41, %p42
      %p44 = scmp.ne.s32.totalorder %s36, %s39
      %p45 = scmp.eq.s32.totalorder %s26, 0
      %p46 = por %p44, %p45
      %p47 = scmp.ne.s32.totalorder %s36, %s39
      %p48 = scmp.eq.s32.totalorder %s31, 1
      %p49 = por %p47, %p48
      %p50 = scmp.ne.s32.totalorder %s39, %s40
      %p51 = scmp.eq.s32.totalorder %s31, 0
      %p52 = por %p50, %p51
      %p53 = scmp.ne.s32.totalorder %s39, %s40
      %p54 = scmp.eq.s32.totalorder %s32, 1
      %p55 = por %p53, %p54
      %p57 = scmp.ne.s32.totalorder %s40, %s56
      %p58 = scmp.eq.s32.totalorder %s32, 0
      %p59 = por %p57, %p58
      %s61 = sadd.s32 %s60, 1
      %p64 = scmp.eq.s32.totalorder %s26, 1
      %p65 = scmp.ne.s32.totalorder %s60, %s62
      %p66 = scmp.eq.s32.totalorder %s26, 0
      %p67 = por %p65, %p66
      %p68 = scmp.ne.s32.totalorder %s60, %s62
      %p69 = scmp.eq.s32.totalorder %s31, 1
      %p70 = por %p68, %p69
      %p71 = scmp.ne.s32.totalorder %s62, %s63
      %p72 = scmp.eq.s32.totalorder %s31, 0
      %p73 = por %p71, %p72
      %p74 = scmp.ne.s32.totalorder %s62, %s63
      %p75 = scmp.eq.s32.totalorder %s32, 1
      %p76 = por %p74, %p75
      %p78 = scmp.ne.s32.totalorder %s63, %s77
      %p79 = scmp.eq.s32.totalorder %s32, 0
      %p80 = por %p78, %p79
      %s82 = sadd.s32 %s81, 1
      %p85 = scmp.eq.s32.totalorder %s26, 1
      %p86 = scmp.ne.s32.totalorder %s81, %s83
      %p87 = scmp.eq.s32.totalorder %s26, 0
      %p88 = por %p86, %p87
      %p89 = scmp.ne.s32.totalorder %s81, %s83
      %p90 = scmp.eq.s32.totalorder %s31, 1
      %p91 = por %p89, %p90
      %p92 = scmp.ne.s32.totalorder %s83, %s84
      %p93 = scmp.eq.s32.totalorder %s31, 0
      %p94 = por %p92, %p93
      %p95 = scmp.ne.s32.totalorder %s83, %s84
      %p96 = scmp.eq.s32.totalorder %s32, 1
      %p97 = por %p95, %p96
      %p99 = scmp.ne.s32.totalorder %s84, %s98
      %p100 = scmp.eq.s32.totalorder %s32, 0
      %p101 = por %p99, %p100
      %s103 = sadd.s32 %s102, 1
      %p106 = scmp.eq.s32.totalorder %s26, 1
      %p107 = scmp.ne.s32.totalorder %s102, %s104
      %p108 = scmp.eq.s32.totalorder %s26, 0
      %p109 = por %p107, %p108
      %p110 = scmp.ne.s32.totalorder %s102, %s104
      %p111 = scmp.eq.s32.totalorder %s31, 1
      %p112 = por %p110, %p111
      %p113 = scmp.ne.s32.totalorder %s104, %s105
      %p114 = scmp.eq.s32.totalorder %s31, 0
      %p115 = por %p113, %p114
      %p116 = scmp.ne.s32.totalorder %s104, %s105
      %p117 = scmp.eq.s32.totalorder %s32, 1
      %p118 = por %p116, %p117
      %p120 = scmp.ne.s32.totalorder %s105, %s119
      %p121 = scmp.eq.s32.totalorder %s32, 0
      %p122 = por %p120, %p121
      %s124 = sadd.s32 %s123, 1
      %p127 = scmp.eq.s32.totalorder %s26, 1
      %p128 = scmp.ne.s32.totalorder %s123, %s125
      %p129 = scmp.eq.s32.totalorder %s26, 0
      %p130 = por %p128, %p129
      %p131 = scmp.ne.s32.totalorder %s123, %s125
      %p132 = scmp.eq.s32.totalorder %s31, 1
      %p133 = por %p131, %p132
      %p134 = scmp.ne.s32.totalorder %s125, %s126
      %p135 = scmp.eq.s32.totalorder %s31, 0
      %p136 = por %p134, %p135
      %p137 = scmp.ne.s32.totalorder %s125, %s126
      %p138 = scmp.eq.s32.totalorder %s32, 1
      %p139 = por %p137, %p138
      %p141 = scmp.ne.s32.totalorder %s126, %s140
      %p142 = scmp.eq.s32.totalorder %s32, 0
      %p143 = por %p141, %p142
      %s145 = sadd.s32 %s144, 1
      %p148 = scmp.eq.s32.totalorder %s26, 1
      %p149 = scmp.ne.s32.totalorder %s144, %s146
      %p150 = scmp.eq.s32.totalorder %s26, 0
      %p151 = por %p149, %p150
      %p152 = scmp.ne.s32.totalorder %s144, %s146
      %p153 = scmp.eq.s32.totalorder %s31, 1
      %p154 = por %p152, %p153
      %p155 = scmp.ne.s32.totalorder %s146, %s147
      %p156 = scmp.eq.s32.totalorder %s31, 0
      %p157 = por %p155, %p156
      %p158 = scmp.ne.s32.totalorder %s146, %s147
      %p159 = scmp.eq.s32.totalorder %s32, 1
      %p160 = por %p158, %p159
      %p162 = scmp.ne.s32.totalorder %s147, %s161
      %p163 = scmp.eq.s32.totalorder %s32, 0
      %p164 = por %p162, %p163
      %s166 = sadd.s32 %s165, 1
      %p169 = scmp.eq.s32.totalorder %s26, 1
      %p170 = scmp.ne.s32.totalorder %s165, %s167
      %p171 = scmp.eq.s32.totalorder %s26, 0
      %p172 = por %p170, %p171
      %p173 = scmp.ne.s32.totalorder %s165, %s167
      %p174 = scmp.eq.s32.totalorder %s31, 1
      %p175 = por %p173, %p174
      %p176 = scmp.ne.s32.totalorder %s167, %s168
      %p177 = scmp.eq.s32.totalorder %s31, 0
      %p178 = por %p176, %p177
      %p179 = scmp.ne.s32.totalorder %s167, %s168
      %p180 = scmp.eq.s32.totalorder %s32, 1
      %p181 = por %p179, %p180
      %p183 = scmp.ne.s32.totalorder %s168, %s182
      %p184 = scmp.eq.s32.totalorder %s32, 0
      %p185 = por %p183, %p184
      %s187 = sadd.s32 %s186, 1
      %p190 = scmp.eq.s32.totalorder %s26, 1
      %p191 = scmp.ne.s32.totalorder %s186, %s188
      %p192 = scmp.eq.s32.totalorder %s26, 0
      %p193 = por %p191, %p192
      %p194 = scmp.ne.s32.totalorder %s186, %s188
      %p195 = scmp.eq.s32.totalorder %s31, 1
      %p196 = por %p194, %p195
      %p197 = scmp.ne.s32.totalorder %s188, %s189
      %p198 = scmp.eq.s32.totalorder %s31, 0
      %p199 = por %p197, %p198
      %p200 = scmp.ne.s32.totalorder %s188, %s189
      %p201 = scmp.eq.s32.totalorder %s32, 1
      %p202 = por %p200, %p201
      %p204 = scmp.ne.s32.totalorder %s189, %s203
      %p205 = scmp.eq.s32.totalorder %s32, 0
      %p206 = por %p204, %p205
      %s208 = sadd.s32 %s207, 1
      %p211 = scmp.eq.s32.totalorder %s26, 1
      %p212 = scmp.ne.s32.totalorder %s207, %s209
      %p213 = scmp.eq.s32.totalorder %s26, 0
      %p214 = por %p212, %p213
      %p215 = scmp.ne.s32.totalorder %s207, %s209
      %p216 = scmp.eq.s32.totalorder %s31, 1
      %p217 = por %p215, %p216
      %p218 = scmp.ne.s32.totalorder %s209, %s210
      %p219 = scmp.eq.s32.totalorder %s31, 0
      %p220 = por %p218, %p219
      %p221 = scmp.ne.s32.totalorder %s209, %s210
      %p222 = scmp.eq.s32.totalorder %s32, 1
      %p223 = por %p221, %p222
      %p225 = scmp.ne.s32.totalorder %s210, %s224
      %p226 = scmp.eq.s32.totalorder %s32, 0
      %p227 = por %p225, %p226
      %s229 = sadd.s32 %s228, 1
      %p232 = scmp.eq.s32.totalorder %s26, 1
      %p233 = scmp.ne.s32.totalorder %s228, %s230
      %p234 = scmp.eq.s32.totalorder %s26, 0
      %p235 = por %p233, %p234
      %p236 = scmp.ne.s32.totalorder %s228, %s230
      %p237 = scmp.eq.s32.totalorder %s31, 1
      %p238 = por %p236, %p237
      %p239 = scmp.ne.s32.totalorder %s230, %s231
      %p240 = scmp.eq.s32.totalorder %s31, 0
      %p241 = por %p239, %p240
      %p242 = scmp.ne.s32.totalorder %s230, %s231
      %p243 = scmp.eq.s32.totalorder %s32, 1
      %p244 = por %p242, %p243
      %p246 = scmp.ne.s32.totalorder %s231, %s245
      %p247 = scmp.eq.s32.totalorder %s32, 0
      %p248 = por %p246, %p247
      %s250 = sadd.s32 %s249, 1
      %p253 = scmp.eq.s32.totalorder %s26, 1
      %p254 = scmp.ne.s32.totalorder %s249, %s251
      %p255 = scmp.eq.s32.totalorder %s26, 0
      %p256 = por %p254, %p255
      %p257 = scmp.ne.s32.totalorder %s249, %s251
      %p258 = scmp.eq.s32.totalorder %s31, 1
      %p259 = por %p257, %p258
      %p260 = scmp.ne.s32.totalorder %s251, %s252
      %p261 = scmp.eq.s32.totalorder %s31, 0
      %p262 = por %p260, %p261
      %p263 = scmp.ne.s32.totalorder %s251, %s252
      %p264 = scmp.eq.s32.totalorder %s32, 1
      %p265 = por %p263, %p264
      %p267 = scmp.ne.s32.totalorder %s252, %s266
      %p268 = scmp.eq.s32.totalorder %s32, 0
      %p269 = por %p267, %p268
      %s271 = sadd.s32 %s270, 1
      %p274 = scmp.eq.s32.totalorder %s26, 1
      %p275 = scmp.ne.s32.totalorder %s270, %s272
      %p276 = scmp.eq.s32.totalorder %s26, 0
      %p277 = por %p275, %p276
      %p278 = scmp.ne.s32.totalorder %s270, %s272
      %p279 = scmp.eq.s32.totalorder %s31, 1
      %p280 = por %p278, %p279
      %p281 = scmp.ne.s32.totalorder %s272, %s273
      %p282 = scmp.eq.s32.totalorder %s31, 0
      %p283 = por %p281, %p282
      %p284 = scmp.ne.s32.totalorder %s272, %s273
      %p285 = scmp.eq.s32.totalorder %s32, 1
      %p286 = por %p284, %p285
      %p288 = scmp.ne.s32.totalorder %s273, %s287
      %p289 = scmp.eq.s32.totalorder %s32, 0
      %p290 = por %p288, %p289
      %s292 = sadd.s32 %s291, 1
      %p295 = scmp.eq.s32.totalorder %s26, 1
      %p296 = scmp.ne.s32.totalorder %s291, %s293
      %p297 = scmp.eq.s32.totalorder %s26, 0
      %p298 = por %p296, %p297
      %p299 = scmp.ne.s32.totalorder %s291, %s293
      %p300 = scmp.eq.s32.totalorder %s31, 1
      %p301 = por %p299, %p300
      %p302 = scmp.ne.s32.totalorder %s293, %s294
      %p303 = scmp.eq.s32.totalorder %s31, 0
      %p304 = por %p302, %p303
      %p305 = scmp.ne.s32.totalorder %s293, %s294
      %p306 = scmp.eq.s32.totalorder %s32, 1
      %p307 = por %p305, %p306
      %p309 = scmp.ne.s32.totalorder %s294, %s308
      %p310 = scmp.eq.s32.totalorder %s32, 0
      %p311 = por %p309, %p310
      %s313 = sadd.s32 %s312, 1
      %p316 = scmp.eq.s32.totalorder %s26, 1
      %p317 = scmp.ne.s32.totalorder %s312, %s314
      %p318 = scmp.eq.s32.totalorder %s26, 0
      %p319 = por %p317, %p318
      %p320 = scmp.ne.s32.totalorder %s312, %s314
      %p321 = scmp.eq.s32.totalorder %s31, 1
      %p322 = por %p320, %p321
      %p323 = scmp.ne.s32.totalorder %s314, %s315
      %p324 = scmp.eq.s32.totalorder %s31, 0
      %p325 = por %p323, %p324
      %p326 = scmp.ne.s32.totalorder %s314, %s315
      %p327 = scmp.eq.s32.totalorder %s32, 1
      %p328 = por %p326, %p327
      %p330 = scmp.ne.s32.totalorder %s315, %s329
      %p331 = scmp.eq.s32.totalorder %s32, 0
      %p332 = por %p330, %p331
      %s334 = sadd.s32 %s333, 1
      %p337 = scmp.eq.s32.totalorder %s26, 1
      %p338 = scmp.ne.s32.totalorder %s333, %s335
      %p339 = scmp.eq.s32.totalorder %s26, 0
      %p340 = por %p338, %p339
      %p341 = scmp.ne.s32.totalorder %s333, %s335
      %p342 = scmp.eq.s32.totalorder %s31, 1
      %p343 = por %p341, %p342
      %p344 = scmp.ne.s32.totalorder %s335, %s336
      %p345 = scmp.eq.s32.totalorder %s31, 0
      %p346 = por %p344, %p345
      %p347 = scmp.ne.s32.totalorder %s335, %s336
      %p348 = scmp.eq.s32.totalorder %s32, 1
      %p349 = por %p347, %p348
      %p351 = scmp.ne.s32.totalorder %s336, %s350
      %p352 = scmp.eq.s32.totalorder %s32, 0
      %p353 = por %p351, %p352
      %s355 = sadd.s32 %s354, 1
      %p358 = scmp.eq.s32.totalorder %s26, 1
      %p359 = scmp.ne.s32.totalorder %s354, %s356
      %p360 = scmp.eq.s32.totalorder %s26, 0
      %p361 = por %p359, %p360
      %p362 = scmp.ne.s32.totalorder %s354, %s356
      %p363 = scmp.eq.s32.totalorder %s31, 1
      %p364 = por %p362, %p363
      %p365 = scmp.ne.s32.totalorder %s356, %s357
      %p366 = scmp.eq.s32.totalorder %s31, 0
      %p367 = por %p365, %p366
      %p368 = scmp.ne.s32.totalorder %s356, %s357
      %p369 = scmp.eq.s32.totalorder %s32, 1
      %p370 = por %p368, %p369
      %p372 = scmp.ne.s32.totalorder %s357, %s371
      %p373 = scmp.eq.s32.totalorder %s32, 0
      %p374 = por %p372, %p373
      %s376 = sadd.s32 %s375, 1
      %p379 = scmp.eq.s32.totalorder %s26, 1
      %p380 = scmp.ne.s32.totalorder %s375, %s377
      %p381 = scmp.eq.s32.totalorder %s26, 0
      %p382 = por %p380, %p381
      %p383 = scmp.ne.s32.totalorder %s375, %s377
      %p384 = scmp.eq.s32.totalorder %s31, 1
      %p385 = por %p383, %p384
      %p386 = scmp.ne.s32.totalorder %s377, %s378
      %p387 = scmp.eq.s32.totalorder %s31, 0
      %p388 = por %p386, %p387
      %p389 = scmp.ne.s32.totalorder %s377, %s378
      %p390 = scmp.eq.s32.totalorder %s32, 1
      %p391 = por %p389, %p390
      %p393 = scmp.ne.s32.totalorder %s378, %s392
      %p394 = scmp.eq.s32.totalorder %s32, 0
      %p395 = por %p393, %p394
      %s396 = ssub.s32 %s26, %s33
      %p397 = scmp.eq.s32.totalorder %s396, 0
      %s399 = sadd.s32 %s398, 1
      %s400 = scalar_select %p397, %s398, %s399
      %p403 = pneg %p397
      %p404 = scmp.eq.s32.totalorder %s26, 1
      %p405 = por %p403, %p404
      %p406 = scmp.ne.s32.totalorder %s398, %s401
      %p407 = scmp.eq.s32.totalorder %s26, 0
      %p408 = por %p406, %p407
      %p409 = scmp.ne.s32.totalorder %s398, %s401
      %p410 = scmp.eq.s32.totalorder %s31, 1
      %p411 = por %p409, %p410
      %p412 = scmp.ne.s32.totalorder %s401, %s402
      %p413 = scmp.eq.s32.totalorder %s31, 0
      %p414 = por %p412, %p413
      %p415 = scmp.ne.s32.totalorder %s401, %s402
      %p416 = scmp.eq.s32.totalorder %s32, 1
      %p417 = por %p415, %p416
      %p419 = scmp.ne.s32.totalorder %s402, %s418
      %p420 = scmp.eq.s32.totalorder %s32, 0
      %p421 = por %p419, %p420
      %p422 = scmp.le.s32.totalorder 1, %s26
      %p423 = scmp.lt.s32.totalorder %s26, 3
      %p424 = pnand %p422, %p423
      %p425 = pneg %p424
      // Predicated region
      $region9: #{tpu_custom_call.1} parent=5 // pred_check
        _
      $region10: #{tpu_custom_call.1} parent=5 // pred_check_branch
        %427 = sbr.rel (%p424) target = $region12
      $region11: #{tpu_custom_call.1} parent=5 // pred_region
        %s428 = ssub.s32 %s26, 1
        // Predicated region
        $region13: #{tpu_custom_call.1} parent=11 // pred_check
          %p429 = pneg %p73
        $region14: #{tpu_custom_call.1} parent=11 // pred_check_branch
          %431 = sbr.rel (%p429) target = $region16
        $region15: #{tpu_custom_call.1} parent=11 // pred_region
          _
        $region16: #{tpu_custom_call.1} parent=11 // pred_fallthru
          _
        // Predicated region
        $region17: #{tpu_custom_call.1} parent=11 // pred_check
          %p432 = pneg %p94
        $region18: #{tpu_custom_call.1} parent=11 // pred_check_branch
          %434 = sbr.rel (%p432) target = $region20
        $region19: #{tpu_custom_call.1} parent=11 // pred_region
          _
        $region20: #{tpu_custom_call.1} parent=11 // pred_fallthru
          _
        // Predicated region
        $region21: #{tpu_custom_call.1} parent=11 // pred_check
          %p435 = pneg %p115
        $region22: #{tpu_custom_call.1} parent=11 // pred_check_branch
          %437 = sbr.rel (%p435) target = $region24
        $region23: #{tpu_custom_call.1} parent=11 // pred_region
          _
        $region24: #{tpu_custom_call.1} parent=11 // pred_fallthru
          _
        // Predicated region
        $region25: #{tpu_custom_call.1} parent=11 // pred_check
          %p438 = pneg %p136
        $region26: #{tpu_custom_call.1} parent=11 // pred_check_branch
          %440 = sbr.rel (%p438) target = $region28
        $region27: #{tpu_custom_call.1} parent=11 // pred_region
          _
        $region28: #{tpu_custom_call.1} parent=11 // pred_fallthru
          _
        // Predicated region
        $region29: #{tpu_custom_call.1} parent=11 // pred_check
          %p441 = pneg %p157
        $region30: #{tpu_custom_call.1} parent=11 // pred_check_branch
          %443 = sbr.rel (%p441) target = $region32
        $region31: #{tpu_custom_call.1} parent=11 // pred_region
          _
        $region32: #{tpu_custom_call.1} parent=11 // pred_fallthru
          _
        // Predicated region
        $region33: #{tpu_custom_call.1} parent=11 // pred_check
          %p444 = pneg %p178
        $region34: #{tpu_custom_call.1} parent=11 // pred_check_branch
          %446 = sbr.rel (%p444) target = $region36
        $region35: #{tpu_custom_call.1} parent=11 // pred_region
          _
        $region36: #{tpu_custom_call.1} parent=11 // pred_fallthru
          _
        // Predicated region
        $region37: #{tpu_custom_call.1} parent=11 // pred_check
          %p447 = pneg %p199
        $region38: #{tpu_custom_call.1} parent=11 // pred_check_branch
          %449 = sbr.rel (%p447) target = $region40
        $region39: #{tpu_custom_call.1} parent=11 // pred_region
          _
        $region40: #{tpu_custom_call.1} parent=11 // pred_fallthru
          _
        // Predicated region
        $region41: #{tpu_custom_call.1} parent=11 // pred_check
          %p450 = pneg %p220
        $region42: #{tpu_custom_call.1} parent=11 // pred_check_branch
          %452 = sbr.rel (%p450) target = $region44
        $region43: #{tpu_custom_call.1} parent=11 // pred_region
          _
        $region44: #{tpu_custom_call.1} parent=11 // pred_fallthru
          _
        // Predicated region
        $region45: #{tpu_custom_call.1} parent=11 // pred_check
          %p453 = pneg %p241
        $region46: #{tpu_custom_call.1} parent=11 // pred_check_branch
          %455 = sbr.rel (%p453) target = $region48
        $region47: #{tpu_custom_call.1} parent=11 // pred_region
          _
        $region48: #{tpu_custom_call.1} parent=11 // pred_fallthru
          _
        // Predicated region
        $region49: #{tpu_custom_call.1} parent=11 // pred_check
          %p456 = pneg %p262
        $region50: #{tpu_custom_call.1} parent=11 // pred_check_branch
          %458 = sbr.rel (%p456) target = $region52
        $region51: #{tpu_custom_call.1} parent=11 // pred_region
          _
        $region52: #{tpu_custom_call.1} parent=11 // pred_fallthru
          _
        // Predicated region
        $region53: #{tpu_custom_call.1} parent=11 // pred_check
          %p459 = pneg %p283
        $region54: #{tpu_custom_call.1} parent=11 // pred_check_branch
          %461 = sbr.rel (%p459) target = $region56
        $region55: #{tpu_custom_call.1} parent=11 // pred_region
          _
        $region56: #{tpu_custom_call.1} parent=11 // pred_fallthru
          _
        // Predicated region
        $region57: #{tpu_custom_call.1} parent=11 // pred_check
          %p462 = pneg %p304
        $region58: #{tpu_custom_call.1} parent=11 // pred_check_branch
          %464 = sbr.rel (%p462) target = $region60
        $region59: #{tpu_custom_call.1} parent=11 // pred_region
          _
        $region60: #{tpu_custom_call.1} parent=11 // pred_fallthru
          _
        // Predicated region
        $region61: #{tpu_custom_call.1} parent=11 // pred_check
          %p465 = pneg %p325
        $region62: #{tpu_custom_call.1} parent=11 // pred_check_branch
          %467 = sbr.rel (%p465) target = $region64
        $region63: #{tpu_custom_call.1} parent=11 // pred_region
          _
        $region64: #{tpu_custom_call.1} parent=11 // pred_fallthru
          _
        // Predicated region
        $region65: #{tpu_custom_call.1} parent=11 // pred_check
          %p468 = pneg %p346
        $region66: #{tpu_custom_call.1} parent=11 // pred_check_branch
          %470 = sbr.rel (%p468) target = $region68
        $region67: #{tpu_custom_call.1} parent=11 // pred_region
          _
        $region68: #{tpu_custom_call.1} parent=11 // pred_fallthru
          _
        // Predicated region
        $region69: #{tpu_custom_call.1} parent=11 // pred_check
          %p471 = pneg %p367
        $region70: #{tpu_custom_call.1} parent=11 // pred_check_branch
          %473 = sbr.rel (%p471) target = $region72
        $region71: #{tpu_custom_call.1} parent=11 // pred_region
          _
        $region72: #{tpu_custom_call.1} parent=11 // pred_fallthru
          _
        // Predicated region
        $region73: #{tpu_custom_call.1} parent=11 // pred_check
          %p474 = pneg %p388
        $region74: #{tpu_custom_call.1} parent=11 // pred_check_branch
          %476 = sbr.rel (%p474) target = $region76
        $region75: #{tpu_custom_call.1} parent=11 // pred_region
          _
        $region76: #{tpu_custom_call.1} parent=11 // pred_fallthru
          _
      $region12: #{tpu_custom_call.1} parent=5 // pred_fallthru
        _
      %p477 = scmp.lt.s32.totalorder %s26, 2
      // Predicated region
      $region77: #{tpu_custom_call.1} parent=5 // pred_check
        %p478 = pneg %p477
      $region78: #{tpu_custom_call.1} parent=5 // pred_check_branch
        %480 = sbr.rel (%p478) target = $region80
      $region79: #{tpu_custom_call.1} parent=5 // pred_region
        // Predicated region
        $region81: #{tpu_custom_call.1} parent=79 // pred_check
          %p481 = pneg %p46
        $region82: #{tpu_custom_call.1} parent=79 // pred_check_branch
          %483 = sbr.rel (%p481) target = $region84
        $region83: #{tpu_custom_call.1} parent=79 // pred_region
          %p484 = scmp.lt.s32.totalorder %s26, 1
          %s485 = scalar_select %p484, %s26, 1
          %s486 = smul.addr %s485, 8
          %s487 = scalar_lea.vmem %s0, %s486
        $region84: #{tpu_custom_call.1} parent=79 // pred_fallthru
          _
      $region80: #{tpu_custom_call.1} parent=5 // pred_fallthru
        _
      %p488 = scmp.le.s32.totalorder 1, %s26
      %p489 = scmp.lt.s32.totalorder %s26, 3
      %p490 = pnand %p488, %p489
      %p491 = pneg %p490
      // Predicated region
      $region85: #{tpu_custom_call.1} parent=5 // pred_check
        _
      $region86: #{tpu_custom_call.1} parent=5 // pred_check_branch
        %493 = sbr.rel (%p490) target = $region88
      $region87: #{tpu_custom_call.1} parent=5 // pred_region
        %s494 = ssub.s32 %s26, 1
        %p495 = scmp.lt.s32.totalorder %s31, 1
        %s496 = scalar_select %p495, %s31, 1
        %s497 = smul.addr %s496, 8
        %s498 = scalar_lea.vmem %s0, %s497
        %p499 = pneg %p52
        %p500 = pneg %p49
        %p501 = pneg %p73
        %p502 = pneg %p70
        %p503 = pneg %p94
        %p504 = pneg %p91
        %p505 = pneg %p115
        %p506 = pneg %p112
        %p507 = pneg %p136
        %p508 = pneg %p133
        %p509 = pneg %p157
        %p510 = pneg %p154
        %p511 = pneg %p178
        %p512 = pneg %p175
        %p513 = pneg %p199
        %p514 = pneg %p196
        %p515 = pneg %p220
        %p516 = pneg %p217
        %p517 = pneg %p241
        %p518 = pneg %p238
        %p519 = pneg %p262
        %p520 = pneg %p259
        %p521 = pneg %p283
        %p522 = pneg %p280
        %p523 = pneg %p304
        %p524 = pneg %p301
        %p525 = pneg %p325
        %p526 = pneg %p322
        %p527 = pneg %p346
        %p528 = pneg %p343
        %p529 = pneg %p367
        %p530 = pneg %p364
        %p531 = pneg %p388
        %p532 = pneg %p385
        %p533 = pneg %p414
        %p534 = pneg %p411
        %s535 = sand.u32 %s401, 1
        %s536 = scalar_lea.sflag [#allocation3], %s535
        %s537 = sand.u32 %s401, 1
        %s538 = smul.addr %s537, 8
        %s539 = scalar_lea.vmem [#allocation2], %s538
        %p540 = scmp.lt.s32.totalorder %s31, 1
        %s541 = scalar_select %p540, %s31, 1
        %s542 = smul.addr %s541, 8
        %s543 = scalar_lea.vmem %s0, %s542
        %v544 = vld [vmem:[%s543] sm:$0xff]
        %v545 = vlaneseq
        %v546 = vand.u32 %v545, 127
        %547 = vset.pattern.permute.xlu0 0
        %548 = vperm.xlu0 %547, %v544
        %v549 = vpop.permute.xlu0 %548
        %vm550 = vcmp.eq.s32.totalorder %v546, %v549
        %v551 = vsel %vm550, 1, 0
        %v552 = vcvt.s32.f32 %v551
        %v553 = vld [vmem:[%s1] sm:$0xff]
        %v554 = vld [vmem:[%s1 + $0x8] sm:$0xff]
        %v555 = vld [vmem:[%s1 + $0x10] sm:$0xff]
        %v556 = vld [vmem:[%s1 + $0x18] sm:$0xff]
        %v557 = vld [vmem:[%s1 + $0x20] sm:$0xff]
        %v558 = vld [vmem:[%s1 + $0x28] sm:$0xff]
        %v559 = vld [vmem:[%s1 + $0x30] sm:$0xff]
        %v560 = vld [vmem:[%s1 + $0x38] sm:$0xff]
        %v561 = vld [vmem:[%s2] sm:$0xff]
        %vm562 = vcmask 523264
        %v564 = vsel %vm562, %v552, 0
        %566 = vmatprep.subr.mxu0 0.0
        %567 = vmatpush1.msra.mxu0 0.0
        %568 = vmatprep.subr.mxu0 0.0
        %569 = vmatpush1.msra.mxu0 0.0
        %570 = vmatprep.subr.mxu0 0.0
        %571 = vmatpush1.msra.mxu0 0.0
        %572 = vmatprep.subr.mxu0 0.0
        %573 = vmatpush1.msra.mxu0 0.0
        %574 = vmatprep.subr.mxu0 0.0
        %575 = vmatpush1.msra.mxu0 0.0
        %576 = vmatprep.subr.mxu0 0.0
        %577 = vmatpush1.msra.mxu0 0.0
        %578 = vmatprep.subr.mxu0 0.0
        %579 = vmatpush1.msra.mxu0 0.0
        %580 = vmatprep.subr.mxu0 0.0
        %581 = vmatpush1.msra.mxu0 0.0
        %582 = vmatprep.subr.mxu0 0.0
        %583 = vmatpush1.msra.mxu0 %v560
        %584 = vmatprep.subr.mxu0 0.0
        %585 = vmatpush1.msra.mxu0 %v559
        %586 = vmatprep.subr.mxu0 0.0
        %587 = vmatpush1.msra.mxu0 %v558
        %588 = vmatprep.subr.mxu0 0.0
        %589 = vmatpush1.msra.mxu0 %v557
        %590 = vmatprep.subr.mxu0 0.0
        %591 = vmatpush1.msra.mxu0 %v556
        %592 = vmatprep.subr.mxu0 0.0
        %593 = vmatpush1.msra.mxu0 %v555
        %594 = vmatprep.subr.mxu0 0.0
        %595 = vmatpush1.msra.mxu0 %v554
        %596 = vmatprep.subr.mxu0 0.0
        %597 = vmatpush1.msra.mxu0 %v553
        %598 = vmatprep.subr.mxu0 0.0
        %599 = vmatpush2.msra.mxu0 0.0
        %600 = vmatprep.subr.mxu0 0.0
        %601 = vmatpush2.msra.mxu0 0.0
        %602 = vmatprep.subr.mxu0 0.0
        %603 = vmatpush2.msra.mxu0 0.0
        %604 = vmatprep.subr.mxu0 0.0
        %605 = vmatpush2.msra.mxu0 0.0
        %606 = vmatprep.subr.mxu0 0.0
        %607 = vmatpush2.msra.mxu0 0.0
        %608 = vmatprep.subr.mxu0 0.0
        %609 = vmatpush2.msra.mxu0 0.0
        %610 = vmatprep.subr.mxu0 0.0
        %611 = vmatpush2.msra.mxu0 0.0
        %612 = vmatprep.subr.mxu0 0.0
        %613 = vmatpush2.msra.mxu0 0.0
        %614 = vmatprep.subr.mxu0 0.0
        %615 = vmatpush2.msra.mxu0 0.0
        %616 = vmatprep.subr.mxu0 0.0
        %617 = vmatpush2.msra.mxu0 0.0
        %618 = vmatprep.subr.mxu0 0.0
        %619 = vmatpush2.msra.mxu0 0.0
        %620 = vmatprep.subr.mxu0 0.0
        %621 = vmatpush2.msra.mxu0 0.0
        %622 = vmatprep.subr.mxu0 0.0
        %623 = vmatpush2.msra.mxu0 0.0
        %624 = vmatprep.subr.mxu0 0.0
        %625 = vmatpush2.msra.mxu0 0.0
        %626 = vmatprep.subr.mxu0 0.0
        %627 = vmatpush2.msra.mxu0 0.0
        %628 = vmatprep.subr.mxu0 0.0
        %629 = vmatpush2.msra.mxu0 0.0
        %630 = vmatprep.mubr.f32.mxu0 0.0
        %631 = vmatmul.mubr.f32.gmra.mxu0 %v564
        %v632 = vpop.f32.mrf.mxu0
        %v633 = vadd.f32 %v561, %v632
        %v634 = vpop.f32.mrf.mxu0
        %635 = vdwg.mxu0
        %v636 = vld [vmem:[%s3] sm:$0xff]
        %v637 = vld [vmem:[%s3 + $0x8] sm:$0xff]
        %v638 = vld [vmem:[%s3 + $0x10] sm:$0xff]
        %v639 = vld [vmem:[%s3 + $0x18] sm:$0xff]
        %v640 = vld [vmem:[%s4] sm:$0x1]
        %v642 = vlaneseq
        %v643 = vshrl.u32 %v642, 7
        %v644 = vsub.s32 0, %v643
        %v645 = vrot.slane %v640, %v644
        %vm647 = vcmask 261120
        %v649 = vsel %vm647, %v633, 0
        %651 = vmatprep.subr.mxu0 0.0
        %652 = vmatpush1.msra.mxu0 0.0
        %653 = vmatprep.subr.mxu0 0.0
        %654 = vmatpush1.msra.mxu0 0.0
        %655 = vmatprep.subr.mxu0 0.0
        %656 = vmatpush1.msra.mxu0 0.0
        %657 = vmatprep.subr.mxu0 0.0
        %658 = vmatpush1.msra.mxu0 0.0
        %659 = vmatprep.subr.mxu0 0.0
        %660 = vmatpush1.msra.mxu0 0.0
        %661 = vmatprep.subr.mxu0 0.0
        %662 = vmatpush1.msra.mxu0 0.0
        %663 = vmatprep.subr.mxu0 0.0
        %664 = vmatpush1.msra.mxu0 0.0
        %665 = vmatprep.subr.mxu0 0.0
        %666 = vmatpush1.msra.mxu0 0.0
        %667 = vmatprep.subr.mxu0 0.0
        %668 = vmatpush1.msra.mxu0 0.0
        %669 = vmatprep.subr.mxu0 0.0
        %670 = vmatpush1.msra.mxu0 0.0
        %671 = vmatprep.subr.mxu0 0.0
        %672 = vmatpush1.msra.mxu0 0.0
        %673 = vmatprep.subr.mxu0 0.0
        %674 = vmatpush1.msra.mxu0 0.0
        %675 = vmatprep.subr.mxu0 0.0
        %676 = vmatpush1.msra.mxu0 %v639
        %677 = vmatprep.subr.mxu0 0.0
        %678 = vmatpush1.msra.mxu0 %v638
        %679 = vmatprep.subr.mxu0 0.0
        %680 = vmatpush1.msra.mxu0 %v637
        %681 = vmatprep.subr.mxu0 0.0
        %682 = vmatpush1.msra.mxu0 %v636
        %683 = vmatprep.subr.mxu0 0.0
        %684 = vmatpush2.msra.mxu0 0.0
        %685 = vmatprep.subr.mxu0 0.0
        %686 = vmatpush2.msra.mxu0 0.0
        %687 = vmatprep.subr.mxu0 0.0
        %688 = vmatpush2.msra.mxu0 0.0
        %689 = vmatprep.subr.mxu0 0.0
        %690 = vmatpush2.msra.mxu0 0.0
        %691 = vmatprep.subr.mxu0 0.0
        %692 = vmatpush2.msra.mxu0 0.0
        %693 = vmatprep.subr.mxu0 0.0
        %694 = vmatpush2.msra.mxu0 0.0
        %695 = vmatprep.subr.mxu0 0.0
        %696 = vmatpush2.msra.mxu0 0.0
        %697 = vmatprep.subr.mxu0 0.0
        %698 = vmatpush2.msra.mxu0 0.0
        %699 = vmatprep.subr.mxu0 0.0
        %700 = vmatpush2.msra.mxu0 0.0
        %701 = vmatprep.subr.mxu0 0.0
        %702 = vmatpush2.msra.mxu0 0.0
        %703 = vmatprep.subr.mxu0 0.0
        %704 = vmatpush2.msra.mxu0 0.0
        %705 = vmatprep.subr.mxu0 0.0
        %706 = vmatpush2.msra.mxu0 0.0
        %707 = vmatprep.subr.mxu0 0.0
        %708 = vmatpush2.msra.mxu0 0.0
        %709 = vmatprep.subr.mxu0 0.0
        %710 = vmatpush2.msra.mxu0 0.0
        %711 = vmatprep.subr.mxu0 0.0
        %712 = vmatpush2.msra.mxu0 0.0
        %713 = vmatprep.subr.mxu0 0.0
        %714 = vmatpush2.msra.mxu0 0.0
        %715 = vmatprep.mubr.f32.mxu0 0.0
        %716 = vmatmul.mubr.f32.gmra.mxu0 %v649
        %v717 = vpop.f32.mrf.mxu0
        %v718 = vadd.f32 %v645, %v717
        %v719 = vpop.f32.mrf.mxu0
        %720 = vdwg.mxu0
        %722 = vrot.lane.b32.xlu0 %v718, 120
        %v723 = vpop.permute.xlu0 %722
        %725 = vrot.lane.b32.xlu0 %v718, 112
        %v726 = vpop.permute.xlu0 %725
        %728 = vrot.lane.b32.xlu0 %v718, 104
        %v729 = vpop.permute.xlu0 %728
        %v731 = vcombine.low %v718, %v726
        %v732 = vcombine.high %v718, %v726
        %v734 = vunpack.c.l.s4 1983009808
        %v735 = vunpack.c.0.s8 %v734
        %v736 = vlaneseq
        %v737 = vshrl.u32 %v736, 7
        %v738 = vsub.s32 %v735, %v737
        %v739 = vrot.slane %v731, %v738
        %v741 = vunpack.c.l.s4 1983009808
        %v742 = vunpack.c.0.s8 %v741
        %v743 = vlaneseq
        %v744 = vshrl.u32 %v743, 7
        %v745 = vsub.s32 %v742, %v744
        %v746 = vrot.slane %v732, %v745
        %v747 = vcombine.low %v723, %v729
        %v748 = vcombine.high %v723, %v729
        %v750 = vunpack.c.l.s4 1983009808
        %v751 = vunpack.c.0.s8 %v750
        %v752 = vlaneseq
        %v753 = vshrl.u32 %v752, 7
        %v754 = vsub.s32 %v751, %v753
        %v755 = vrot.slane %v747, %v754
        %v757 = vunpack.c.l.s4 1983009808
        %v758 = vunpack.c.0.s8 %v757
        %v759 = vlaneseq
        %v760 = vshrl.u32 %v759, 7
        %v761 = vsub.s32 %v758, %v760
        %v762 = vrot.slane %v748, %v761
        %v763 = vcombine.low %v739, %v755
        %v764 = vcombine.high %v739, %v755
        %v766 = vunpack.c.l.s4 1934713408
        %v767 = vunpack.c.0.s8 %v766
        %v768 = vlaneseq
        %v769 = vshrl.u32 %v768, 7
        %v770 = vsub.s32 %v767, %v769
        %v771 = vrot.slane %v763, %v770
        %v773 = vunpack.c.l.s4 1934713408
        %v774 = vunpack.c.0.s8 %v773
        %v775 = vlaneseq
        %v776 = vshrl.u32 %v775, 7
        %v777 = vsub.s32 %v774, %v776
        %v778 = vrot.slane %v764, %v777
        %v779 = vcombine.low %v746, %v762
        %v780 = vcombine.high %v746, %v762
        %v782 = vunpack.c.l.s4 1934713408
        %v783 = vunpack.c.0.s8 %v782
        %v784 = vlaneseq
        %v785 = vshrl.u32 %v784, 7
        %v786 = vsub.s32 %v783, %v785
        %v787 = vrot.slane %v779, %v786
        %v789 = vunpack.c.l.s4 1934713408
        %v790 = vunpack.c.0.s8 %v789
        %v791 = vlaneseq
        %v792 = vshrl.u32 %v791, 7
        %v793 = vsub.s32 %v790, %v792
        %v794 = vrot.slane %v780, %v793
        %v795 = vcombine.high %v771, 0.0
        %v796 = vcombine.high %v778, 0.0
        %v797 = vcombine.high %v787, 0.0
        %v798 = vcombine.high %v794, 0.0
        %v799 = vcombine.low %v771, %v778
        %v801 = vunpack.c.l.s4 1983009808
        %v802 = vunpack.c.0.s8 %v801
        %v803 = vlaneseq
        %v804 = vshrl.u32 %v803, 7
        %v805 = vsub.s32 %v802, %v804
        %v806 = vrot.slane %v799, %v805
        %v807 = vcombine.low %v795, %v796
        %v809 = vunpack.c.l.s4 1983009808
        %v810 = vunpack.c.0.s8 %v809
        %v811 = vlaneseq
        %v812 = vshrl.u32 %v811, 7
        %v813 = vsub.s32 %v810, %v812
        %v814 = vrot.slane %v807, %v813
        %v815 = vcombine.low %v787, %v794
        %v817 = vunpack.c.l.s4 1983009808
        %v818 = vunpack.c.0.s8 %v817
        %v819 = vlaneseq
        %v820 = vshrl.u32 %v819, 7
        %v821 = vsub.s32 %v818, %v820
        %v822 = vrot.slane %v815, %v821
        %v823 = vcombine.low %v797, %v798
        %v825 = vunpack.c.l.s4 1983009808
        %v826 = vunpack.c.0.s8 %v825
        %v827 = vlaneseq
        %v828 = vshrl.u32 %v827, 7
        %v829 = vsub.s32 %v826, %v828
        %v830 = vrot.slane %v823, %v829
        %v831 = vcombine.low %v806, %v814
        %v832 = vcombine.high %v806, %v814
        %v834 = vunpack.c.l.s4 1934713408
        %v835 = vunpack.c.0.s8 %v834
        %v836 = vlaneseq
        %v837 = vshrl.u32 %v836, 7
        %v838 = vsub.s32 %v835, %v837
        %v839 = vrot.slane %v831, %v838
        %v841 = vunpack.c.l.s4 1934713408
        %v842 = vunpack.c.0.s8 %v841
        %v843 = vlaneseq
        %v844 = vshrl.u32 %v843, 7
        %v845 = vsub.s32 %v842, %v844
        %v846 = vrot.slane %v832, %v845
        %v847 = vcombine.low %v822, %v830
        %v848 = vcombine.high %v822, %v830
        %v850 = vunpack.c.l.s4 1934713408
        %v851 = vunpack.c.0.s8 %v850
        %v852 = vlaneseq
        %v853 = vshrl.u32 %v852, 7
        %v854 = vsub.s32 %v851, %v853
        %v855 = vrot.slane %v847, %v854
        %v857 = vunpack.c.l.s4 1934713408
        %v858 = vunpack.c.0.s8 %v857
        %v859 = vlaneseq
        %v860 = vshrl.u32 %v859, 7
        %v861 = vsub.s32 %v858, %v860
        %v862 = vrot.slane %v848, %v861
        %v863 = vcombine.low %v839, %v855
        %v864 = vcombine.high %v839, %v855
        %v865 = vcombine.low %v846, %v862
        %v866 = vcombine.high %v846, %v862
        %867 = vrot.lane.b32.xlu0 %v718, 96
        %v868 = vpop.permute.xlu0 %867
        %869 = vrot.lane.b32.xlu0 %v723, 96
        %v870 = vpop.permute.xlu0 %869
        %871 = vrot.lane.b32.xlu0 %v726, 96
        %v872 = vpop.permute.xlu0 %871
        %873 = vrot.lane.b32.xlu0 %v729, 96
        %v874 = vpop.permute.xlu0 %873
        %v879 = vcombine.low %v868, %v872
        %v880 = vcombine.high %v868, %v872
        %v882 = vunpack.c.l.s4 1983009808
        %v883 = vunpack.c.0.s8 %v882
        %v884 = vlaneseq
        %v885 = vshrl.u32 %v884, 7
        %v886 = vsub.s32 %v883, %v885
        %v887 = vrot.slane %v879, %v886
        %v889 = vunpack.c.l.s4 1983009808
        %v890 = vunpack.c.0.s8 %v889
        %v891 = vlaneseq
        %v892 = vshrl.u32 %v891, 7
        %v893 = vsub.s32 %v890, %v892
        %v894 = vrot.slane %v880, %v893
        %v895 = vcombine.low %v870, %v874
        %v896 = vcombine.high %v870, %v874
        %v898 = vunpack.c.l.s4 1983009808
        %v899 = vunpack.c.0.s8 %v898
        %v900 = vlaneseq
        %v901 = vshrl.u32 %v900, 7
        %v902 = vsub.s32 %v899, %v901
        %v903 = vrot.slane %v895, %v902
        %v905 = vunpack.c.l.s4 1983009808
        %v906 = vunpack.c.0.s8 %v905
        %v907 = vlaneseq
        %v908 = vshrl.u32 %v907, 7
        %v909 = vsub.s32 %v906, %v908
        %v910 = vrot.slane %v896, %v909
        %v911 = vcombine.low %v887, %v903
        %v912 = vcombine.high %v887, %v903
        %v914 = vunpack.c.l.s4 1934713408
        %v915 = vunpack.c.0.s8 %v914
        %v916 = vlaneseq
        %v917 = vshrl.u32 %v916, 7
        %v918 = vsub.s32 %v915, %v917
        %v919 = vrot.slane %v911, %v918
        %v921 = vunpack.c.l.s4 1934713408
        %v922 = vunpack.c.0.s8 %v921
        %v923 = vlaneseq
        %v924 = vshrl.u32 %v923, 7
        %v925 = vsub.s32 %v922, %v924
        %v926 = vrot.slane %v912, %v925
        %v927 = vcombine.low %v894, %v910
        %v928 = vcombine.high %v894, %v910
        %v930 = vunpack.c.l.s4 1934713408
        %v931 = vunpack.c.0.s8 %v930
        %v932 = vlaneseq
        %v933 = vshrl.u32 %v932, 7
        %v934 = vsub.s32 %v931, %v933
        %v935 = vrot.slane %v927, %v934
        %v937 = vunpack.c.l.s4 1934713408
        %v938 = vunpack.c.0.s8 %v937
        %v939 = vlaneseq
        %v940 = vshrl.u32 %v939, 7
        %v941 = vsub.s32 %v938, %v940
        %v942 = vrot.slane %v928, %v941
        %v943 = vcombine.high %v919, 0.0
        %v944 = vcombine.high %v926, 0.0
        %v945 = vcombine.high %v935, 0.0
        %v946 = vcombine.high %v942, 0.0
        %v947 = vcombine.low %v919, %v926
        %v949 = vunpack.c.l.s4 1983009808
        %v950 = vunpack.c.0.s8 %v949
        %v951 = vlaneseq
        %v952 = vshrl.u32 %v951, 7
        %v953 = vsub.s32 %v950, %v952
        %v954 = vrot.slane %v947, %v953
        %v955 = vcombine.low %v943, %v944
        %v957 = vunpack.c.l.s4 1983009808
        %v958 = vunpack.c.0.s8 %v957
        %v959 = vlaneseq
        %v960 = vshrl.u32 %v959, 7
        %v961 = vsub.s32 %v958, %v960
        %v962 = vrot.slane %v955, %v961
        %v963 = vcombine.low %v935, %v942
        %v965 = vunpack.c.l.s4 1983009808
        %v966 = vunpack.c.0.s8 %v965
        %v967 = vlaneseq
        %v968 = vshrl.u32 %v967, 7
        %v969 = vsub.s32 %v966, %v968
        %v970 = vrot.slane %v963, %v969
        %v971 = vcombine.low %v945, %v946
        %v973 = vunpack.c.l.s4 1983009808
        %v974 = vunpack.c.0.s8 %v973
        %v975 = vlaneseq
        %v976 = vshrl.u32 %v975, 7
        %v977 = vsub.s32 %v974, %v976
        %v978 = vrot.slane %v971, %v977
        %v979 = vcombine.low %v954, %v962
        %v980 = vcombine.high %v954, %v962
        %v982 = vunpack.c.l.s4 1934713408
        %v983 = vunpack.c.0.s8 %v982
        %v984 = vlaneseq
        %v985 = vshrl.u32 %v984, 7
        %v986 = vsub.s32 %v983, %v985
        %v987 = vrot.slane %v979, %v986
        %v989 = vunpack.c.l.s4 1934713408
        %v990 = vunpack.c.0.s8 %v989
        %v991 = vlaneseq
        %v992 = vshrl.u32 %v991, 7
        %v993 = vsub.s32 %v990, %v992
        %v994 = vrot.slane %v980, %v993
        %v995 = vcombine.low %v970, %v978
        %v996 = vcombine.high %v970, %v978
        %v998 = vunpack.c.l.s4 1934713408
        %v999 = vunpack.c.0.s8 %v998
        %v1000 = vlaneseq
        %v1001 = vshrl.u32 %v1000, 7
        %v1002 = vsub.s32 %v999, %v1001
        %v1003 = vrot.slane %v995, %v1002
        %v1005 = vunpack.c.l.s4 1934713408
        %v1006 = vunpack.c.0.s8 %v1005
        %v1007 = vlaneseq
        %v1008 = vshrl.u32 %v1007, 7
        %v1009 = vsub.s32 %v1006, %v1008
        %v1010 = vrot.slane %v996, %v1009
        %v1011 = vcombine.low %v987, %v1003
        %v1012 = vcombine.high %v987, %v1003
        %v1013 = vcombine.low %v994, %v1010
        %v1014 = vcombine.high %v994, %v1010
        %1015 = vrot.lane.b32.xlu0 %v718, 64
        %v1016 = vpop.permute.xlu0 %1015
        %1017 = vrot.lane.b32.xlu0 %v723, 64
        %v1018 = vpop.permute.xlu0 %1017
        %1019 = vrot.lane.b32.xlu0 %v726, 64
        %v1020 = vpop.permute.xlu0 %1019
        %1021 = vrot.lane.b32.xlu0 %v729, 64
        %v1022 = vpop.permute.xlu0 %1021
        %v1027 = vcombine.low %v1016, %v1020
        %v1028 = vcombine.high %v1016, %v1020
        %v1030 = vunpack.c.l.s4 1983009808
        %v1031 = vunpack.c.0.s8 %v1030
        %v1032 = vlaneseq
        %v1033 = vshrl.u32 %v1032, 7
        %v1034 = vsub.s32 %v1031, %v1033
        %v1035 = vrot.slane %v1027, %v1034
        %v1037 = vunpack.c.l.s4 1983009808
        %v1038 = vunpack.c.0.s8 %v1037
        %v1039 = vlaneseq
        %v1040 = vshrl.u32 %v1039, 7
        %v1041 = vsub.s32 %v1038, %v1040
        %v1042 = vrot.slane %v1028, %v1041
        %v1043 = vcombine.low %v1018, %v1022
        %v1044 = vcombine.high %v1018, %v1022
        %v1046 = vunpack.c.l.s4 1983009808
        %v1047 = vunpack.c.0.s8 %v1046
        %v1048 = vlaneseq
        %v1049 = vshrl.u32 %v1048, 7
        %v1050 = vsub.s32 %v1047, %v1049
        %v1051 = vrot.slane %v1043, %v1050
        %v1053 = vunpack.c.l.s4 1983009808
        %v1054 = vunpack.c.0.s8 %v1053
        %v1055 = vlaneseq
        %v1056 = vshrl.u32 %v1055, 7
        %v1057 = vsub.s32 %v1054, %v1056
        %v1058 = vrot.slane %v1044, %v1057
        %v1059 = vcombine.low %v1035, %v1051
        %v1060 = vcombine.high %v1035, %v1051
        %v1062 = vunpack.c.l.s4 1934713408
        %v1063 = vunpack.c.0.s8 %v1062
        %v1064 = vlaneseq
        %v1065 = vshrl.u32 %v1064, 7
        %v1066 = vsub.s32 %v1063, %v1065
        %v1067 = vrot.slane %v1059, %v1066
        %v1069 = vunpack.c.l.s4 1934713408
        %v1070 = vunpack.c.0.s8 %v1069
        %v1071 = vlaneseq
        %v1072 = vshrl.u32 %v1071, 7
        %v1073 = vsub.s32 %v1070, %v1072
        %v1074 = vrot.slane %v1060, %v1073
        %v1075 = vcombine.low %v1042, %v1058
        %v1076 = vcombine.high %v1042, %v1058
        %v1078 = vunpack.c.l.s4 1934713408
        %v1079 = vunpack.c.0.s8 %v1078
        %v1080 = vlaneseq
        %v1081 = vshrl.u32 %v1080, 7
        %v1082 = vsub.s32 %v1079, %v1081
        %v1083 = vrot.slane %v1075, %v1082
        %v1085 = vunpack.c.l.s4 1934713408
        %v1086 = vunpack.c.0.s8 %v1085
        %v1087 = vlaneseq
        %v1088 = vshrl.u32 %v1087, 7
        %v1089 = vsub.s32 %v1086, %v1088
        %v1090 = vrot.slane %v1076, %v1089
        %v1091 = vcombine.high %v1067, 0.0
        %v1092 = vcombine.high %v1074, 0.0
        %v1093 = vcombine.high %v1083, 0.0
        %v1094 = vcombine.high %v1090, 0.0
        %v1095 = vcombine.low %v1067, %v1074
        %v1097 = vunpack.c.l.s4 1983009808
        %v1098 = vunpack.c.0.s8 %v1097
        %v1099 = vlaneseq
        %v1100 = vshrl.u32 %v1099, 7
        %v1101 = vsub.s32 %v1098, %v1100
        %v1102 = vrot.slane %v1095, %v1101
        %v1103 = vcombine.low %v1091, %v1092
        %v1105 = vunpack.c.l.s4 1983009808
        %v1106 = vunpack.c.0.s8 %v1105
        %v1107 = vlaneseq
        %v1108 = vshrl.u32 %v1107, 7
        %v1109 = vsub.s32 %v1106, %v1108
        %v1110 = vrot.slane %v1103, %v1109
        %v1111 = vcombine.low %v1083, %v1090
        %v1113 = vunpack.c.l.s4 1983009808
        %v1114 = vunpack.c.0.s8 %v1113
        %v1115 = vlaneseq
        %v1116 = vshrl.u32 %v1115, 7
        %v1117 = vsub.s32 %v1114, %v1116
        %v1118 = vrot.slane %v1111, %v1117
        %v1119 = vcombine.low %v1093, %v1094
        %v1121 = vunpack.c.l.s4 1983009808
        %v1122 = vunpack.c.0.s8 %v1121
        %v1123 = vlaneseq
        %v1124 = vshrl.u32 %v1123, 7
        %v1125 = vsub.s32 %v1122, %v1124
        %v1126 = vrot.slane %v1119, %v1125
        %v1127 = vcombine.low %v1102, %v1110
        %v1128 = vcombine.high %v1102, %v1110
        %v1130 = vunpack.c.l.s4 1934713408
        %v1131 = vunpack.c.0.s8 %v1130
        %v1132 = vlaneseq
        %v1133 = vshrl.u32 %v1132, 7
        %v1134 = vsub.s32 %v1131, %v1133
        %v1135 = vrot.slane %v1127, %v1134
        %v1137 = vunpack.c.l.s4 1934713408
        %v1138 = vunpack.c.0.s8 %v1137
        %v1139 = vlaneseq
        %v1140 = vshrl.u32 %v1139, 7
        %v1141 = vsub.s32 %v1138, %v1140
        %v1142 = vrot.slane %v1128, %v1141
        %v1143 = vcombine.low %v1118, %v1126
        %v1144 = vcombine.high %v1118, %v1126
        %v1146 = vunpack.c.l.s4 1934713408
        %v1147 = vunpack.c.0.s8 %v1146
        %v1148 = vlaneseq
        %v1149 = vshrl.u32 %v1148, 7
        %v1150 = vsub.s32 %v1147, %v1149
        %v1151 = vrot.slane %v1143, %v1150
        %v1153 = vunpack.c.l.s4 1934713408
        %v1154 = vunpack.c.0.s8 %v1153
        %v1155 = vlaneseq
        %v1156 = vshrl.u32 %v1155, 7
        %v1157 = vsub.s32 %v1154, %v1156
        %v1158 = vrot.slane %v1144, %v1157
        %v1159 = vcombine.low %v1135, %v1151
        %v1160 = vcombine.high %v1135, %v1151
        %v1161 = vcombine.low %v1142, %v1158
        %v1162 = vcombine.high %v1142, %v1158
        %vm1163 = vcmask 64512
        %v1165 = vsel %vm1163, %v863, 0
        %v1168 = vsel %vm1163, %v1011, 0
        %1170 = vmatprep.subr.mxu0 0.0
        %1171 = vmatpush1.xpose.msra.mxu0 0.0
        %1172 = vmatprep.subr.mxu0 0.0
        %1173 = vmatpush1.xpose.msra.mxu0 0.0
        %1174 = vmatprep.subr.mxu0 0.0
        %1175 = vmatpush1.xpose.msra.mxu0 0.0
        %1176 = vmatprep.subr.mxu0 0.0
        %1177 = vmatpush1.xpose.msra.mxu0 0.0
        %1178 = vmatprep.subr.mxu0 0.0
        %1179 = vmatpush1.xpose.msra.mxu0 0.0
        %1180 = vmatprep.subr.mxu0 0.0
        %1181 = vmatpush1.xpose.msra.mxu0 0.0
        %1182 = vmatprep.subr.mxu0 0.0
        %1183 = vmatpush1.xpose.msra.mxu0 0.0
        %1184 = vmatprep.subr.mxu0 0.0
        %1185 = vmatpush1.xpose.msra.mxu0 0.0
        %1186 = vmatprep.subr.mxu0 0.0
        %1187 = vmatpush1.xpose.msra.mxu0 0.0
        %1188 = vmatprep.subr.mxu0 0.0
        %1189 = vmatpush1.xpose.msra.mxu0 0.0
        %1190 = vmatprep.subr.mxu0 0.0
        %1191 = vmatpush1.xpose.msra.mxu0 0.0
        %1192 = vmatprep.subr.mxu0 0.0
        %1193 = vmatpush1.xpose.msra.mxu0 0.0
        %1194 = vmatprep.subr.mxu0 0.0
        %1195 = vmatpush1.xpose.msra.mxu0 0.0
        %1196 = vmatprep.subr.mxu0 0.0
        %1197 = vmatpush1.xpose.msra.mxu0 0.0
        %1198 = vmatprep.subr.mxu0 0.0
        %1199 = vmatpush1.xpose.msra.mxu0 0.0
        %1200 = vmatprep.subr.mxu0 0.0
        %1201 = vmatpush1.xpose.msra.mxu0 %v1168
        %1202 = vmatprep.subr.mxu0 0.0
        %1203 = vmatpush2.xpose.msra.mxu0 0.0
        %1204 = vmatprep.subr.mxu0 0.0
        %1205 = vmatpush2.xpose.msra.mxu0 0.0
        %1206 = vmatprep.subr.mxu0 0.0
        %1207 = vmatpush2.xpose.msra.mxu0 0.0
        %1208 = vmatprep.subr.mxu0 0.0
        %1209 = vmatpush2.xpose.msra.mxu0 0.0
        %1210 = vmatprep.subr.mxu0 0.0
        %1211 = vmatpush2.xpose.msra.mxu0 0.0
        %1212 = vmatprep.subr.mxu0 0.0
        %1213 = vmatpush2.xpose.msra.mxu0 0.0
        %1214 = vmatprep.subr.mxu0 0.0
        %1215 = vmatpush2.xpose.msra.mxu0 0.0
        %1216 = vmatprep.subr.mxu0 0.0
        %1217 = vmatpush2.xpose.msra.mxu0 0.0
        %1218 = vmatprep.subr.mxu0 0.0
        %1219 = vmatpush2.xpose.msra.mxu0 0.0
        %1220 = vmatprep.subr.mxu0 0.0
        %1221 = vmatpush2.xpose.msra.mxu0 0.0
        %1222 = vmatprep.subr.mxu0 0.0
        %1223 = vmatpush2.xpose.msra.mxu0 0.0
        %1224 = vmatprep.subr.mxu0 0.0
        %1225 = vmatpush2.xpose.msra.mxu0 0.0
        %1226 = vmatprep.subr.mxu0 0.0
        %1227 = vmatpush2.xpose.msra.mxu0 0.0
        %1228 = vmatprep.subr.mxu0 0.0
        %1229 = vmatpush2.xpose.msra.mxu0 0.0
        %1230 = vmatprep.subr.mxu0 0.0
        %1231 = vmatpush2.xpose.msra.mxu0 0.0
        %1232 = vmatprep.subr.mxu0 0.0
        %1233 = vmatpush2.xpose.msra.mxu0 0.0
        %1234 = vmatprep.mubr.f32.mxu0 0.0
        %1235 = vmatmul.mubr.f32.gmra.mxu0 %v1165
        %v1236 = vpop.f32.mrf.mxu0
        %v1237 = vadd.f32 0.0, %v1236
        %v1238 = vpop.f32.mrf.mxu0
        %1239 = vdwg.mxu0
        %v1241 = vsel %vm1163, %v864, 0
        %v1244 = vsel %vm1163, %v1012, 0
        %1246 = vmatprep.subr.mxu0 0.0
        %1247 = vmatpush1.xpose.msra.mxu0 0.0
        %1248 = vmatprep.subr.mxu0 0.0
        %1249 = vmatpush1.xpose.msra.mxu0 0.0
        %1250 = vmatprep.subr.mxu0 0.0
        %1251 = vmatpush1.xpose.msra.mxu0 0.0
        %1252 = vmatprep.subr.mxu0 0.0
        %1253 = vmatpush1.xpose.msra.mxu0 0.0
        %1254 = vmatprep.subr.mxu0 0.0
        %1255 = vmatpush1.xpose.msra.mxu0 0.0
        %1256 = vmatprep.subr.mxu0 0.0
        %1257 = vmatpush1.xpose.msra.mxu0 0.0
        %1258 = vmatprep.subr.mxu0 0.0
        %1259 = vmatpush1.xpose.msra.mxu0 0.0
        %1260 = vmatprep.subr.mxu0 0.0
        %1261 = vmatpush1.xpose.msra.mxu0 0.0
        %1262 = vmatprep.subr.mxu0 0.0
        %1263 = vmatpush1.xpose.msra.mxu0 0.0
        %1264 = vmatprep.subr.mxu0 0.0
        %1265 = vmatpush1.xpose.msra.mxu0 0.0
        %1266 = vmatprep.subr.mxu0 0.0
        %1267 = vmatpush1.xpose.msra.mxu0 0.0
        %1268 = vmatprep.subr.mxu0 0.0
        %1269 = vmatpush1.xpose.msra.mxu0 0.0
        %1270 = vmatprep.subr.mxu0 0.0
        %1271 = vmatpush1.xpose.msra.mxu0 0.0
        %1272 = vmatprep.subr.mxu0 0.0
        %1273 = vmatpush1.xpose.msra.mxu0 0.0
        %1274 = vmatprep.subr.mxu0 0.0
        %1275 = vmatpush1.xpose.msra.mxu0 0.0
        %1276 = vmatprep.subr.mxu0 0.0
        %1277 = vmatpush1.xpose.msra.mxu0 %v1244
        %1278 = vmatprep.subr.mxu0 0.0
        %1279 = vmatpush2.xpose.msra.mxu0 0.0
        %1280 = vmatprep.subr.mxu0 0.0
        %1281 = vmatpush2.xpose.msra.mxu0 0.0
        %1282 = vmatprep.subr.mxu0 0.0
        %1283 = vmatpush2.xpose.msra.mxu0 0.0
        %1284 = vmatprep.subr.mxu0 0.0
        %1285 = vmatpush2.xpose.msra.mxu0 0.0
        %1286 = vmatprep.subr.mxu0 0.0
        %1287 = vmatpush2.xpose.msra.mxu0 0.0
        %1288 = vmatprep.subr.mxu0 0.0
        %1289 = vmatpush2.xpose.msra.mxu0 0.0
        %1290 = vmatprep.subr.mxu0 0.0
        %1291 = vmatpush2.xpose.msra.mxu0 0.0
        %1292 = vmatprep.subr.mxu0 0.0
        %1293 = vmatpush2.xpose.msra.mxu0 0.0
        %1294 = vmatprep.subr.mxu0 0.0
        %1295 = vmatpush2.xpose.msra.mxu0 0.0
        %1296 = vmatprep.subr.mxu0 0.0
        %1297 = vmatpush2.xpose.msra.mxu0 0.0
        %1298 = vmatprep.subr.mxu0 0.0
        %1299 = vmatpush2.xpose.msra.mxu0 0.0
        %1300 = vmatprep.subr.mxu0 0.0
        %1301 = vmatpush2.xpose.msra.mxu0 0.0
        %1302 = vmatprep.subr.mxu0 0.0
        %1303 = vmatpush2.xpose.msra.mxu0 0.0
        %1304 = vmatprep.subr.mxu0 0.0
        %1305 = vmatpush2.xpose.msra.mxu0 0.0
        %1306 = vmatprep.subr.mxu0 0.0
        %1307 = vmatpush2.xpose.msra.mxu0 0.0
        %1308 = vmatprep.subr.mxu0 0.0
        %1309 = vmatpush2.xpose.msra.mxu0 0.0
        %1310 = vmatprep.mubr.f32.mxu0 0.0
        %1311 = vmatmul.mubr.f32.gmra.mxu0 %v1241
        %v1312 = vpop.f32.mrf.mxu0
        %v1313 = vadd.f32 0.0, %v1312
        %v1314 = vpop.f32.mrf.mxu0
        %1315 = vdwg.mxu0
        %v1317 = vsel %vm1163, %v865, 0
        %v1320 = vsel %vm1163, %v1013, 0
        %1322 = vmatprep.subr.mxu0 0.0
        %1323 = vmatpush1.xpose.msra.mxu0 0.0
        %1324 = vmatprep.subr.mxu0 0.0
        %1325 = vmatpush1.xpose.msra.mxu0 0.0
        %1326 = vmatprep.subr.mxu0 0.0
        %1327 = vmatpush1.xpose.msra.mxu0 0.0
        %1328 = vmatprep.subr.mxu0 0.0
        %1329 = vmatpush1.xpose.msra.mxu0 0.0
        %1330 = vmatprep.subr.mxu0 0.0
        %1331 = vmatpush1.xpose.msra.mxu0 0.0
        %1332 = vmatprep.subr.mxu0 0.0
        %1333 = vmatpush1.xpose.msra.mxu0 0.0
        %1334 = vmatprep.subr.mxu0 0.0
        %1335 = vmatpush1.xpose.msra.mxu0 0.0
        %1336 = vmatprep.subr.mxu0 0.0
        %1337 = vmatpush1.xpose.msra.mxu0 0.0
        %1338 = vmatprep.subr.mxu0 0.0
        %1339 = vmatpush1.xpose.msra.mxu0 0.0
        %1340 = vmatprep.subr.mxu0 0.0
        %1341 = vmatpush1.xpose.msra.mxu0 0.0
        %1342 = vmatprep.subr.mxu0 0.0
        %1343 = vmatpush1.xpose.msra.mxu0 0.0
        %1344 = vmatprep.subr.mxu0 0.0
        %1345 = vmatpush1.xpose.msra.mxu0 0.0
        %1346 = vmatprep.subr.mxu0 0.0
        %1347 = vmatpush1.xpose.msra.mxu0 0.0
        %1348 = vmatprep.subr.mxu0 0.0
        %1349 = vmatpush1.xpose.msra.mxu0 0.0
        %1350 = vmatprep.subr.mxu0 0.0
        %1351 = vmatpush1.xpose.msra.mxu0 0.0
        %1352 = vmatprep.subr.mxu0 0.0
        %1353 = vmatpush1.xpose.msra.mxu0 %v1320
        %1354 = vmatprep.subr.mxu0 0.0
        %1355 = vmatpush2.xpose.msra.mxu0 0.0
        %1356 = vmatprep.subr.mxu0 0.0
        %1357 = vmatpush2.xpose.msra.mxu0 0.0
        %1358 = vmatprep.subr.mxu0 0.0
        %1359 = vmatpush2.xpose.msra.mxu0 0.0
        %1360 = vmatprep.subr.mxu0 0.0
        %1361 = vmatpush2.xpose.msra.mxu0 0.0
        %1362 = vmatprep.subr.mxu0 0.0
        %1363 = vmatpush2.xpose.msra.mxu0 0.0
        %1364 = vmatprep.subr.mxu0 0.0
        %1365 = vmatpush2.xpose.msra.mxu0 0.0
        %1366 = vmatprep.subr.mxu0 0.0
        %1367 = vmatpush2.xpose.msra.mxu0 0.0
        %1368 = vmatprep.subr.mxu0 0.0
        %1369 = vmatpush2.xpose.msra.mxu0 0.0
        %1370 = vmatprep.subr.mxu0 0.0
        %1371 = vmatpush2.xpose.msra.mxu0 0.0
        %1372 = vmatprep.subr.mxu0 0.0
        %1373 = vmatpush2.xpose.msra.mxu0 0.0
        %1374 = vmatprep.subr.mxu0 0.0
        %1375 = vmatpush2.xpose.msra.mxu0 0.0
        %1376 = vmatprep.subr.mxu0 0.0
        %1377 = vmatpush2.xpose.msra.mxu0 0.0
        %1378 = vmatprep.subr.mxu0 0.0
        %1379 = vmatpush2.xpose.msra.mxu0 0.0
        %1380 = vmatprep.subr.mxu0 0.0
        %1381 = vmatpush2.xpose.msra.mxu0 0.0
        %1382 = vmatprep.subr.mxu0 0.0
        %1383 = vmatpush2.xpose.msra.mxu0 0.0
        %1384 = vmatprep.subr.mxu0 0.0
        %1385 = vmatpush2.xpose.msra.mxu0 0.0
        %1386 = vmatprep.mubr.f32.mxu0 0.0
        %1387 = vmatmul.mubr.f32.gmra.mxu0 %v1317
        %v1388 = vpop.f32.mrf.mxu0
        %v1389 = vadd.f32 0.0, %v1388
        %v1390 = vpop.f32.mrf.mxu0
        %1391 = vdwg.mxu0
        %v1393 = vsel %vm1163, %v866, 0
        %v1396 = vsel %vm1163, %v1014, 0
        %1398 = vmatprep.subr.mxu0 0.0
        %1399 = vmatpush1.xpose.msra.mxu0 0.0
        %1400 = vmatprep.subr.mxu0 0.0
        %1401 = vmatpush1.xpose.msra.mxu0 0.0
        %1402 = vmatprep.subr.mxu0 0.0
        %1403 = vmatpush1.xpose.msra.mxu0 0.0
        %1404 = vmatprep.subr.mxu0 0.0
        %1405 = vmatpush1.xpose.msra.mxu0 0.0
        %1406 = vmatprep.subr.mxu0 0.0
        %1407 = vmatpush1.xpose.msra.mxu0 0.0
        %1408 = vmatprep.subr.mxu0 0.0
        %1409 = vmatpush1.xpose.msra.mxu0 0.0
        %1410 = vmatprep.subr.mxu0 0.0
        %1411 = vmatpush1.xpose.msra.mxu0 0.0
        %1412 = vmatprep.subr.mxu0 0.0
        %1413 = vmatpush1.xpose.msra.mxu0 0.0
        %1414 = vmatprep.subr.mxu0 0.0
        %1415 = vmatpush1.xpose.msra.mxu0 0.0
        %1416 = vmatprep.subr.mxu0 0.0
        %1417 = vmatpush1.xpose.msra.mxu0 0.0
        %1418 = vmatprep.subr.mxu0 0.0
        %1419 = vmatpush1.xpose.msra.mxu0 0.0
        %1420 = vmatprep.subr.mxu0 0.0
        %1421 = vmatpush1.xpose.msra.mxu0 0.0
        %1422 = vmatprep.subr.mxu0 0.0
        %1423 = vmatpush1.xpose.msra.mxu0 0.0
        %1424 = vmatprep.subr.mxu0 0.0
        %1425 = vmatpush1.xpose.msra.mxu0 0.0
        %1426 = vmatprep.subr.mxu0 0.0
        %1427 = vmatpush1.xpose.msra.mxu0 0.0
        %1428 = vmatprep.subr.mxu0 0.0
        %1429 = vmatpush1.xpose.msra.mxu0 %v1396
        %1430 = vmatprep.subr.mxu0 0.0
        %1431 = vmatpush2.xpose.msra.mxu0 0.0
        %1432 = vmatprep.subr.mxu0 0.0
        %1433 = vmatpush2.xpose.msra.mxu0 0.0
        %1434 = vmatprep.subr.mxu0 0.0
        %1435 = vmatpush2.xpose.msra.mxu0 0.0
        %1436 = vmatprep.subr.mxu0 0.0
        %1437 = vmatpush2.xpose.msra.mxu0 0.0
        %1438 = vmatprep.subr.mxu0 0.0
        %1439 = vmatpush2.xpose.msra.mxu0 0.0
        %1440 = vmatprep.subr.mxu0 0.0
        %1441 = vmatpush2.xpose.msra.mxu0 0.0
        %1442 = vmatprep.subr.mxu0 0.0
        %1443 = vmatpush2.xpose.msra.mxu0 0.0
        %1444 = vmatprep.subr.mxu0 0.0
        %1445 = vmatpush2.xpose.msra.mxu0 0.0
        %1446 = vmatprep.subr.mxu0 0.0
        %1447 = vmatpush2.xpose.msra.mxu0 0.0
        %1448 = vmatprep.subr.mxu0 0.0
        %1449 = vmatpush2.xpose.msra.mxu0 0.0
        %1450 = vmatprep.subr.mxu0 0.0
        %1451 = vmatpush2.xpose.msra.mxu0 0.0
        %1452 = vmatprep.subr.mxu0 0.0
        %1453 = vmatpush2.xpose.msra.mxu0 0.0
        %1454 = vmatprep.subr.mxu0 0.0
        %1455 = vmatpush2.xpose.msra.mxu0 0.0
        %1456 = vmatprep.subr.mxu0 0.0
        %1457 = vmatpush2.xpose.msra.mxu0 0.0
        %1458 = vmatprep.subr.mxu0 0.0
        %1459 = vmatpush2.xpose.msra.mxu0 0.0
        %1460 = vmatprep.subr.mxu0 0.0
        %1461 = vmatpush2.xpose.msra.mxu0 0.0
        %1462 = vmatprep.mubr.f32.mxu0 0.0
        %1463 = vmatmul.mubr.f32.gmra.mxu0 %v1393
        %v1464 = vpop.f32.mrf.mxu0
        %v1465 = vadd.f32 0.0, %v1464
        %v1466 = vpop.f32.mrf.mxu0
        %1467 = vdwg.mxu0
        %v1468 = vsel %vm1163, %v1237, -inf
        %1469 = vmax.xlane.f32.xlu0 %v1468
        %v1470 = vpop.xlane.xlu0 %1469
        %v1471 = vsel %vm1163, %v1313, -inf
        %1472 = vmax.xlane.f32.xlu0 %v1471
        %v1473 = vpop.xlane.xlu0 %1472
        %v1474 = vsel %vm1163, %v1389, -inf
        %1475 = vmax.xlane.f32.xlu0 %v1474
        %v1476 = vpop.xlane.xlu0 %1475
        %v1477 = vsel %vm1163, %v1465, -inf
        %1478 = vmax.xlane.f32.xlu0 %v1477
        %v1479 = vpop.xlane.xlu0 %1478
        %v1480 = vsub.f32 %v1237, %v1470
        %v1481 = vsub.f32 %v1313, %v1473
        %v1482 = vsub.f32 %v1389, %v1476
        %v1483 = vsub.f32 %v1465, %v1479
        %v1484 = vmul.f32 %v1480, 1.442695
        %v1485 = vpow.pop %v1484
        %v1486 = vmul.f32 %v1481, 1.442695
        %v1487 = vpow.pop %v1486
        %v1488 = vmul.f32 %v1482, 1.442695
        %v1489 = vpow.pop %v1488
        %v1490 = vmul.f32 %v1483, 1.442695
        %v1491 = vpow.pop %v1490
        %v1492 = vsel %vm1163, %v1485, 0.0
        %1493 = vadd.xlane.f32.xlu0 %v1492
        %v1494 = vpop.xlane.xlu0 %1493
        %v1495 = vsel %vm1163, %v1487, 0.0
        %1496 = vadd.xlane.f32.xlu0 %v1495
        %v1497 = vpop.xlane.xlu0 %1496
        %v1498 = vsel %vm1163, %v1489, 0.0
        %1499 = vadd.xlane.f32.xlu0 %v1498
        %v1500 = vpop.xlane.xlu0 %1499
        %v1501 = vsel %vm1163, %v1491, 0.0
        %1502 = vadd.xlane.f32.xlu0 %v1501
        %v1503 = vpop.xlane.xlu0 %1502
        %v1504 = vrcp.pop %v1494
        %v1505 = vrcp.pop %v1497
        %v1506 = vrcp.pop %v1500
        %v1507 = vrcp.pop %v1503
        %v1508 = vmul.f32 %v1485, %v1504
        %v1509 = vmul.f32 %v1487, %v1505
        %v1510 = vmul.f32 %v1489, %v1506
        %v1511 = vmul.f32 %v1491, %v1507
        %v1513 = vsel %vm1163, %v1508, 0
        %1515 = vmatprep.subr.mxu0 0.0
        %1516 = vmatpush1.msra.mxu0 0.0
        %1517 = vmatprep.subr.mxu0 0.0
        %1518 = vmatpush1.msra.mxu0 0.0
        %1519 = vmatprep.subr.mxu0 0.0
        %1520 = vmatpush1.msra.mxu0 0.0
        %1521 = vmatprep.subr.mxu0 0.0
        %1522 = vmatpush1.msra.mxu0 0.0
        %1523 = vmatprep.subr.mxu0 0.0
        %1524 = vmatpush1.msra.mxu0 0.0
        %1525 = vmatprep.subr.mxu0 0.0
        %1526 = vmatpush1.msra.mxu0 0.0
        %1527 = vmatprep.subr.mxu0 0.0
        %1528 = vmatpush1.msra.mxu0 0.0
        %1529 = vmatprep.subr.mxu0 0.0
        %1530 = vmatpush1.msra.mxu0 0.0
        %1531 = vmatprep.subr.mxu0 0.0
        %1532 = vmatpush1.msra.mxu0 0.0
        %1533 = vmatprep.subr.mxu0 0.0
        %1534 = vmatpush1.msra.mxu0 0.0
        %1535 = vmatprep.subr.mxu0 0.0
        %1536 = vmatpush1.msra.mxu0 0.0
        %1537 = vmatprep.subr.mxu0 0.0
        %1538 = vmatpush1.msra.mxu0 0.0
        %1539 = vmatprep.subr.mxu0 0.0
        %1540 = vmatpush1.msra.mxu0 0.0
        %1541 = vmatprep.subr.mxu0 0.0
        %1542 = vmatpush1.msra.mxu0 0.0
        %1543 = vmatprep.subr.mxu0 0.0
        %1544 = vmatpush1.msra.mxu0 0.0
        %1545 = vmatprep.subr.mxu0 0.0
        %1546 = vmatpush1.msra.mxu0 %v1159
        %1547 = vmatprep.subr.mxu0 0.0
        %1548 = vmatpush2.msra.mxu0 0.0
        %1549 = vmatprep.subr.mxu0 0.0
        %1550 = vmatpush2.msra.mxu0 0.0
        %1551 = vmatprep.subr.mxu0 0.0
        %1552 = vmatpush2.msra.mxu0 0.0
        %1553 = vmatprep.subr.mxu0 0.0
        %1554 = vmatpush2.msra.mxu0 0.0
        %1555 = vmatprep.subr.mxu0 0.0
        %1556 = vmatpush2.msra.mxu0 0.0
        %1557 = vmatprep.subr.mxu0 0.0
        %1558 = vmatpush2.msra.mxu0 0.0
        %1559 = vmatprep.subr.mxu0 0.0
        %1560 = vmatpush2.msra.mxu0 0.0
        %1561 = vmatprep.subr.mxu0 0.0
        %1562 = vmatpush2.msra.mxu0 0.0
        %1563 = vmatprep.subr.mxu0 0.0
        %1564 = vmatpush2.msra.mxu0 0.0
        %1565 = vmatprep.subr.mxu0 0.0
        %1566 = vmatpush2.msra.mxu0 0.0
        %1567 = vmatprep.subr.mxu0 0.0
        %1568 = vmatpush2.msra.mxu0 0.0
        %1569 = vmatprep.subr.mxu0 0.0
        %1570 = vmatpush2.msra.mxu0 0.0
        %1571 = vmatprep.subr.mxu0 0.0
        %1572 = vmatpush2.msra.mxu0 0.0
        %1573 = vmatprep.subr.mxu0 0.0
        %1574 = vmatpush2.msra.mxu0 0.0
        %1575 = vmatprep.subr.mxu0 0.0
        %1576 = vmatpush2.msra.mxu0 0.0
        %1577 = vmatprep.subr.mxu0 0.0
        %1578 = vmatpush2.msra.mxu0 0.0
        %1579 = vmatprep.mubr.f32.mxu0 0.0
        %1580 = vmatmul.mubr.f32.gmra.mxu0 %v1513
        %v1581 = vpop.f32.mrf.mxu0
        %v1582 = vadd.f32 0.0, %v1581
        %v1583 = vpop.f32.mrf.mxu0
        %1584 = vdwg.mxu0
        %v1586 = vsel %vm1163, %v1509, 0
        %1588 = vmatprep.subr.mxu0 0.0
        %1589 = vmatpush1.msra.mxu0 0.0
        %1590 = vmatprep.subr.mxu0 0.0
        %1591 = vmatpush1.msra.mxu0 0.0
        %1592 = vmatprep.subr.mxu0 0.0
        %1593 = vmatpush1.msra.mxu0 0.0
        %1594 = vmatprep.subr.mxu0 0.0
        %1595 = vmatpush1.msra.mxu0 0.0
        %1596 = vmatprep.subr.mxu0 0.0
        %1597 = vmatpush1.msra.mxu0 0.0
        %1598 = vmatprep.subr.mxu0 0.0
        %1599 = vmatpush1.msra.mxu0 0.0
        %1600 = vmatprep.subr.mxu0 0.0
        %1601 = vmatpush1.msra.mxu0 0.0
        %1602 = vmatprep.subr.mxu0 0.0
        %1603 = vmatpush1.msra.mxu0 0.0
        %1604 = vmatprep.subr.mxu0 0.0
        %1605 = vmatpush1.msra.mxu0 0.0
        %1606 = vmatprep.subr.mxu0 0.0
        %1607 = vmatpush1.msra.mxu0 0.0
        %1608 = vmatprep.subr.mxu0 0.0
        %1609 = vmatpush1.msra.mxu0 0.0
        %1610 = vmatprep.subr.mxu0 0.0
        %1611 = vmatpush1.msra.mxu0 0.0
        %1612 = vmatprep.subr.mxu0 0.0
        %1613 = vmatpush1.msra.mxu0 0.0
        %1614 = vmatprep.subr.mxu0 0.0
        %1615 = vmatpush1.msra.mxu0 0.0
        %1616 = vmatprep.subr.mxu0 0.0
        %1617 = vmatpush1.msra.mxu0 0.0
        %1618 = vmatprep.subr.mxu0 0.0
        %1619 = vmatpush1.msra.mxu0 %v1160
        %1620 = vmatprep.subr.mxu0 0.0
        %1621 = vmatpush2.msra.mxu0 0.0
        %1622 = vmatprep.subr.mxu0 0.0
        %1623 = vmatpush2.msra.mxu0 0.0
        %1624 = vmatprep.subr.mxu0 0.0
        %1625 = vmatpush2.msra.mxu0 0.0
        %1626 = vmatprep.subr.mxu0 0.0
        %1627 = vmatpush2.msra.mxu0 0.0
        %1628 = vmatprep.subr.mxu0 0.0
        %1629 = vmatpush2.msra.mxu0 0.0
        %1630 = vmatprep.subr.mxu0 0.0
        %1631 = vmatpush2.msra.mxu0 0.0
        %1632 = vmatprep.subr.mxu0 0.0
        %1633 = vmatpush2.msra.mxu0 0.0
        %1634 = vmatprep.subr.mxu0 0.0
        %1635 = vmatpush2.msra.mxu0 0.0
        %1636 = vmatprep.subr.mxu0 0.0
        %1637 = vmatpush2.msra.mxu0 0.0
        %1638 = vmatprep.subr.mxu0 0.0
        %1639 = vmatpush2.msra.mxu0 0.0
        %1640 = vmatprep.subr.mxu0 0.0
        %1641 = vmatpush2.msra.mxu0 0.0
        %1642 = vmatprep.subr.mxu0 0.0
        %1643 = vmatpush2.msra.mxu0 0.0
        %1644 = vmatprep.subr.mxu0 0.0
        %1645 = vmatpush2.msra.mxu0 0.0
        %1646 = vmatprep.subr.mxu0 0.0
        %1647 = vmatpush2.msra.mxu0 0.0
        %1648 = vmatprep.subr.mxu0 0.0
        %1649 = vmatpush2.msra.mxu0 0.0
        %1650 = vmatprep.subr.mxu0 0.0
        %1651 = vmatpush2.msra.mxu0 0.0
        %1652 = vmatprep.mubr.f32.mxu0 0.0
        %1653 = vmatmul.mubr.f32.gmra.mxu0 %v1586
        %v1654 = vpop.f32.mrf.mxu0
        %v1655 = vadd.f32 0.0, %v1654
        %v1656 = vpop.f32.mrf.mxu0
        %1657 = vdwg.mxu0
        %v1659 = vsel %vm1163, %v1510, 0
        %1661 = vmatprep.subr.mxu0 0.0
        %1662 = vmatpush1.msra.mxu0 0.0
        %1663 = vmatprep.subr.mxu0 0.0
        %1664 = vmatpush1.msra.mxu0 0.0
        %1665 = vmatprep.subr.mxu0 0.0
        %1666 = vmatpush1.msra.mxu0 0.0
        %1667 = vmatprep.subr.mxu0 0.0
        %1668 = vmatpush1.msra.mxu0 0.0
        %1669 = vmatprep.subr.mxu0 0.0
        %1670 = vmatpush1.msra.mxu0 0.0
        %1671 = vmatprep.subr.mxu0 0.0
        %1672 = vmatpush1.msra.mxu0 0.0
        %1673 = vmatprep.subr.mxu0 0.0
        %1674 = vmatpush1.msra.mxu0 0.0
        %1675 = vmatprep.subr.mxu0 0.0
        %1676 = vmatpush1.msra.mxu0 0.0
        %1677 = vmatprep.subr.mxu0 0.0
        %1678 = vmatpush1.msra.mxu0 0.0
        %1679 = vmatprep.subr.mxu0 0.0
        %1680 = vmatpush1.msra.mxu0 0.0
        %1681 = vmatprep.subr.mxu0 0.0
        %1682 = vmatpush1.msra.mxu0 0.0
        %1683 = vmatprep.subr.mxu0 0.0
        %1684 = vmatpush1.msra.mxu0 0.0
        %1685 = vmatprep.subr.mxu0 0.0
        %1686 = vmatpush1.msra.mxu0 0.0
        %1687 = vmatprep.subr.mxu0 0.0
        %1688 = vmatpush1.msra.mxu0 0.0
        %1689 = vmatprep.subr.mxu0 0.0
        %1690 = vmatpush1.msra.mxu0 0.0
        %1691 = vmatprep.subr.mxu0 0.0
        %1692 = vmatpush1.msra.mxu0 %v1161
        %1693 = vmatprep.subr.mxu0 0.0
        %1694 = vmatpush2.msra.mxu0 0.0
        %1695 = vmatprep.subr.mxu0 0.0
        %1696 = vmatpush2.msra.mxu0 0.0
        %1697 = vmatprep.subr.mxu0 0.0
        %1698 = vmatpush2.msra.mxu0 0.0
        %1699 = vmatprep.subr.mxu0 0.0
        %1700 = vmatpush2.msra.mxu0 0.0
        %1701 = vmatprep.subr.mxu0 0.0
        %1702 = vmatpush2.msra.mxu0 0.0
        %1703 = vmatprep.subr.mxu0 0.0
        %1704 = vmatpush2.msra.mxu0 0.0
        %1705 = vmatprep.subr.mxu0 0.0
        %1706 = vmatpush2.msra.mxu0 0.0
        %1707 = vmatprep.subr.mxu0 0.0
        %1708 = vmatpush2.msra.mxu0 0.0
        %1709 = vmatprep.subr.mxu0 0.0
        %1710 = vmatpush2.msra.mxu0 0.0
        %1711 = vmatprep.subr.mxu0 0.0
        %1712 = vmatpush2.msra.mxu0 0.0
        %1713 = vmatprep.subr.mxu0 0.0
        %1714 = vmatpush2.msra.mxu0 0.0
        %1715 = vmatprep.subr.mxu0 0.0
        %1716 = vmatpush2.msra.mxu0 0.0
        %1717 = vmatprep.subr.mxu0 0.0
        %1718 = vmatpush2.msra.mxu0 0.0
        %1719 = vmatprep.subr.mxu0 0.0
        %1720 = vmatpush2.msra.mxu0 0.0
        %1721 = vmatprep.subr.mxu0 0.0
        %1722 = vmatpush2.msra.mxu0 0.0
        %1723 = vmatprep.subr.mxu0 0.0
        %1724 = vmatpush2.msra.mxu0 0.0
        %1725 = vmatprep.mubr.f32.mxu0 0.0
        %1726 = vmatmul.mubr.f32.gmra.mxu0 %v1659
        %v1727 = vpop.f32.mrf.mxu0
        %v1728 = vadd.f32 0.0, %v1727
        %v1729 = vpop.f32.mrf.mxu0
        %1730 = vdwg.mxu0
        %v1732 = vsel %vm1163, %v1511, 0
        %1734 = vmatprep.subr.mxu0 0.0
        %1735 = vmatpush1.msra.mxu0 0.0
        %1736 = vmatprep.subr.mxu0 0.0
        %1737 = vmatpush1.msra.mxu0 0.0
        %1738 = vmatprep.subr.mxu0 0.0
        %1739 = vmatpush1.msra.mxu0 0.0
        %1740 = vmatprep.subr.mxu0 0.0
        %1741 = vmatpush1.msra.mxu0 0.0
        %1742 = vmatprep.subr.mxu0 0.0
        %1743 = vmatpush1.msra.mxu0 0.0
        %1744 = vmatprep.subr.mxu0 0.0
        %1745 = vmatpush1.msra.mxu0 0.0
        %1746 = vmatprep.subr.mxu0 0.0
        %1747 = vmatpush1.msra.mxu0 0.0
        %1748 = vmatprep.subr.mxu0 0.0
        %1749 = vmatpush1.msra.mxu0 0.0
        %1750 = vmatprep.subr.mxu0 0.0
        %1751 = vmatpush1.msra.mxu0 0.0
        %1752 = vmatprep.subr.mxu0 0.0
        %1753 = vmatpush1.msra.mxu0 0.0
        %1754 = vmatprep.subr.mxu0 0.0
        %1755 = vmatpush1.msra.mxu0 0.0
        %1756 = vmatprep.subr.mxu0 0.0
        %1757 = vmatpush1.msra.mxu0 0.0
        %1758 = vmatprep.subr.mxu0 0.0
        %1759 = vmatpush1.msra.mxu0 0.0
        %1760 = vmatprep.subr.mxu0 0.0
        %1761 = vmatpush1.msra.mxu0 0.0
        %1762 = vmatprep.subr.mxu0 0.0
        %1763 = vmatpush1.msra.mxu0 0.0
        %1764 = vmatprep.subr.mxu0 0.0
        %1765 = vmatpush1.msra.mxu0 %v1162
        %1766 = vmatprep.subr.mxu0 0.0
        %1767 = vmatpush2.msra.mxu0 0.0
        %1768 = vmatprep.subr.mxu0 0.0
        %1769 = vmatpush2.msra.mxu0 0.0
        %1770 = vmatprep.subr.mxu0 0.0
        %1771 = vmatpush2.msra.mxu0 0.0
        %1772 = vmatprep.subr.mxu0 0.0
        %1773 = vmatpush2.msra.mxu0 0.0
        %1774 = vmatprep.subr.mxu0 0.0
        %1775 = vmatpush2.msra.mxu0 0.0
        %1776 = vmatprep.subr.mxu0 0.0
        %1777 = vmatpush2.msra.mxu0 0.0
        %1778 = vmatprep.subr.mxu0 0.0
        %1779 = vmatpush2.msra.mxu0 0.0
        %1780 = vmatprep.subr.mxu0 0.0
        %1781 = vmatpush2.msra.mxu0 0.0
        %1782 = vmatprep.subr.mxu0 0.0
        %1783 = vmatpush2.msra.mxu0 0.0
        %1784 = vmatprep.subr.mxu0 0.0
        %1785 = vmatpush2.msra.mxu0 0.0
        %1786 = vmatprep.subr.mxu0 0.0
        %1787 = vmatpush2.msra.mxu0 0.0
        %1788 = vmatprep.subr.mxu0 0.0
        %1789 = vmatpush2.msra.mxu0 0.0
        %1790 = vmatprep.subr.mxu0 0.0
        %1791 = vmatpush2.msra.mxu0 0.0
        %1792 = vmatprep.subr.mxu0 0.0
        %1793 = vmatpush2.msra.mxu0 0.0
        %1794 = vmatprep.subr.mxu0 0.0
        %1795 = vmatpush2.msra.mxu0 0.0
        %1796 = vmatprep.subr.mxu0 0.0
        %1797 = vmatpush2.msra.mxu0 0.0
        %1798 = vmatprep.mubr.f32.mxu0 0.0
        %1799 = vmatmul.mubr.f32.gmra.mxu0 %v1732
        %v1800 = vpop.f32.mrf.mxu0
        %v1801 = vadd.f32 0.0, %v1800
        %v1802 = vpop.f32.mrf.mxu0
        %1803 = vdwg.mxu0
        %v1804 = vcombine.low %v1582, %v1728
        %v1805 = vcombine.high %v1582, %v1728
        %v1807 = vunpack.c.l.s4 1983009808
        %v1808 = vunpack.c.0.s8 %v1807
        %v1809 = vlaneseq
        %v1810 = vshrl.u32 %v1809, 7
        %v1811 = vsub.s32 %v1808, %v1810
        %v1812 = vrot.slane %v1804, %v1811
        %v1814 = vunpack.c.l.s4 1983009808
        %v1815 = vunpack.c.0.s8 %v1814
        %v1816 = vlaneseq
        %v1817 = vshrl.u32 %v1816, 7
        %v1818 = vsub.s32 %v1815, %v1817
        %v1819 = vrot.slane %v1805, %v1818
        %v1820 = vcombine.low %v1655, %v1801
        %v1821 = vcombine.high %v1655, %v1801
        %v1823 = vunpack.c.l.s4 1983009808
        %v1824 = vunpack.c.0.s8 %v1823
        %v1825 = vlaneseq
        %v1826 = vshrl.u32 %v1825, 7
        %v1827 = vsub.s32 %v1824, %v1826
        %v1828 = vrot.slane %v1820, %v1827
        %v1830 = vunpack.c.l.s4 1983009808
        %v1831 = vunpack.c.0.s8 %v1830
        %v1832 = vlaneseq
        %v1833 = vshrl.u32 %v1832, 7
        %v1834 = vsub.s32 %v1831, %v1833
        %v1835 = vrot.slane %v1821, %v1834
        %v1836 = vcombine.low %v1812, %v1828
        %v1837 = vcombine.high %v1812, %v1828
        %v1839 = vunpack.c.l.s4 1934713408
        %v1840 = vunpack.c.0.s8 %v1839
        %v1841 = vlaneseq
        %v1842 = vshrl.u32 %v1841, 7
        %v1843 = vsub.s32 %v1840, %v1842
        %v1844 = vrot.slane %v1836, %v1843
        %v1846 = vunpack.c.l.s4 1934713408
        %v1847 = vunpack.c.0.s8 %v1846
        %v1848 = vlaneseq
        %v1849 = vshrl.u32 %v1848, 7
        %v1850 = vsub.s32 %v1847, %v1849
        %v1851 = vrot.slane %v1837, %v1850
        %v1852 = vcombine.low %v1819, %v1835
        %v1853 = vcombine.high %v1819, %v1835
        %v1855 = vunpack.c.l.s4 1934713408
        %v1856 = vunpack.c.0.s8 %v1855
        %v1857 = vlaneseq
        %v1858 = vshrl.u32 %v1857, 7
        %v1859 = vsub.s32 %v1856, %v1858
        %v1860 = vrot.slane %v1852, %v1859
        %v1862 = vunpack.c.l.s4 1934713408
        %v1863 = vunpack.c.0.s8 %v1862
        %v1864 = vlaneseq
        %v1865 = vshrl.u32 %v1864, 7
        %v1866 = vsub.s32 %v1863, %v1865
        %v1867 = vrot.slane %v1853, %v1866
        %v1868 = vcombine.high %v1844, 0.0
        %v1869 = vcombine.high %v1851, 0.0
        %v1870 = vcombine.high %v1860, 0.0
        %v1871 = vcombine.high %v1867, 0.0
        %v1872 = vcombine.low %v1844, %v1851
        %v1874 = vunpack.c.l.s4 1983009808
        %v1875 = vunpack.c.0.s8 %v1874
        %v1876 = vlaneseq
        %v1877 = vshrl.u32 %v1876, 7
        %v1878 = vsub.s32 %v1875, %v1877
        %v1879 = vrot.slane %v1872, %v1878
        %v1880 = vcombine.low %v1868, %v1869
        %v1882 = vunpack.c.l.s4 1983009808
        %v1883 = vunpack.c.0.s8 %v1882
        %v1884 = vlaneseq
        %v1885 = vshrl.u32 %v1884, 7
        %v1886 = vsub.s32 %v1883, %v1885
        %v1887 = vrot.slane %v1880, %v1886
        %v1888 = vcombine.low %v1860, %v1867
        %v1890 = vunpack.c.l.s4 1983009808
        %v1891 = vunpack.c.0.s8 %v1890
        %v1892 = vlaneseq
        %v1893 = vshrl.u32 %v1892, 7
        %v1894 = vsub.s32 %v1891, %v1893
        %v1895 = vrot.slane %v1888, %v1894
        %v1896 = vcombine.low %v1870, %v1871
        %v1898 = vunpack.c.l.s4 1983009808
        %v1899 = vunpack.c.0.s8 %v1898
        %v1900 = vlaneseq
        %v1901 = vshrl.u32 %v1900, 7
        %v1902 = vsub.s32 %v1899, %v1901
        %v1903 = vrot.slane %v1896, %v1902
        %v1904 = vcombine.low %v1879, %v1887
        %v1905 = vcombine.high %v1879, %v1887
        %v1907 = vunpack.c.l.s4 1934713408
        %v1908 = vunpack.c.0.s8 %v1907
        %v1909 = vlaneseq
        %v1910 = vshrl.u32 %v1909, 7
        %v1911 = vsub.s32 %v1908, %v1910
        %v1912 = vrot.slane %v1904, %v1911
        %v1914 = vunpack.c.l.s4 1934713408
        %v1915 = vunpack.c.0.s8 %v1914
        %v1916 = vlaneseq
        %v1917 = vshrl.u32 %v1916, 7
        %v1918 = vsub.s32 %v1915, %v1917
        %v1919 = vrot.slane %v1905, %v1918
        %v1920 = vcombine.low %v1895, %v1903
        %v1921 = vcombine.high %v1895, %v1903
        %v1923 = vunpack.c.l.s4 1934713408
        %v1924 = vunpack.c.0.s8 %v1923
        %v1925 = vlaneseq
        %v1926 = vshrl.u32 %v1925, 7
        %v1927 = vsub.s32 %v1924, %v1926
        %v1928 = vrot.slane %v1920, %v1927
        %v1930 = vunpack.c.l.s4 1934713408
        %v1931 = vunpack.c.0.s8 %v1930
        %v1932 = vlaneseq
        %v1933 = vshrl.u32 %v1932, 7
        %v1934 = vsub.s32 %v1931, %v1933
        %v1935 = vrot.slane %v1921, %v1934
        %v1936 = vcombine.low %v1912, %v1928
        %v1937 = vcombine.high %v1912, %v1928
        %v1938 = vcombine.low %v1919, %v1935
        %v1939 = vcombine.high %v1919, %v1935
        %1941 = vrot.lane.b32.xlu0 %v1937, 8
        %v1942 = vpop.permute.xlu0 %1941
        %1945 = vrot.lane.b32.xlu0 %v1938, 16
        %v1946 = vpop.permute.xlu0 %1945
        %1949 = vrot.lane.b32.xlu0 %v1939, 24
        %v1950 = vpop.permute.xlu0 %1949
        %v1952 = vsel %vm1163, %v1936, %v1942
        %vm1953 = vcmask 130048
        %v1954 = vsel %vm1953, %v1952, %v1946
        %vm1955 = vcmask 195584
        %v1956 = vsel %vm1955, %v1954, %v1950
        %v1957 = vld [vmem:[%s5] sm:$0xff]
        %v1958 = vld [vmem:[%s5 + $0x8] sm:$0xff]
        %v1959 = vld [vmem:[%s5 + $0x10] sm:$0xff]
        %v1960 = vld [vmem:[%s5 + $0x18] sm:$0xff]
        %v1961 = vld [vmem:[%s6] sm:$0x1]
        %v1963 = vlaneseq
        %v1964 = vshrl.u32 %v1963, 7
        %v1965 = vsub.s32 0, %v1964
        %v1966 = vrot.slane %v1961, %v1965
        %v1969 = vsel %vm647, %v1956, 0
        %1971 = vmatprep.subr.mxu0 0.0
        %1972 = vmatpush1.msra.mxu0 0.0
        %1973 = vmatprep.subr.mxu0 0.0
        %1974 = vmatpush1.msra.mxu0 0.0
        %1975 = vmatprep.subr.mxu0 0.0
        %1976 = vmatpush1.msra.mxu0 0.0
        %1977 = vmatprep.subr.mxu0 0.0
        %1978 = vmatpush1.msra.mxu0 0.0
        %1979 = vmatprep.subr.mxu0 0.0
        %1980 = vmatpush1.msra.mxu0 0.0
        %1981 = vmatprep.subr.mxu0 0.0
        %1982 = vmatpush1.msra.mxu0 0.0
        %1983 = vmatprep.subr.mxu0 0.0
        %1984 = vmatpush1.msra.mxu0 0.0
        %1985 = vmatprep.subr.mxu0 0.0
        %1986 = vmatpush1.msra.mxu0 0.0
        %1987 = vmatprep.subr.mxu0 0.0
        %1988 = vmatpush1.msra.mxu0 0.0
        %1989 = vmatprep.subr.mxu0 0.0
        %1990 = vmatpush1.msra.mxu0 0.0
        %1991 = vmatprep.subr.mxu0 0.0
        %1992 = vmatpush1.msra.mxu0 0.0
        %1993 = vmatprep.subr.mxu0 0.0
        %1994 = vmatpush1.msra.mxu0 0.0
        %1995 = vmatprep.subr.mxu0 0.0
        %1996 = vmatpush1.msra.mxu0 %v1960
        %1997 = vmatprep.subr.mxu0 0.0
        %1998 = vmatpush1.msra.mxu0 %v1959
        %1999 = vmatprep.subr.mxu0 0.0
        %2000 = vmatpush1.msra.mxu0 %v1958
        %2001 = vmatprep.subr.mxu0 0.0
        %2002 = vmatpush1.msra.mxu0 %v1957
        %2003 = vmatprep.subr.mxu0 0.0
        %2004 = vmatpush2.msra.mxu0 0.0
        %2005 = vmatprep.subr.mxu0 0.0
        %2006 = vmatpush2.msra.mxu0 0.0
        %2007 = vmatprep.subr.mxu0 0.0
        %2008 = vmatpush2.msra.mxu0 0.0
        %2009 = vmatprep.subr.mxu0 0.0
        %2010 = vmatpush2.msra.mxu0 0.0
        %2011 = vmatprep.subr.mxu0 0.0
        %2012 = vmatpush2.msra.mxu0 0.0
        %2013 = vmatprep.subr.mxu0 0.0
        %2014 = vmatpush2.msra.mxu0 0.0
        %2015 = vmatprep.subr.mxu0 0.0
        %2016 = vmatpush2.msra.mxu0 0.0
        %2017 = vmatprep.subr.mxu0 0.0
        %2018 = vmatpush2.msra.mxu0 0.0
        %2019 = vmatprep.subr.mxu0 0.0
        %2020 = vmatpush2.msra.mxu0 0.0
        %2021 = vmatprep.subr.mxu0 0.0
        %2022 = vmatpush2.msra.mxu0 0.0
        %2023 = vmatprep.subr.mxu0 0.0
        %2024 = vmatpush2.msra.mxu0 0.0
        %2025 = vmatprep.subr.mxu0 0.0
        %2026 = vmatpush2.msra.mxu0 0.0
        %2027 = vmatprep.subr.mxu0 0.0
        %2028 = vmatpush2.msra.mxu0 0.0
        %2029 = vmatprep.subr.mxu0 0.0
        %2030 = vmatpush2.msra.mxu0 0.0
        %2031 = vmatprep.subr.mxu0 0.0
        %2032 = vmatpush2.msra.mxu0 0.0
        %2033 = vmatprep.subr.mxu0 0.0
        %2034 = vmatpush2.msra.mxu0 0.0
        %2035 = vmatprep.mubr.f32.mxu0 0.0
        %2036 = vmatmul.mubr.f32.gmra.mxu0 %v1969
        %v2037 = vpop.f32.mrf.mxu0
        %v2038 = vadd.f32 %v1966, %v2037
        %v2039 = vpop.f32.mrf.mxu0
        %2040 = vdwg.mxu0
        %v2041 = vadd.f32 %v633, %v2038
        %v2042 = vld [vmem:[%s7] sm:$0x1]
        %v2043 = vld [vmem:[%s8] sm:$0x1]
        %v2044 = vsel %vm647, %v2041, 0.0
        %2045 = vadd.xlane.f32.xlu0 %v2044
        %v2046 = vpop.xlane.xlu0 %2045
        %v2047 = vrcp.pop 32.0
        %v2048 = vmul.f32 %v2046, %v2047
        %v2049 = vsub.f32 %v2041, %v2048
        %v2050 = vmul.f32 %v2049, %v2049
        %v2051 = vsel %vm647, %v2050, 0.0
        %2052 = vadd.xlane.f32.xlu0 %v2051
        %v2053 = vpop.xlane.xlu0 %2052
        %v2054 = vmul.f32 %v2053, %v2047
        %v2055 = vadd.f32 %v2054, 1e-05
        %v2056 = vrsqrt.pop %v2055
        %v2057 = vmul.f32 %v2049, %v2056
        %v2059 = vlaneseq
        %v2060 = vshrl.u32 %v2059, 7
        %v2061 = vsub.s32 0, %v2060
        %v2062 = vrot.slane %v2042, %v2061
        %v2064 = vmul.f32 %v2057, %v2062
        %v2066 = vlaneseq
        %v2067 = vshrl.u32 %v2066, 7
        %v2068 = vsub.s32 0, %v2067
        %v2069 = vrot.slane %v2043, %v2068
        %v2071 = vadd.f32 %v2064, %v2069
        %v2072 = vld [vmem:[%s9] sm:$0xff]
        %v2073 = vld [vmem:[%s9 + $0x8] sm:$0xff]
        %v2074 = vld [vmem:[%s9 + $0x10] sm:$0xff]
        %v2075 = vld [vmem:[%s9 + $0x18] sm:$0xff]
        %v2076 = vld [vmem:[%s10] sm:$0x1]
        %v2078 = vlaneseq
        %v2079 = vshrl.u32 %v2078, 7
        %v2080 = vsub.s32 0, %v2079
        %v2081 = vrot.slane %v2076, %v2080
        %v2084 = vsel %vm647, %v2071, 0
        %2086 = vmatprep.subr.mxu0 0.0
        %2087 = vmatpush1.msra.mxu0 0.0
        %2088 = vmatprep.subr.mxu0 0.0
        %2089 = vmatpush1.msra.mxu0 0.0
        %2090 = vmatprep.subr.mxu0 0.0
        %2091 = vmatpush1.msra.mxu0 0.0
        %2092 = vmatprep.subr.mxu0 0.0
        %2093 = vmatpush1.msra.mxu0 0.0
        %2094 = vmatprep.subr.mxu0 0.0
        %2095 = vmatpush1.msra.mxu0 0.0
        %2096 = vmatprep.subr.mxu0 0.0
        %2097 = vmatpush1.msra.mxu0 0.0
        %2098 = vmatprep.subr.mxu0 0.0
        %2099 = vmatpush1.msra.mxu0 0.0
        %2100 = vmatprep.subr.mxu0 0.0
        %2101 = vmatpush1.msra.mxu0 0.0
        %2102 = vmatprep.subr.mxu0 0.0
        %2103 = vmatpush1.msra.mxu0 0.0
        %2104 = vmatprep.subr.mxu0 0.0
        %2105 = vmatpush1.msra.mxu0 0.0
        %2106 = vmatprep.subr.mxu0 0.0
        %2107 = vmatpush1.msra.mxu0 0.0
        %2108 = vmatprep.subr.mxu0 0.0
        %2109 = vmatpush1.msra.mxu0 0.0
        %2110 = vmatprep.subr.mxu0 0.0
        %2111 = vmatpush1.msra.mxu0 %v2075
        %2112 = vmatprep.subr.mxu0 0.0
        %2113 = vmatpush1.msra.mxu0 %v2074
        %2114 = vmatprep.subr.mxu0 0.0
        %2115 = vmatpush1.msra.mxu0 %v2073
        %2116 = vmatprep.subr.mxu0 0.0
        %2117 = vmatpush1.msra.mxu0 %v2072
        %2118 = vmatprep.subr.mxu0 0.0
        %2119 = vmatpush2.msra.mxu0 0.0
        %2120 = vmatprep.subr.mxu0 0.0
        %2121 = vmatpush2.msra.mxu0 0.0
        %2122 = vmatprep.subr.mxu0 0.0
        %2123 = vmatpush2.msra.mxu0 0.0
        %2124 = vmatprep.subr.mxu0 0.0
        %2125 = vmatpush2.msra.mxu0 0.0
        %2126 = vmatprep.subr.mxu0 0.0
        %2127 = vmatpush2.msra.mxu0 0.0
        %2128 = vmatprep.subr.mxu0 0.0
        %2129 = vmatpush2.msra.mxu0 0.0
        %2130 = vmatprep.subr.mxu0 0.0
        %2131 = vmatpush2.msra.mxu0 0.0
        %2132 = vmatprep.subr.mxu0 0.0
        %2133 = vmatpush2.msra.mxu0 0.0
        %2134 = vmatprep.subr.mxu0 0.0
        %2135 = vmatpush2.msra.mxu0 0.0
        %2136 = vmatprep.subr.mxu0 0.0
        %2137 = vmatpush2.msra.mxu0 0.0
        %2138 = vmatprep.subr.mxu0 0.0
        %2139 = vmatpush2.msra.mxu0 0.0
        %2140 = vmatprep.subr.mxu0 0.0
        %2141 = vmatpush2.msra.mxu0 0.0
        %2142 = vmatprep.subr.mxu0 0.0
        %2143 = vmatpush2.msra.mxu0 0.0
        %2144 = vmatprep.subr.mxu0 0.0
        %2145 = vmatpush2.msra.mxu0 0.0
        %2146 = vmatprep.subr.mxu0 0.0
        %2147 = vmatpush2.msra.mxu0 0.0
        %2148 = vmatprep.subr.mxu0 0.0
        %2149 = vmatpush2.msra.mxu0 0.0
        %2150 = vmatprep.mubr.f32.mxu0 0.0
        %2151 = vmatmul.mubr.f32.gmra.mxu0 %v2084
        %v2152 = vpop.f32.mrf.mxu0
        %v2153 = vadd.f32 %v2081, %v2152
        %v2154 = vpop.f32.mrf.mxu0
        %2155 = vdwg.mxu0
        %v2156 = vmax.f32 %v2153, 0.0
        %v2157 = vld [vmem:[%s11] sm:$0xff]
        %v2158 = vld [vmem:[%s11 + $0x8] sm:$0xff]
        %v2159 = vld [vmem:[%s11 + $0x10] sm:$0xff]
        %v2160 = vld [vmem:[%s11 + $0x18] sm:$0xff]
        %v2161 = vld [vmem:[%s11 + $0x20] sm:$0xff]
        %v2162 = vld [vmem:[%s11 + $0x28] sm:$0xff]
        %v2163 = vld [vmem:[%s11 + $0x30] sm:$0xff]
        %v2164 = vld [vmem:[%s11 + $0x38] sm:$0xff]
        %v2165 = vld [vmem:[%s12] sm:$0x1]
        %v2167 = vlaneseq
        %v2168 = vshrl.u32 %v2167, 7
        %v2169 = vsub.s32 0, %v2168
        %v2170 = vrot.slane %v2165, %v2169
        %v2173 = vsel %vm562, %v2156, 0
        %2175 = vmatprep.subr.mxu0 0.0
        %2176 = vmatpush1.msra.mxu0 0.0
        %2177 = vmatprep.subr.mxu0 0.0
        %2178 = vmatpush1.msra.mxu0 0.0
        %2179 = vmatprep.subr.mxu0 0.0
        %2180 = vmatpush1.msra.mxu0 0.0
        %2181 = vmatprep.subr.mxu0 0.0
        %2182 = vmatpush1.msra.mxu0 0.0
        %2183 = vmatprep.subr.mxu0 0.0
        %2184 = vmatpush1.msra.mxu0 0.0
        %2185 = vmatprep.subr.mxu0 0.0
        %2186 = vmatpush1.msra.mxu0 0.0
        %2187 = vmatprep.subr.mxu0 0.0
        %2188 = vmatpush1.msra.mxu0 0.0
        %2189 = vmatprep.subr.mxu0 0.0
        %2190 = vmatpush1.msra.mxu0 0.0
        %2191 = vmatprep.subr.mxu0 0.0
        %2192 = vmatpush1.msra.mxu0 %v2164
        %2193 = vmatprep.subr.mxu0 0.0
        %2194 = vmatpush1.msra.mxu0 %v2163
        %2195 = vmatprep.subr.mxu0 0.0
        %2196 = vmatpush1.msra.mxu0 %v2162
        %2197 = vmatprep.subr.mxu0 0.0
        %2198 = vmatpush1.msra.mxu0 %v2161
        %2199 = vmatprep.subr.mxu0 0.0
        %2200 = vmatpush1.msra.mxu0 %v2160
        %2201 = vmatprep.subr.mxu0 0.0
        %2202 = vmatpush1.msra.mxu0 %v2159
        %2203 = vmatprep.subr.mxu0 0.0
        %2204 = vmatpush1.msra.mxu0 %v2158
        %2205 = vmatprep.subr.mxu0 0.0
        %2206 = vmatpush1.msra.mxu0 %v2157
        %2207 = vmatprep.subr.mxu0 0.0
        %2208 = vmatpush2.msra.mxu0 0.0
        %2209 = vmatprep.subr.mxu0 0.0
        %2210 = vmatpush2.msra.mxu0 0.0
        %2211 = vmatprep.subr.mxu0 0.0
        %2212 = vmatpush2.msra.mxu0 0.0
        %2213 = vmatprep.subr.mxu0 0.0
        %2214 = vmatpush2.msra.mxu0 0.0
        %2215 = vmatprep.subr.mxu0 0.0
        %2216 = vmatpush2.msra.mxu0 0.0
        %2217 = vmatprep.subr.mxu0 0.0
        %2218 = vmatpush2.msra.mxu0 0.0
        %2219 = vmatprep.subr.mxu0 0.0
        %2220 = vmatpush2.msra.mxu0 0.0
        %2221 = vmatprep.subr.mxu0 0.0
        %2222 = vmatpush2.msra.mxu0 0.0
        %2223 = vmatprep.subr.mxu0 0.0
        %2224 = vmatpush2.msra.mxu0 0.0
        %2225 = vmatprep.subr.mxu0 0.0
        %2226 = vmatpush2.msra.mxu0 0.0
        %2227 = vmatprep.subr.mxu0 0.0
        %2228 = vmatpush2.msra.mxu0 0.0
        %2229 = vmatprep.subr.mxu0 0.0
        %2230 = vmatpush2.msra.mxu0 0.0
        %2231 = vmatprep.subr.mxu0 0.0
        %2232 = vmatpush2.msra.mxu0 0.0
        %2233 = vmatprep.subr.mxu0 0.0
        %2234 = vmatpush2.msra.mxu0 0.0
        %2235 = vmatprep.subr.mxu0 0.0
        %2236 = vmatpush2.msra.mxu0 0.0
        %2237 = vmatprep.subr.mxu0 0.0
        %2238 = vmatpush2.msra.mxu0 0.0
        %2239 = vmatprep.mubr.f32.mxu0 0.0
        %2240 = vmatmul.mubr.f32.gmra.mxu0 %v2173
        %v2241 = vpop.f32.mrf.mxu0
        %v2242 = vadd.f32 %v2170, %v2241
        %v2243 = vpop.f32.mrf.mxu0
        %2244 = vdwg.mxu0
        %v2245 = vadd.f32 %v2071, %v2242
        %v2246 = vld [vmem:[%s13] sm:$0x1]
        %v2247 = vld [vmem:[%s14] sm:$0x1]
        %v2248 = vsel %vm647, %v2245, 0.0
        %2249 = vadd.xlane.f32.xlu0 %v2248
        %v2250 = vpop.xlane.xlu0 %2249
        %v2251 = vmul.f32 %v2250, %v2047
        %v2252 = vsub.f32 %v2245, %v2251
        %v2253 = vmul.f32 %v2252, %v2252
        %v2254 = vsel %vm647, %v2253, 0.0
        %2255 = vadd.xlane.f32.xlu0 %v2254
        %v2256 = vpop.xlane.xlu0 %2255
        %v2257 = vmul.f32 %v2256, %v2047
        %v2258 = vadd.f32 %v2257, 1e-05
        %v2259 = vrsqrt.pop %v2258
        %v2260 = vmul.f32 %v2252, %v2259
        %v2262 = vlaneseq
        %v2263 = vshrl.u32 %v2262, 7
        %v2264 = vsub.s32 0, %v2263
        %v2265 = vrot.slane %v2246, %v2264
        %v2267 = vmul.f32 %v2260, %v2265
        %v2269 = vlaneseq
        %v2270 = vshrl.u32 %v2269, 7
        %v2271 = vsub.s32 0, %v2270
        %v2272 = vrot.slane %v2247, %v2271
        %v2274 = vadd.f32 %v2267, %v2272
        %s2275 = scalar_lea.vmem %s3, 32
        %v2276 = vld [vmem:[%s2275] sm:$0xff]
        %v2277 = vld [vmem:[%s2275 + $0x8] sm:$0xff]
        %v2278 = vld [vmem:[%s2275 + $0x10] sm:$0xff]
        %v2279 = vld [vmem:[%s2275 + $0x18] sm:$0xff]
        %s2280 = scalar_lea.vmem %s4, 1
        %v2281 = vld [vmem:[%s2280] sm:$0x1]
        %v2283 = vlaneseq
        %v2284 = vshrl.u32 %v2283, 7
        %v2285 = vsub.s32 0, %v2284
        %v2286 = vrot.slane %v2281, %v2285
        %v2289 = vsel %vm647, %v2274, 0
        %2291 = vmatprep.subr.mxu0 0.0
        %2292 = vmatpush1.msra.mxu0 0.0
        %2293 = vmatprep.subr.mxu0 0.0
        %2294 = vmatpush1.msra.mxu0 0.0
        %2295 = vmatprep.subr.mxu0 0.0
        %2296 = vmatpush1.msra.mxu0 0.0
        %2297 = vmatprep.subr.mxu0 0.0
        %2298 = vmatpush1.msra.mxu0 0.0
        %2299 = vmatprep.subr.mxu0 0.0
        %2300 = vmatpush1.msra.mxu0 0.0
        %2301 = vmatprep.subr.mxu0 0.0
        %2302 = vmatpush1.msra.mxu0 0.0
        %2303 = vmatprep.subr.mxu0 0.0
        %2304 = vmatpush1.msra.mxu0 0.0
        %2305 = vmatprep.subr.mxu0 0.0
        %2306 = vmatpush1.msra.mxu0 0.0
        %2307 = vmatprep.subr.mxu0 0.0
        %2308 = vmatpush1.msra.mxu0 0.0
        %2309 = vmatprep.subr.mxu0 0.0
        %2310 = vmatpush1.msra.mxu0 0.0
        %2311 = vmatprep.subr.mxu0 0.0
        %2312 = vmatpush1.msra.mxu0 0.0
        %2313 = vmatprep.subr.mxu0 0.0
        %2314 = vmatpush1.msra.mxu0 0.0
        %2315 = vmatprep.subr.mxu0 0.0
        %2316 = vmatpush1.msra.mxu0 %v2279
        %2317 = vmatprep.subr.mxu0 0.0
        %2318 = vmatpush1.msra.mxu0 %v2278
        %2319 = vmatprep.subr.mxu0 0.0
        %2320 = vmatpush1.msra.mxu0 %v2277
        %2321 = vmatprep.subr.mxu0 0.0
        %2322 = vmatpush1.msra.mxu0 %v2276
        %2323 = vmatprep.subr.mxu0 0.0
        %2324 = vmatpush2.msra.mxu0 0.0
        %2325 = vmatprep.subr.mxu0 0.0
        %2326 = vmatpush2.msra.mxu0 0.0
        %2327 = vmatprep.subr.mxu0 0.0
        %2328 = vmatpush2.msra.mxu0 0.0
        %2329 = vmatprep.subr.mxu0 0.0
        %2330 = vmatpush2.msra.mxu0 0.0
        %2331 = vmatprep.subr.mxu0 0.0
        %2332 = vmatpush2.msra.mxu0 0.0
        %2333 = vmatprep.subr.mxu0 0.0
        %2334 = vmatpush2.msra.mxu0 0.0
        %2335 = vmatprep.subr.mxu0 0.0
        %2336 = vmatpush2.msra.mxu0 0.0
        %2337 = vmatprep.subr.mxu0 0.0
        %2338 = vmatpush2.msra.mxu0 0.0
        %2339 = vmatprep.subr.mxu0 0.0
        %2340 = vmatpush2.msra.mxu0 0.0
        %2341 = vmatprep.subr.mxu0 0.0
        %2342 = vmatpush2.msra.mxu0 0.0
        %2343 = vmatprep.subr.mxu0 0.0
        %2344 = vmatpush2.msra.mxu0 0.0
        %2345 = vmatprep.subr.mxu0 0.0
        %2346 = vmatpush2.msra.mxu0 0.0
        %2347 = vmatprep.subr.mxu0 0.0
        %2348 = vmatpush2.msra.mxu0 0.0
        %2349 = vmatprep.subr.mxu0 0.0
        %2350 = vmatpush2.msra.mxu0 0.0
        %2351 = vmatprep.subr.mxu0 0.0
        %2352 = vmatpush2.msra.mxu0 0.0
        %2353 = vmatprep.subr.mxu0 0.0
        %2354 = vmatpush2.msra.mxu0 0.0
        %2355 = vmatprep.mubr.f32.mxu0 0.0
        %2356 = vmatmul.mubr.f32.gmra.mxu0 %v2289
        %v2357 = vpop.f32.mrf.mxu0
        %v2358 = vadd.f32 %v2286, %v2357
        %v2359 = vpop.f32.mrf.mxu0
        %2360 = vdwg.mxu0
        %2362 = vrot.lane.b32.xlu0 %v2358, 120
        %v2363 = vpop.permute.xlu0 %2362
        %2365 = vrot.lane.b32.xlu0 %v2358, 112
        %v2366 = vpop.permute.xlu0 %2365
        %2368 = vrot.lane.b32.xlu0 %v2358, 104
        %v2369 = vpop.permute.xlu0 %2368
        %v2371 = vcombine.low %v2358, %v2366
        %v2372 = vcombine.high %v2358, %v2366
        %v2374 = vunpack.c.l.s4 1983009808
        %v2375 = vunpack.c.0.s8 %v2374
        %v2376 = vlaneseq
        %v2377 = vshrl.u32 %v2376, 7
        %v2378 = vsub.s32 %v2375, %v2377
        %v2379 = vrot.slane %v2371, %v2378
        %v2381 = vunpack.c.l.s4 1983009808
        %v2382 = vunpack.c.0.s8 %v2381
        %v2383 = vlaneseq
        %v2384 = vshrl.u32 %v2383, 7
        %v2385 = vsub.s32 %v2382, %v2384
        %v2386 = vrot.slane %v2372, %v2385
        %v2387 = vcombine.low %v2363, %v2369
        %v2388 = vcombine.high %v2363, %v2369
        %v2390 = vunpack.c.l.s4 1983009808
        %v2391 = vunpack.c.0.s8 %v2390
        %v2392 = vlaneseq
        %v2393 = vshrl.u32 %v2392, 7
        %v2394 = vsub.s32 %v2391, %v2393
        %v2395 = vrot.slane %v2387, %v2394
        %v2397 = vunpack.c.l.s4 1983009808
        %v2398 = vunpack.c.0.s8 %v2397
        %v2399 = vlaneseq
        %v2400 = vshrl.u32 %v2399, 7
        %v2401 = vsub.s32 %v2398, %v2400
        %v2402 = vrot.slane %v2388, %v2401
        %v2403 = vcombine.low %v2379, %v2395
        %v2404 = vcombine.high %v2379, %v2395
        %v2406 = vunpack.c.l.s4 1934713408
        %v2407 = vunpack.c.0.s8 %v2406
        %v2408 = vlaneseq
        %v2409 = vshrl.u32 %v2408, 7
        %v2410 = vsub.s32 %v2407, %v2409
        %v2411 = vrot.slane %v2403, %v2410
        %v2413 = vunpack.c.l.s4 1934713408
        %v2414 = vunpack.c.0.s8 %v2413
        %v2415 = vlaneseq
        %v2416 = vshrl.u32 %v2415, 7
        %v2417 = vsub.s32 %v2414, %v2416
        %v2418 = vrot.slane %v2404, %v2417
        %v2419 = vcombine.low %v2386, %v2402
        %v2420 = vcombine.high %v2386, %v2402
        %v2422 = vunpack.c.l.s4 1934713408
        %v2423 = vunpack.c.0.s8 %v2422
        %v2424 = vlaneseq
        %v2425 = vshrl.u32 %v2424, 7
        %v2426 = vsub.s32 %v2423, %v2425
        %v2427 = vrot.slane %v2419, %v2426
        %v2429 = vunpack.c.l.s4 1934713408
        %v2430 = vunpack.c.0.s8 %v2429
        %v2431 = vlaneseq
        %v2432 = vshrl.u32 %v2431, 7
        %v2433 = vsub.s32 %v2430, %v2432
        %v2434 = vrot.slane %v2420, %v2433
        %v2435 = vcombine.high %v2411, 0.0
        %v2436 = vcombine.high %v2418, 0.0
        %v2437 = vcombine.high %v2427, 0.0
        %v2438 = vcombine.high %v2434, 0.0
        %v2439 = vcombine.low %v2411, %v2418
        %v2441 = vunpack.c.l.s4 1983009808
        %v2442 = vunpack.c.0.s8 %v2441
        %v2443 = vlaneseq
        %v2444 = vshrl.u32 %v2443, 7
        %v2445 = vsub.s32 %v2442, %v2444
        %v2446 = vrot.slane %v2439, %v2445
        %v2447 = vcombine.low %v2435, %v2436
        %v2449 = vunpack.c.l.s4 1983009808
        %v2450 = vunpack.c.0.s8 %v2449
        %v2451 = vlaneseq
        %v2452 = vshrl.u32 %v2451, 7
        %v2453 = vsub.s32 %v2450, %v2452
        %v2454 = vrot.slane %v2447, %v2453
        %v2455 = vcombine.low %v2427, %v2434
        %v2457 = vunpack.c.l.s4 1983009808
        %v2458 = vunpack.c.0.s8 %v2457
        %v2459 = vlaneseq
        %v2460 = vshrl.u32 %v2459, 7
        %v2461 = vsub.s32 %v2458, %v2460
        %v2462 = vrot.slane %v2455, %v2461
        %v2463 = vcombine.low %v2437, %v2438
        %v2465 = vunpack.c.l.s4 1983009808
        %v2466 = vunpack.c.0.s8 %v2465
        %v2467 = vlaneseq
        %v2468 = vshrl.u32 %v2467, 7
        %v2469 = vsub.s32 %v2466, %v2468
        %v2470 = vrot.slane %v2463, %v2469
        %v2471 = vcombine.low %v2446, %v2454
        %v2472 = vcombine.high %v2446, %v2454
        %v2474 = vunpack.c.l.s4 1934713408
        %v2475 = vunpack.c.0.s8 %v2474
        %v2476 = vlaneseq
        %v2477 = vshrl.u32 %v2476, 7
        %v2478 = vsub.s32 %v2475, %v2477
        %v2479 = vrot.slane %v2471, %v2478
        %v2481 = vunpack.c.l.s4 1934713408
        %v2482 = vunpack.c.0.s8 %v2481
        %v2483 = vlaneseq
        %v2484 = vshrl.u32 %v2483, 7
        %v2485 = vsub.s32 %v2482, %v2484
        %v2486 = vrot.slane %v2472, %v2485
        %v2487 = vcombine.low %v2462, %v2470
        %v2488 = vcombine.high %v2462, %v2470
        %v2490 = vunpack.c.l.s4 1934713408
        %v2491 = vunpack.c.0.s8 %v2490
        %v2492 = vlaneseq
        %v2493 = vshrl.u32 %v2492, 7
        %v2494 = vsub.s32 %v2491, %v2493
        %v2495 = vrot.slane %v2487, %v2494
        %v2497 = vunpack.c.l.s4 1934713408
        %v2498 = vunpack.c.0.s8 %v2497
        %v2499 = vlaneseq
        %v2500 = vshrl.u32 %v2499, 7
        %v2501 = vsub.s32 %v2498, %v2500
        %v2502 = vrot.slane %v2488, %v2501
        %v2503 = vcombine.low %v2479, %v2495
        %v2504 = vcombine.high %v2479, %v2495
        %v2505 = vcombine.low %v2486, %v2502
        %v2506 = vcombine.high %v2486, %v2502
        %2507 = vrot.lane.b32.xlu0 %v2358, 96
        %v2508 = vpop.permute.xlu0 %2507
        %2509 = vrot.lane.b32.xlu0 %v2363, 96
        %v2510 = vpop.permute.xlu0 %2509
        %2511 = vrot.lane.b32.xlu0 %v2366, 96
        %v2512 = vpop.permute.xlu0 %2511
        %2513 = vrot.lane.b32.xlu0 %v2369, 96
        %v2514 = vpop.permute.xlu0 %2513
        %v2519 = vcombine.low %v2508, %v2512
        %v2520 = vcombine.high %v2508, %v2512
        %v2522 = vunpack.c.l.s4 1983009808
        %v2523 = vunpack.c.0.s8 %v2522
        %v2524 = vlaneseq
        %v2525 = vshrl.u32 %v2524, 7
        %v2526 = vsub.s32 %v2523, %v2525
        %v2527 = vrot.slane %v2519, %v2526
        %v2529 = vunpack.c.l.s4 1983009808
        %v2530 = vunpack.c.0.s8 %v2529
        %v2531 = vlaneseq
        %v2532 = vshrl.u32 %v2531, 7
        %v2533 = vsub.s32 %v2530, %v2532
        %v2534 = vrot.slane %v2520, %v2533
        %v2535 = vcombine.low %v2510, %v2514
        %v2536 = vcombine.high %v2510, %v2514
        %v2538 = vunpack.c.l.s4 1983009808
        %v2539 = vunpack.c.0.s8 %v2538
        %v2540 = vlaneseq
        %v2541 = vshrl.u32 %v2540, 7
        %v2542 = vsub.s32 %v2539, %v2541
        %v2543 = vrot.slane %v2535, %v2542
        %v2545 = vunpack.c.l.s4 1983009808
        %v2546 = vunpack.c.0.s8 %v2545
        %v2547 = vlaneseq
        %v2548 = vshrl.u32 %v2547, 7
        %v2549 = vsub.s32 %v2546, %v2548
        %v2550 = vrot.slane %v2536, %v2549
        %v2551 = vcombine.low %v2527, %v2543
        %v2552 = vcombine.high %v2527, %v2543
        %v2554 = vunpack.c.l.s4 1934713408
        %v2555 = vunpack.c.0.s8 %v2554
        %v2556 = vlaneseq
        %v2557 = vshrl.u32 %v2556, 7
        %v2558 = vsub.s32 %v2555, %v2557
        %v2559 = vrot.slane %v2551, %v2558
        %v2561 = vunpack.c.l.s4 1934713408
        %v2562 = vunpack.c.0.s8 %v2561
        %v2563 = vlaneseq
        %v2564 = vshrl.u32 %v2563, 7
        %v2565 = vsub.s32 %v2562, %v2564
        %v2566 = vrot.slane %v2552, %v2565
        %v2567 = vcombine.low %v2534, %v2550
        %v2568 = vcombine.high %v2534, %v2550
        %v2570 = vunpack.c.l.s4 1934713408
        %v2571 = vunpack.c.0.s8 %v2570
        %v2572 = vlaneseq
        %v2573 = vshrl.u32 %v2572, 7
        %v2574 = vsub.s32 %v2571, %v2573
        %v2575 = vrot.slane %v2567, %v2574
        %v2577 = vunpack.c.l.s4 1934713408
        %v2578 = vunpack.c.0.s8 %v2577
        %v2579 = vlaneseq
        %v2580 = vshrl.u32 %v2579, 7
        %v2581 = vsub.s32 %v2578, %v2580
        %v2582 = vrot.slane %v2568, %v2581
        %v2583 = vcombine.high %v2559, 0.0
        %v2584 = vcombine.high %v2566, 0.0
        %v2585 = vcombine.high %v2575, 0.0
        %v2586 = vcombine.high %v2582, 0.0
        %v2587 = vcombine.low %v2559, %v2566
        %v2589 = vunpack.c.l.s4 1983009808
        %v2590 = vunpack.c.0.s8 %v2589
        %v2591 = vlaneseq
        %v2592 = vshrl.u32 %v2591, 7
        %v2593 = vsub.s32 %v2590, %v2592
        %v2594 = vrot.slane %v2587, %v2593
        %v2595 = vcombine.low %v2583, %v2584
        %v2597 = vunpack.c.l.s4 1983009808
        %v2598 = vunpack.c.0.s8 %v2597
        %v2599 = vlaneseq
        %v2600 = vshrl.u32 %v2599, 7
        %v2601 = vsub.s32 %v2598, %v2600
        %v2602 = vrot.slane %v2595, %v2601
        %v2603 = vcombine.low %v2575, %v2582
        %v2605 = vunpack.c.l.s4 1983009808
        %v2606 = vunpack.c.0.s8 %v2605
        %v2607 = vlaneseq
        %v2608 = vshrl.u32 %v2607, 7
        %v2609 = vsub.s32 %v2606, %v2608
        %v2610 = vrot.slane %v2603, %v2609
        %v2611 = vcombine.low %v2585, %v2586
        %v2613 = vunpack.c.l.s4 1983009808
        %v2614 = vunpack.c.0.s8 %v2613
        %v2615 = vlaneseq
        %v2616 = vshrl.u32 %v2615, 7
        %v2617 = vsub.s32 %v2614, %v2616
        %v2618 = vrot.slane %v2611, %v2617
        %v2619 = vcombine.low %v2594, %v2602
        %v2620 = vcombine.high %v2594, %v2602
        %v2622 = vunpack.c.l.s4 1934713408
        %v2623 = vunpack.c.0.s8 %v2622
        %v2624 = vlaneseq
        %v2625 = vshrl.u32 %v2624, 7
        %v2626 = vsub.s32 %v2623, %v2625
        %v2627 = vrot.slane %v2619, %v2626
        %v2629 = vunpack.c.l.s4 1934713408
        %v2630 = vunpack.c.0.s8 %v2629
        %v2631 = vlaneseq
        %v2632 = vshrl.u32 %v2631, 7
        %v2633 = vsub.s32 %v2630, %v2632
        %v2634 = vrot.slane %v2620, %v2633
        %v2635 = vcombine.low %v2610, %v2618
        %v2636 = vcombine.high %v2610, %v2618
        %v2638 = vunpack.c.l.s4 1934713408
        %v2639 = vunpack.c.0.s8 %v2638
        %v2640 = vlaneseq
        %v2641 = vshrl.u32 %v2640, 7
        %v2642 = vsub.s32 %v2639, %v2641
        %v2643 = vrot.slane %v2635, %v2642
        %v2645 = vunpack.c.l.s4 1934713408
        %v2646 = vunpack.c.0.s8 %v2645
        %v2647 = vlaneseq
        %v2648 = vshrl.u32 %v2647, 7
        %v2649 = vsub.s32 %v2646, %v2648
        %v2650 = vrot.slane %v2636, %v2649
        %v2651 = vcombine.low %v2627, %v2643
        %v2652 = vcombine.high %v2627, %v2643
        %v2653 = vcombine.low %v2634, %v2650
        %v2654 = vcombine.high %v2634, %v2650
        %2655 = vrot.lane.b32.xlu0 %v2358, 64
        %v2656 = vpop.permute.xlu0 %2655
        %2657 = vrot.lane.b32.xlu0 %v2363, 64
        %v2658 = vpop.permute.xlu0 %2657
        %2659 = vrot.lane.b32.xlu0 %v2366, 64
        %v2660 = vpop.permute.xlu0 %2659
        %2661 = vrot.lane.b32.xlu0 %v2369, 64
        %v2662 = vpop.permute.xlu0 %2661
        %v2667 = vcombine.low %v2656, %v2660
        %v2668 = vcombine.high %v2656, %v2660
        %v2670 = vunpack.c.l.s4 1983009808
        %v2671 = vunpack.c.0.s8 %v2670
        %v2672 = vlaneseq
        %v2673 = vshrl.u32 %v2672, 7
        %v2674 = vsub.s32 %v2671, %v2673
        %v2675 = vrot.slane %v2667, %v2674
        %v2677 = vunpack.c.l.s4 1983009808
        %v2678 = vunpack.c.0.s8 %v2677
        %v2679 = vlaneseq
        %v2680 = vshrl.u32 %v2679, 7
        %v2681 = vsub.s32 %v2678, %v2680
        %v2682 = vrot.slane %v2668, %v2681
        %v2683 = vcombine.low %v2658, %v2662
        %v2684 = vcombine.high %v2658, %v2662
        %v2686 = vunpack.c.l.s4 1983009808
        %v2687 = vunpack.c.0.s8 %v2686
        %v2688 = vlaneseq
        %v2689 = vshrl.u32 %v2688, 7
        %v2690 = vsub.s32 %v2687, %v2689
        %v2691 = vrot.slane %v2683, %v2690
        %v2693 = vunpack.c.l.s4 1983009808
        %v2694 = vunpack.c.0.s8 %v2693
        %v2695 = vlaneseq
        %v2696 = vshrl.u32 %v2695, 7
        %v2697 = vsub.s32 %v2694, %v2696
        %v2698 = vrot.slane %v2684, %v2697
        %v2699 = vcombine.low %v2675, %v2691
        %v2700 = vcombine.high %v2675, %v2691
        %v2702 = vunpack.c.l.s4 1934713408
        %v2703 = vunpack.c.0.s8 %v2702
        %v2704 = vlaneseq
        %v2705 = vshrl.u32 %v2704, 7
        %v2706 = vsub.s32 %v2703, %v2705
        %v2707 = vrot.slane %v2699, %v2706
        %v2709 = vunpack.c.l.s4 1934713408
        %v2710 = vunpack.c.0.s8 %v2709
        %v2711 = vlaneseq
        %v2712 = vshrl.u32 %v2711, 7
        %v2713 = vsub.s32 %v2710, %v2712
        %v2714 = vrot.slane %v2700, %v2713
        %v2715 = vcombine.low %v2682, %v2698
        %v2716 = vcombine.high %v2682, %v2698
        %v2718 = vunpack.c.l.s4 1934713408
        %v2719 = vunpack.c.0.s8 %v2718
        %v2720 = vlaneseq
        %v2721 = vshrl.u32 %v2720, 7
        %v2722 = vsub.s32 %v2719, %v2721
        %v2723 = vrot.slane %v2715, %v2722
        %v2725 = vunpack.c.l.s4 1934713408
        %v2726 = vunpack.c.0.s8 %v2725
        %v2727 = vlaneseq
        %v2728 = vshrl.u32 %v2727, 7
        %v2729 = vsub.s32 %v2726, %v2728
        %v2730 = vrot.slane %v2716, %v2729
        %v2731 = vcombine.high %v2707, 0.0
        %v2732 = vcombine.high %v2714, 0.0
        %v2733 = vcombine.high %v2723, 0.0
        %v2734 = vcombine.high %v2730, 0.0
        %v2735 = vcombine.low %v2707, %v2714
        %v2737 = vunpack.c.l.s4 1983009808
        %v2738 = vunpack.c.0.s8 %v2737
        %v2739 = vlaneseq
        %v2740 = vshrl.u32 %v2739, 7
        %v2741 = vsub.s32 %v2738, %v2740
        %v2742 = vrot.slane %v2735, %v2741
        %v2743 = vcombine.low %v2731, %v2732
        %v2745 = vunpack.c.l.s4 1983009808
        %v2746 = vunpack.c.0.s8 %v2745
        %v2747 = vlaneseq
        %v2748 = vshrl.u32 %v2747, 7
        %v2749 = vsub.s32 %v2746, %v2748
        %v2750 = vrot.slane %v2743, %v2749
        %v2751 = vcombine.low %v2723, %v2730
        %v2753 = vunpack.c.l.s4 1983009808
        %v2754 = vunpack.c.0.s8 %v2753
        %v2755 = vlaneseq
        %v2756 = vshrl.u32 %v2755, 7
        %v2757 = vsub.s32 %v2754, %v2756
        %v2758 = vrot.slane %v2751, %v2757
        %v2759 = vcombine.low %v2733, %v2734
        %v2761 = vunpack.c.l.s4 1983009808
        %v2762 = vunpack.c.0.s8 %v2761
        %v2763 = vlaneseq
        %v2764 = vshrl.u32 %v2763, 7
        %v2765 = vsub.s32 %v2762, %v2764
        %v2766 = vrot.slane %v2759, %v2765
        %v2767 = vcombine.low %v2742, %v2750
        %v2768 = vcombine.high %v2742, %v2750
        %v2770 = vunpack.c.l.s4 1934713408
        %v2771 = vunpack.c.0.s8 %v2770
        %v2772 = vlaneseq
        %v2773 = vshrl.u32 %v2772, 7
        %v2774 = vsub.s32 %v2771, %v2773
        %v2775 = vrot.slane %v2767, %v2774
        %v2777 = vunpack.c.l.s4 1934713408
        %v2778 = vunpack.c.0.s8 %v2777
        %v2779 = vlaneseq
        %v2780 = vshrl.u32 %v2779, 7
        %v2781 = vsub.s32 %v2778, %v2780
        %v2782 = vrot.slane %v2768, %v2781
        %v2783 = vcombine.low %v2758, %v2766
        %v2784 = vcombine.high %v2758, %v2766
        %v2786 = vunpack.c.l.s4 1934713408
        %v2787 = vunpack.c.0.s8 %v2786
        %v2788 = vlaneseq
        %v2789 = vshrl.u32 %v2788, 7
        %v2790 = vsub.s32 %v2787, %v2789
        %v2791 = vrot.slane %v2783, %v2790
        %v2793 = vunpack.c.l.s4 1934713408
        %v2794 = vunpack.c.0.s8 %v2793
        %v2795 = vlaneseq
        %v2796 = vshrl.u32 %v2795, 7
        %v2797 = vsub.s32 %v2794, %v2796
        %v2798 = vrot.slane %v2784, %v2797
        %v2799 = vcombine.low %v2775, %v2791
        %v2800 = vcombine.high %v2775, %v2791
        %v2801 = vcombine.low %v2782, %v2798
        %v2802 = vcombine.high %v2782, %v2798
        %v2804 = vsel %vm1163, %v2503, 0
        %v2807 = vsel %vm1163, %v2651, 0
        %2809 = vmatprep.subr.mxu0 0.0
        %2810 = vmatpush1.xpose.msra.mxu0 0.0
        %2811 = vmatprep.subr.mxu0 0.0
        %2812 = vmatpush1.xpose.msra.mxu0 0.0
        %2813 = vmatprep.subr.mxu0 0.0
        %2814 = vmatpush1.xpose.msra.mxu0 0.0
        %2815 = vmatprep.subr.mxu0 0.0
        %2816 = vmatpush1.xpose.msra.mxu0 0.0
        %2817 = vmatprep.subr.mxu0 0.0
        %2818 = vmatpush1.xpose.msra.mxu0 0.0
        %2819 = vmatprep.subr.mxu0 0.0
        %2820 = vmatpush1.xpose.msra.mxu0 0.0
        %2821 = vmatprep.subr.mxu0 0.0
        %2822 = vmatpush1.xpose.msra.mxu0 0.0
        %2823 = vmatprep.subr.mxu0 0.0
        %2824 = vmatpush1.xpose.msra.mxu0 0.0
        %2825 = vmatprep.subr.mxu0 0.0
        %2826 = vmatpush1.xpose.msra.mxu0 0.0
        %2827 = vmatprep.subr.mxu0 0.0
        %2828 = vmatpush1.xpose.msra.mxu0 0.0
        %2829 = vmatprep.subr.mxu0 0.0
        %2830 = vmatpush1.xpose.msra.mxu0 0.0
        %2831 = vmatprep.subr.mxu0 0.0
        %2832 = vmatpush1.xpose.msra.mxu0 0.0
        %2833 = vmatprep.subr.mxu0 0.0
        %2834 = vmatpush1.xpose.msra.mxu0 0.0
        %2835 = vmatprep.subr.mxu0 0.0
        %2836 = vmatpush1.xpose.msra.mxu0 0.0
        %2837 = vmatprep.subr.mxu0 0.0
        %2838 = vmatpush1.xpose.msra.mxu0 0.0
        %2839 = vmatprep.subr.mxu0 0.0
        %2840 = vmatpush1.xpose.msra.mxu0 %v2807
        %2841 = vmatprep.subr.mxu0 0.0
        %2842 = vmatpush2.xpose.msra.mxu0 0.0
        %2843 = vmatprep.subr.mxu0 0.0
        %2844 = vmatpush2.xpose.msra.mxu0 0.0
        %2845 = vmatprep.subr.mxu0 0.0
        %2846 = vmatpush2.xpose.msra.mxu0 0.0
        %2847 = vmatprep.subr.mxu0 0.0
        %2848 = vmatpush2.xpose.msra.mxu0 0.0
        %2849 = vmatprep.subr.mxu0 0.0
        %2850 = vmatpush2.xpose.msra.mxu0 0.0
        %2851 = vmatprep.subr.mxu0 0.0
        %2852 = vmatpush2.xpose.msra.mxu0 0.0
        %2853 = vmatprep.subr.mxu0 0.0
        %2854 = vmatpush2.xpose.msra.mxu0 0.0
        %2855 = vmatprep.subr.mxu0 0.0
        %2856 = vmatpush2.xpose.msra.mxu0 0.0
        %2857 = vmatprep.subr.mxu0 0.0
        %2858 = vmatpush2.xpose.msra.mxu0 0.0
        %2859 = vmatprep.subr.mxu0 0.0
        %2860 = vmatpush2.xpose.msra.mxu0 0.0
        %2861 = vmatprep.subr.mxu0 0.0
        %2862 = vmatpush2.xpose.msra.mxu0 0.0
        %2863 = vmatprep.subr.mxu0 0.0
        %2864 = vmatpush2.xpose.msra.mxu0 0.0
        %2865 = vmatprep.subr.mxu0 0.0
        %2866 = vmatpush2.xpose.msra.mxu0 0.0
        %2867 = vmatprep.subr.mxu0 0.0
        %2868 = vmatpush2.xpose.msra.mxu0 0.0
        %2869 = vmatprep.subr.mxu0 0.0
        %2870 = vmatpush2.xpose.msra.mxu0 0.0
        %2871 = vmatprep.subr.mxu0 0.0
        %2872 = vmatpush2.xpose.msra.mxu0 0.0
        %2873 = vmatprep.mubr.f32.mxu0 0.0
        %2874 = vmatmul.mubr.f32.gmra.mxu0 %v2804
        %v2875 = vpop.f32.mrf.mxu0
        %v2876 = vadd.f32 0.0, %v2875
        %v2877 = vpop.f32.mrf.mxu0
        %2878 = vdwg.mxu0
        %v2880 = vsel %vm1163, %v2504, 0
        %v2883 = vsel %vm1163, %v2652, 0
        %2885 = vmatprep.subr.mxu0 0.0
        %2886 = vmatpush1.xpose.msra.mxu0 0.0
        %2887 = vmatprep.subr.mxu0 0.0
        %2888 = vmatpush1.xpose.msra.mxu0 0.0
        %2889 = vmatprep.subr.mxu0 0.0
        %2890 = vmatpush1.xpose.msra.mxu0 0.0
        %2891 = vmatprep.subr.mxu0 0.0
        %2892 = vmatpush1.xpose.msra.mxu0 0.0
        %2893 = vmatprep.subr.mxu0 0.0
        %2894 = vmatpush1.xpose.msra.mxu0 0.0
        %2895 = vmatprep.subr.mxu0 0.0
        %2896 = vmatpush1.xpose.msra.mxu0 0.0
        %2897 = vmatprep.subr.mxu0 0.0
        %2898 = vmatpush1.xpose.msra.mxu0 0.0
        %2899 = vmatprep.subr.mxu0 0.0
        %2900 = vmatpush1.xpose.msra.mxu0 0.0
        %2901 = vmatprep.subr.mxu0 0.0
        %2902 = vmatpush1.xpose.msra.mxu0 0.0
        %2903 = vmatprep.subr.mxu0 0.0
        %2904 = vmatpush1.xpose.msra.mxu0 0.0
        %2905 = vmatprep.subr.mxu0 0.0
        %2906 = vmatpush1.xpose.msra.mxu0 0.0
        %2907 = vmatprep.subr.mxu0 0.0
        %2908 = vmatpush1.xpose.msra.mxu0 0.0
        %2909 = vmatprep.subr.mxu0 0.0
        %2910 = vmatpush1.xpose.msra.mxu0 0.0
        %2911 = vmatprep.subr.mxu0 0.0
        %2912 = vmatpush1.xpose.msra.mxu0 0.0
        %2913 = vmatprep.subr.mxu0 0.0
        %2914 = vmatpush1.xpose.msra.mxu0 0.0
        %2915 = vmatprep.subr.mxu0 0.0
        %2916 = vmatpush1.xpose.msra.mxu0 %v2883
        %2917 = vmatprep.subr.mxu0 0.0
        %2918 = vmatpush2.xpose.msra.mxu0 0.0
        %2919 = vmatprep.subr.mxu0 0.0
        %2920 = vmatpush2.xpose.msra.mxu0 0.0
        %2921 = vmatprep.subr.mxu0 0.0
        %2922 = vmatpush2.xpose.msra.mxu0 0.0
        %2923 = vmatprep.subr.mxu0 0.0
        %2924 = vmatpush2.xpose.msra.mxu0 0.0
        %2925 = vmatprep.subr.mxu0 0.0
        %2926 = vmatpush2.xpose.msra.mxu0 0.0
        %2927 = vmatprep.subr.mxu0 0.0
        %2928 = vmatpush2.xpose.msra.mxu0 0.0
        %2929 = vmatprep.subr.mxu0 0.0
        %2930 = vmatpush2.xpose.msra.mxu0 0.0
        %2931 = vmatprep.subr.mxu0 0.0
        %2932 = vmatpush2.xpose.msra.mxu0 0.0
        %2933 = vmatprep.subr.mxu0 0.0
        %2934 = vmatpush2.xpose.msra.mxu0 0.0
        %2935 = vmatprep.subr.mxu0 0.0
        %2936 = vmatpush2.xpose.msra.mxu0 0.0
        %2937 = vmatprep.subr.mxu0 0.0
        %2938 = vmatpush2.xpose.msra.mxu0 0.0
        %2939 = vmatprep.subr.mxu0 0.0
        %2940 = vmatpush2.xpose.msra.mxu0 0.0
        %2941 = vmatprep.subr.mxu0 0.0
        %2942 = vmatpush2.xpose.msra.mxu0 0.0
        %2943 = vmatprep.subr.mxu0 0.0
        %2944 = vmatpush2.xpose.msra.mxu0 0.0
        %2945 = vmatprep.subr.mxu0 0.0
        %2946 = vmatpush2.xpose.msra.mxu0 0.0
        %2947 = vmatprep.subr.mxu0 0.0
        %2948 = vmatpush2.xpose.msra.mxu0 0.0
        %2949 = vmatprep.mubr.f32.mxu0 0.0
        %2950 = vmatmul.mubr.f32.gmra.mxu0 %v2880
        %v2951 = vpop.f32.mrf.mxu0
        %v2952 = vadd.f32 0.0, %v2951
        %v2953 = vpop.f32.mrf.mxu0
        %2954 = vdwg.mxu0
        %v2956 = vsel %vm1163, %v2505, 0
        %v2959 = vsel %vm1163, %v2653, 0
        %2961 = vmatprep.subr.mxu0 0.0
        %2962 = vmatpush1.xpose.msra.mxu0 0.0
        %2963 = vmatprep.subr.mxu0 0.0
        %2964 = vmatpush1.xpose.msra.mxu0 0.0
        %2965 = vmatprep.subr.mxu0 0.0
        %2966 = vmatpush1.xpose.msra.mxu0 0.0
        %2967 = vmatprep.subr.mxu0 0.0
        %2968 = vmatpush1.xpose.msra.mxu0 0.0
        %2969 = vmatprep.subr.mxu0 0.0
        %2970 = vmatpush1.xpose.msra.mxu0 0.0
        %2971 = vmatprep.subr.mxu0 0.0
        %2972 = vmatpush1.xpose.msra.mxu0 0.0
        %2973 = vmatprep.subr.mxu0 0.0
        %2974 = vmatpush1.xpose.msra.mxu0 0.0
        %2975 = vmatprep.subr.mxu0 0.0
        %2976 = vmatpush1.xpose.msra.mxu0 0.0
        %2977 = vmatprep.subr.mxu0 0.0
        %2978 = vmatpush1.xpose.msra.mxu0 0.0
        %2979 = vmatprep.subr.mxu0 0.0
        %2980 = vmatpush1.xpose.msra.mxu0 0.0
        %2981 = vmatprep.subr.mxu0 0.0
        %2982 = vmatpush1.xpose.msra.mxu0 0.0
        %2983 = vmatprep.subr.mxu0 0.0
        %2984 = vmatpush1.xpose.msra.mxu0 0.0
        %2985 = vmatprep.subr.mxu0 0.0
        %2986 = vmatpush1.xpose.msra.mxu0 0.0
        %2987 = vmatprep.subr.mxu0 0.0
        %2988 = vmatpush1.xpose.msra.mxu0 0.0
        %2989 = vmatprep.subr.mxu0 0.0
        %2990 = vmatpush1.xpose.msra.mxu0 0.0
        %2991 = vmatprep.subr.mxu0 0.0
        %2992 = vmatpush1.xpose.msra.mxu0 %v2959
        %2993 = vmatprep.subr.mxu0 0.0
        %2994 = vmatpush2.xpose.msra.mxu0 0.0
        %2995 = vmatprep.subr.mxu0 0.0
        %2996 = vmatpush2.xpose.msra.mxu0 0.0
        %2997 = vmatprep.subr.mxu0 0.0
        %2998 = vmatpush2.xpose.msra.mxu0 0.0
        %2999 = vmatprep.subr.mxu0 0.0
        %3000 = vmatpush2.xpose.msra.mxu0 0.0
        %3001 = vmatprep.subr.mxu0 0.0
        %3002 = vmatpush2.xpose.msra.mxu0 0.0
        %3003 = vmatprep.subr.mxu0 0.0
        %3004 = vmatpush2.xpose.msra.mxu0 0.0
        %3005 = vmatprep.subr.mxu0 0.0
        %3006 = vmatpush2.xpose.msra.mxu0 0.0
        %3007 = vmatprep.subr.mxu0 0.0
        %3008 = vmatpush2.xpose.msra.mxu0 0.0
        %3009 = vmatprep.subr.mxu0 0.0
        %3010 = vmatpush2.xpose.msra.mxu0 0.0
        %3011 = vmatprep.subr.mxu0 0.0
        %3012 = vmatpush2.xpose.msra.mxu0 0.0
        %3013 = vmatprep.subr.mxu0 0.0
        %3014 = vmatpush2.xpose.msra.mxu0 0.0
        %3015 = vmatprep.subr.mxu0 0.0
        %3016 = vmatpush2.xpose.msra.mxu0 0.0
        %3017 = vmatprep.subr.mxu0 0.0
        %3018 = vmatpush2.xpose.msra.mxu0 0.0
        %3019 = vmatprep.subr.mxu0 0.0
        %3020 = vmatpush2.xpose.msra.mxu0 0.0
        %3021 = vmatprep.subr.mxu0 0.0
        %3022 = vmatpush2.xpose.msra.mxu0 0.0
        %3023 = vmatprep.subr.mxu0 0.0
        %3024 = vmatpush2.xpose.msra.mxu0 0.0
        %3025 = vmatprep.mubr.f32.mxu0 0.0
        %3026 = vmatmul.mubr.f32.gmra.mxu0 %v2956
        %v3027 = vpop.f32.mrf.mxu0
        %v3028 = vadd.f32 0.0, %v3027
        %v3029 = vpop.f32.mrf.mxu0
        %3030 = vdwg.mxu0
        %v3032 = vsel %vm1163, %v2506, 0
        %v3035 = vsel %vm1163, %v2654, 0
        %3037 = vmatprep.subr.mxu0 0.0
        %3038 = vmatpush1.xpose.msra.mxu0 0.0
        %3039 = vmatprep.subr.mxu0 0.0
        %3040 = vmatpush1.xpose.msra.mxu0 0.0
        %3041 = vmatprep.subr.mxu0 0.0
        %3042 = vmatpush1.xpose.msra.mxu0 0.0
        %3043 = vmatprep.subr.mxu0 0.0
        %3044 = vmatpush1.xpose.msra.mxu0 0.0
        %3045 = vmatprep.subr.mxu0 0.0
        %3046 = vmatpush1.xpose.msra.mxu0 0.0
        %3047 = vmatprep.subr.mxu0 0.0
        %3048 = vmatpush1.xpose.msra.mxu0 0.0
        %3049 = vmatprep.subr.mxu0 0.0
        %3050 = vmatpush1.xpose.msra.mxu0 0.0
        %3051 = vmatprep.subr.mxu0 0.0
        %3052 = vmatpush1.xpose.msra.mxu0 0.0
        %3053 = vmatprep.subr.mxu0 0.0
        %3054 = vmatpush1.xpose.msra.mxu0 0.0
        %3055 = vmatprep.subr.mxu0 0.0
        %3056 = vmatpush1.xpose.msra.mxu0 0.0
        %3057 = vmatprep.subr.mxu0 0.0
        %3058 = vmatpush1.xpose.msra.mxu0 0.0
        %3059 = vmatprep.subr.mxu0 0.0
        %3060 = vmatpush1.xpose.msra.mxu0 0.0
        %3061 = vmatprep.subr.mxu0 0.0
        %3062 = vmatpush1.xpose.msra.mxu0 0.0
        %3063 = vmatprep.subr.mxu0 0.0
        %3064 = vmatpush1.xpose.msra.mxu0 0.0
        %3065 = vmatprep.subr.mxu0 0.0
        %3066 = vmatpush1.xpose.msra.mxu0 0.0
        %3067 = vmatprep.subr.mxu0 0.0
        %3068 = vmatpush1.xpose.msra.mxu0 %v3035
        %3069 = vmatprep.subr.mxu0 0.0
        %3070 = vmatpush2.xpose.msra.mxu0 0.0
        %3071 = vmatprep.subr.mxu0 0.0
        %3072 = vmatpush2.xpose.msra.mxu0 0.0
        %3073 = vmatprep.subr.mxu0 0.0
        %3074 = vmatpush2.xpose.msra.mxu0 0.0
        %3075 = vmatprep.subr.mxu0 0.0
        %3076 = vmatpush2.xpose.msra.mxu0 0.0
        %3077 = vmatprep.subr.mxu0 0.0
        %3078 = vmatpush2.xpose.msra.mxu0 0.0
        %3079 = vmatprep.subr.mxu0 0.0
        %3080 = vmatpush2.xpose.msra.mxu0 0.0
        %3081 = vmatprep.subr.mxu0 0.0
        %3082 = vmatpush2.xpose.msra.mxu0 0.0
        %3083 = vmatprep.subr.mxu0 0.0
        %3084 = vmatpush2.xpose.msra.mxu0 0.0
        %3085 = vmatprep.subr.mxu0 0.0
        %3086 = vmatpush2.xpose.msra.mxu0 0.0
        %3087 = vmatprep.subr.mxu0 0.0
        %3088 = vmatpush2.xpose.msra.mxu0 0.0
        %3089 = vmatprep.subr.mxu0 0.0
        %3090 = vmatpush2.xpose.msra.mxu0 0.0
        %3091 = vmatprep.subr.mxu0 0.0
        %3092 = vmatpush2.xpose.msra.mxu0 0.0
        %3093 = vmatprep.subr.mxu0 0.0
        %3094 = vmatpush2.xpose.msra.mxu0 0.0
        %3095 = vmatprep.subr.mxu0 0.0
        %3096 = vmatpush2.xpose.msra.mxu0 0.0
        %3097 = vmatprep.subr.mxu0 0.0
        %3098 = vmatpush2.xpose.msra.mxu0 0.0
        %3099 = vmatprep.subr.mxu0 0.0
        %3100 = vmatpush2.xpose.msra.mxu0 0.0
        %3101 = vmatprep.mubr.f32.mxu0 0.0
        %3102 = vmatmul.mubr.f32.gmra.mxu0 %v3032
        %v3103 = vpop.f32.mrf.mxu0
        %v3104 = vadd.f32 0.0, %v3103
        %v3105 = vpop.f32.mrf.mxu0
        %3106 = vdwg.mxu0
        %v3107 = vsel %vm1163, %v2876, -inf
        %3108 = vmax.xlane.f32.xlu0 %v3107
        %v3109 = vpop.xlane.xlu0 %3108
        %v3110 = vsel %vm1163, %v2952, -inf
        %3111 = vmax.xlane.f32.xlu0 %v3110
        %v3112 = vpop.xlane.xlu0 %3111
        %v3113 = vsel %vm1163, %v3028, -inf
        %3114 = vmax.xlane.f32.xlu0 %v3113
        %v3115 = vpop.xlane.xlu0 %3114
        %v3116 = vsel %vm1163, %v3104, -inf
        %3117 = vmax.xlane.f32.xlu0 %v3116
        %v3118 = vpop.xlane.xlu0 %3117
        %v3119 = vsub.f32 %v2876, %v3109
        %v3120 = vsub.f32 %v2952, %v3112
        %v3121 = vsub.f32 %v3028, %v3115
        %v3122 = vsub.f32 %v3104, %v3118
        %v3123 = vmul.f32 %v3119, 1.442695
        %v3124 = vpow.pop %v3123
        %v3125 = vmul.f32 %v3120, 1.442695
        %v3126 = vpow.pop %v3125
        %v3127 = vmul.f32 %v3121, 1.442695
        %v3128 = vpow.pop %v3127
        %v3129 = vmul.f32 %v3122, 1.442695
        %v3130 = vpow.pop %v3129
        %v3131 = vsel %vm1163, %v3124, 0.0
        %3132 = vadd.xlane.f32.xlu0 %v3131
        %v3133 = vpop.xlane.xlu0 %3132
        %v3134 = vsel %vm1163, %v3126, 0.0
        %3135 = vadd.xlane.f32.xlu0 %v3134
        %v3136 = vpop.xlane.xlu0 %3135
        %v3137 = vsel %vm1163, %v3128, 0.0
        %3138 = vadd.xlane.f32.xlu0 %v3137
        %v3139 = vpop.xlane.xlu0 %3138
        %v3140 = vsel %vm1163, %v3130, 0.0
        %3141 = vadd.xlane.f32.xlu0 %v3140
        %v3142 = vpop.xlane.xlu0 %3141
        %v3143 = vrcp.pop %v3133
        %v3144 = vrcp.pop %v3136
        %v3145 = vrcp.pop %v3139
        %v3146 = vrcp.pop %v3142
        %v3147 = vmul.f32 %v3124, %v3143
        %v3148 = vmul.f32 %v3126, %v3144
        %v3149 = vmul.f32 %v3128, %v3145
        %v3150 = vmul.f32 %v3130, %v3146
        %v3152 = vsel %vm1163, %v3147, 0
        %3154 = vmatprep.subr.mxu0 0.0
        %3155 = vmatpush1.msra.mxu0 0.0
        %3156 = vmatprep.subr.mxu0 0.0
        %3157 = vmatpush1.msra.mxu0 0.0
        %3158 = vmatprep.subr.mxu0 0.0
        %3159 = vmatpush1.msra.mxu0 0.0
        %3160 = vmatprep.subr.mxu0 0.0
        %3161 = vmatpush1.msra.mxu0 0.0
        %3162 = vmatprep.subr.mxu0 0.0
        %3163 = vmatpush1.msra.mxu0 0.0
        %3164 = vmatprep.subr.mxu0 0.0
        %3165 = vmatpush1.msra.mxu0 0.0
        %3166 = vmatprep.subr.mxu0 0.0
        %3167 = vmatpush1.msra.mxu0 0.0
        %3168 = vmatprep.subr.mxu0 0.0
        %3169 = vmatpush1.msra.mxu0 0.0
        %3170 = vmatprep.subr.mxu0 0.0
        %3171 = vmatpush1.msra.mxu0 0.0
        %3172 = vmatprep.subr.mxu0 0.0
        %3173 = vmatpush1.msra.mxu0 0.0
        %3174 = vmatprep.subr.mxu0 0.0
        %3175 = vmatpush1.msra.mxu0 0.0
        %3176 = vmatprep.subr.mxu0 0.0
        %3177 = vmatpush1.msra.mxu0 0.0
        %3178 = vmatprep.subr.mxu0 0.0
        %3179 = vmatpush1.msra.mxu0 0.0
        %3180 = vmatprep.subr.mxu0 0.0
        %3181 = vmatpush1.msra.mxu0 0.0
        %3182 = vmatprep.subr.mxu0 0.0
        %3183 = vmatpush1.msra.mxu0 0.0
        %3184 = vmatprep.subr.mxu0 0.0
        %3185 = vmatpush1.msra.mxu0 %v2799
        %3186 = vmatprep.subr.mxu0 0.0
        %3187 = vmatpush2.msra.mxu0 0.0
        %3188 = vmatprep.subr.mxu0 0.0
        %3189 = vmatpush2.msra.mxu0 0.0
        %3190 = vmatprep.subr.mxu0 0.0
        %3191 = vmatpush2.msra.mxu0 0.0
        %3192 = vmatprep.subr.mxu0 0.0
        %3193 = vmatpush2.msra.mxu0 0.0
        %3194 = vmatprep.subr.mxu0 0.0
        %3195 = vmatpush2.msra.mxu0 0.0
        %3196 = vmatprep.subr.mxu0 0.0
        %3197 = vmatpush2.msra.mxu0 0.0
        %3198 = vmatprep.subr.mxu0 0.0
        %3199 = vmatpush2.msra.mxu0 0.0
        %3200 = vmatprep.subr.mxu0 0.0
        %3201 = vmatpush2.msra.mxu0 0.0
        %3202 = vmatprep.subr.mxu0 0.0
        %3203 = vmatpush2.msra.mxu0 0.0
        %3204 = vmatprep.subr.mxu0 0.0
        %3205 = vmatpush2.msra.mxu0 0.0
        %3206 = vmatprep.subr.mxu0 0.0
        %3207 = vmatpush2.msra.mxu0 0.0
        %3208 = vmatprep.subr.mxu0 0.0
        %3209 = vmatpush2.msra.mxu0 0.0
        %3210 = vmatprep.subr.mxu0 0.0
        %3211 = vmatpush2.msra.mxu0 0.0
        %3212 = vmatprep.subr.mxu0 0.0
        %3213 = vmatpush2.msra.mxu0 0.0
        %3214 = vmatprep.subr.mxu0 0.0
        %3215 = vmatpush2.msra.mxu0 0.0
        %3216 = vmatprep.subr.mxu0 0.0
        %3217 = vmatpush2.msra.mxu0 0.0
        %3218 = vmatprep.mubr.f32.mxu0 0.0
        %3219 = vmatmul.mubr.f32.gmra.mxu0 %v3152
        %v3220 = vpop.f32.mrf.mxu0
        %v3221 = vadd.f32 0.0, %v3220
        %v3222 = vpop.f32.mrf.mxu0
        %3223 = vdwg.mxu0
        %v3225 = vsel %vm1163, %v3148, 0
        %3227 = vmatprep.subr.mxu0 0.0
        %3228 = vmatpush1.msra.mxu0 0.0
        %3229 = vmatprep.subr.mxu0 0.0
        %3230 = vmatpush1.msra.mxu0 0.0
        %3231 = vmatprep.subr.mxu0 0.0
        %3232 = vmatpush1.msra.mxu0 0.0
        %3233 = vmatprep.subr.mxu0 0.0
        %3234 = vmatpush1.msra.mxu0 0.0
        %3235 = vmatprep.subr.mxu0 0.0
        %3236 = vmatpush1.msra.mxu0 0.0
        %3237 = vmatprep.subr.mxu0 0.0
        %3238 = vmatpush1.msra.mxu0 0.0
        %3239 = vmatprep.subr.mxu0 0.0
        %3240 = vmatpush1.msra.mxu0 0.0
        %3241 = vmatprep.subr.mxu0 0.0
        %3242 = vmatpush1.msra.mxu0 0.0
        %3243 = vmatprep.subr.mxu0 0.0
        %3244 = vmatpush1.msra.mxu0 0.0
        %3245 = vmatprep.subr.mxu0 0.0
        %3246 = vmatpush1.msra.mxu0 0.0
        %3247 = vmatprep.subr.mxu0 0.0
        %3248 = vmatpush1.msra.mxu0 0.0
        %3249 = vmatprep.subr.mxu0 0.0
        %3250 = vmatpush1.msra.mxu0 0.0
        %3251 = vmatprep.subr.mxu0 0.0
        %3252 = vmatpush1.msra.mxu0 0.0
        %3253 = vmatprep.subr.mxu0 0.0
        %3254 = vmatpush1.msra.mxu0 0.0
        %3255 = vmatprep.subr.mxu0 0.0
        %3256 = vmatpush1.msra.mxu0 0.0
        %3257 = vmatprep.subr.mxu0 0.0
        %3258 = vmatpush1.msra.mxu0 %v2800
        %3259 = vmatprep.subr.mxu0 0.0
        %3260 = vmatpush2.msra.mxu0 0.0
        %3261 = vmatprep.subr.mxu0 0.0
        %3262 = vmatpush2.msra.mxu0 0.0
        %3263 = vmatprep.subr.mxu0 0.0
        %3264 = vmatpush2.msra.mxu0 0.0
        %3265 = vmatprep.subr.mxu0 0.0
        %3266 = vmatpush2.msra.mxu0 0.0
        %3267 = vmatprep.subr.mxu0 0.0
        %3268 = vmatpush2.msra.mxu0 0.0
        %3269 = vmatprep.subr.mxu0 0.0
        %3270 = vmatpush2.msra.mxu0 0.0
        %3271 = vmatprep.subr.mxu0 0.0
        %3272 = vmatpush2.msra.mxu0 0.0
        %3273 = vmatprep.subr.mxu0 0.0
        %3274 = vmatpush2.msra.mxu0 0.0
        %3275 = vmatprep.subr.mxu0 0.0
        %3276 = vmatpush2.msra.mxu0 0.0
        %3277 = vmatprep.subr.mxu0 0.0
        %3278 = vmatpush2.msra.mxu0 0.0
        %3279 = vmatprep.subr.mxu0 0.0
        %3280 = vmatpush2.msra.mxu0 0.0
        %3281 = vmatprep.subr.mxu0 0.0
        %3282 = vmatpush2.msra.mxu0 0.0
        %3283 = vmatprep.subr.mxu0 0.0
        %3284 = vmatpush2.msra.mxu0 0.0
        %3285 = vmatprep.subr.mxu0 0.0
        %3286 = vmatpush2.msra.mxu0 0.0
        %3287 = vmatprep.subr.mxu0 0.0
        %3288 = vmatpush2.msra.mxu0 0.0
        %3289 = vmatprep.subr.mxu0 0.0
        %3290 = vmatpush2.msra.mxu0 0.0
        %3291 = vmatprep.mubr.f32.mxu0 0.0
        %3292 = vmatmul.mubr.f32.gmra.mxu0 %v3225
        %v3293 = vpop.f32.mrf.mxu0
        %v3294 = vadd.f32 0.0, %v3293
        %v3295 = vpop.f32.mrf.mxu0
        %3296 = vdwg.mxu0
        %v3298 = vsel %vm1163, %v3149, 0
        %3300 = vmatprep.subr.mxu0 0.0
        %3301 = vmatpush1.msra.mxu0 0.0
        %3302 = vmatprep.subr.mxu0 0.0
        %3303 = vmatpush1.msra.mxu0 0.0
        %3304 = vmatprep.subr.mxu0 0.0
        %3305 = vmatpush1.msra.mxu0 0.0
        %3306 = vmatprep.subr.mxu0 0.0
        %3307 = vmatpush1.msra.mxu0 0.0
        %3308 = vmatprep.subr.mxu0 0.0
        %3309 = vmatpush1.msra.mxu0 0.0
        %3310 = vmatprep.subr.mxu0 0.0
        %3311 = vmatpush1.msra.mxu0 0.0
        %3312 = vmatprep.subr.mxu0 0.0
        %3313 = vmatpush1.msra.mxu0 0.0
        %3314 = vmatprep.subr.mxu0 0.0
        %3315 = vmatpush1.msra.mxu0 0.0
        %3316 = vmatprep.subr.mxu0 0.0
        %3317 = vmatpush1.msra.mxu0 0.0
        %3318 = vmatprep.subr.mxu0 0.0
        %3319 = vmatpush1.msra.mxu0 0.0
        %3320 = vmatprep.subr.mxu0 0.0
        %3321 = vmatpush1.msra.mxu0 0.0
        %3322 = vmatprep.subr.mxu0 0.0
        %3323 = vmatpush1.msra.mxu0 0.0
        %3324 = vmatprep.subr.mxu0 0.0
        %3325 = vmatpush1.msra.mxu0 0.0
        %3326 = vmatprep.subr.mxu0 0.0
        %3327 = vmatpush1.msra.mxu0 0.0
        %3328 = vmatprep.subr.mxu0 0.0
        %3329 = vmatpush1.msra.mxu0 0.0
        %3330 = vmatprep.subr.mxu0 0.0
        %3331 = vmatpush1.msra.mxu0 %v2801
        %3332 = vmatprep.subr.mxu0 0.0
        %3333 = vmatpush2.msra.mxu0 0.0
        %3334 = vmatprep.subr.mxu0 0.0
        %3335 = vmatpush2.msra.mxu0 0.0
        %3336 = vmatprep.subr.mxu0 0.0
        %3337 = vmatpush2.msra.mxu0 0.0
        %3338 = vmatprep.subr.mxu0 0.0
        %3339 = vmatpush2.msra.mxu0 0.0
        %3340 = vmatprep.subr.mxu0 0.0
        %3341 = vmatpush2.msra.mxu0 0.0
        %3342 = vmatprep.subr.mxu0 0.0
        %3343 = vmatpush2.msra.mxu0 0.0
        %3344 = vmatprep.subr.mxu0 0.0
        %3345 = vmatpush2.msra.mxu0 0.0
        %3346 = vmatprep.subr.mxu0 0.0
        %3347 = vmatpush2.msra.mxu0 0.0
        %3348 = vmatprep.subr.mxu0 0.0
        %3349 = vmatpush2.msra.mxu0 0.0
        %3350 = vmatprep.subr.mxu0 0.0
        %3351 = vmatpush2.msra.mxu0 0.0
        %3352 = vmatprep.subr.mxu0 0.0
        %3353 = vmatpush2.msra.mxu0 0.0
        %3354 = vmatprep.subr.mxu0 0.0
        %3355 = vmatpush2.msra.mxu0 0.0
        %3356 = vmatprep.subr.mxu0 0.0
        %3357 = vmatpush2.msra.mxu0 0.0
        %3358 = vmatprep.subr.mxu0 0.0
        %3359 = vmatpush2.msra.mxu0 0.0
        %3360 = vmatprep.subr.mxu0 0.0
        %3361 = vmatpush2.msra.mxu0 0.0
        %3362 = vmatprep.subr.mxu0 0.0
        %3363 = vmatpush2.msra.mxu0 0.0
        %3364 = vmatprep.mubr.f32.mxu0 0.0
        %3365 = vmatmul.mubr.f32.gmra.mxu0 %v3298
        %v3366 = vpop.f32.mrf.mxu0
        %v3367 = vadd.f32 0.0, %v3366
        %v3368 = vpop.f32.mrf.mxu0
        %3369 = vdwg.mxu0
        %v3371 = vsel %vm1163, %v3150, 0
        %3373 = vmatprep.subr.mxu0 0.0
        %3374 = vmatpush1.msra.mxu0 0.0
        %3375 = vmatprep.subr.mxu0 0.0
        %3376 = vmatpush1.msra.mxu0 0.0
        %3377 = vmatprep.subr.mxu0 0.0
        %3378 = vmatpush1.msra.mxu0 0.0
        %3379 = vmatprep.subr.mxu0 0.0
        %3380 = vmatpush1.msra.mxu0 0.0
        %3381 = vmatprep.subr.mxu0 0.0
        %3382 = vmatpush1.msra.mxu0 0.0
        %3383 = vmatprep.subr.mxu0 0.0
        %3384 = vmatpush1.msra.mxu0 0.0
        %3385 = vmatprep.subr.mxu0 0.0
        %3386 = vmatpush1.msra.mxu0 0.0
        %3387 = vmatprep.subr.mxu0 0.0
        %3388 = vmatpush1.msra.mxu0 0.0
        %3389 = vmatprep.subr.mxu0 0.0
        %3390 = vmatpush1.msra.mxu0 0.0
        %3391 = vmatprep.subr.mxu0 0.0
        %3392 = vmatpush1.msra.mxu0 0.0
        %3393 = vmatprep.subr.mxu0 0.0
        %3394 = vmatpush1.msra.mxu0 0.0
        %3395 = vmatprep.subr.mxu0 0.0
        %3396 = vmatpush1.msra.mxu0 0.0
        %3397 = vmatprep.subr.mxu0 0.0
        %3398 = vmatpush1.msra.mxu0 0.0
        %3399 = vmatprep.subr.mxu0 0.0
        %3400 = vmatpush1.msra.mxu0 0.0
        %3401 = vmatprep.subr.mxu0 0.0
        %3402 = vmatpush1.msra.mxu0 0.0
        %3403 = vmatprep.subr.mxu0 0.0
        %3404 = vmatpush1.msra.mxu0 %v2802
        %3405 = vmatprep.subr.mxu0 0.0
        %3406 = vmatpush2.msra.mxu0 0.0
        %3407 = vmatprep.subr.mxu0 0.0
        %3408 = vmatpush2.msra.mxu0 0.0
        %3409 = vmatprep.subr.mxu0 0.0
        %3410 = vmatpush2.msra.mxu0 0.0
        %3411 = vmatprep.subr.mxu0 0.0
        %3412 = vmatpush2.msra.mxu0 0.0
        %3413 = vmatprep.subr.mxu0 0.0
        %3414 = vmatpush2.msra.mxu0 0.0
        %3415 = vmatprep.subr.mxu0 0.0
        %3416 = vmatpush2.msra.mxu0 0.0
        %3417 = vmatprep.subr.mxu0 0.0
        %3418 = vmatpush2.msra.mxu0 0.0
        %3419 = vmatprep.subr.mxu0 0.0
        %3420 = vmatpush2.msra.mxu0 0.0
        %3421 = vmatprep.subr.mxu0 0.0
        %3422 = vmatpush2.msra.mxu0 0.0
        %3423 = vmatprep.subr.mxu0 0.0
        %3424 = vmatpush2.msra.mxu0 0.0
        %3425 = vmatprep.subr.mxu0 0.0
        %3426 = vmatpush2.msra.mxu0 0.0
        %3427 = vmatprep.subr.mxu0 0.0
        %3428 = vmatpush2.msra.mxu0 0.0
        %3429 = vmatprep.subr.mxu0 0.0
        %3430 = vmatpush2.msra.mxu0 0.0
        %3431 = vmatprep.subr.mxu0 0.0
        %3432 = vmatpush2.msra.mxu0 0.0
        %3433 = vmatprep.subr.mxu0 0.0
        %3434 = vmatpush2.msra.mxu0 0.0
        %3435 = vmatprep.subr.mxu0 0.0
        %3436 = vmatpush2.msra.mxu0 0.0
        %3437 = vmatprep.mubr.f32.mxu0 0.0
        %3438 = vmatmul.mubr.f32.gmra.mxu0 %v3371
        %v3439 = vpop.f32.mrf.mxu0
        %v3440 = vadd.f32 0.0, %v3439
        %v3441 = vpop.f32.mrf.mxu0
        %3442 = vdwg.mxu0
        %v3443 = vcombine.low %v3221, %v3367
        %v3444 = vcombine.high %v3221, %v3367
        %v3446 = vunpack.c.l.s4 1983009808
        %v3447 = vunpack.c.0.s8 %v3446
        %v3448 = vlaneseq
        %v3449 = vshrl.u32 %v3448, 7
        %v3450 = vsub.s32 %v3447, %v3449
        %v3451 = vrot.slane %v3443, %v3450
        %v3453 = vunpack.c.l.s4 1983009808
        %v3454 = vunpack.c.0.s8 %v3453
        %v3455 = vlaneseq
        %v3456 = vshrl.u32 %v3455, 7
        %v3457 = vsub.s32 %v3454, %v3456
        %v3458 = vrot.slane %v3444, %v3457
        %v3459 = vcombine.low %v3294, %v3440
        %v3460 = vcombine.high %v3294, %v3440
        %v3462 = vunpack.c.l.s4 1983009808
        %v3463 = vunpack.c.0.s8 %v3462
        %v3464 = vlaneseq
        %v3465 = vshrl.u32 %v3464, 7
        %v3466 = vsub.s32 %v3463, %v3465
        %v3467 = vrot.slane %v3459, %v3466
        %v3469 = vunpack.c.l.s4 1983009808
        %v3470 = vunpack.c.0.s8 %v3469
        %v3471 = vlaneseq
        %v3472 = vshrl.u32 %v3471, 7
        %v3473 = vsub.s32 %v3470, %v3472
        %v3474 = vrot.slane %v3460, %v3473
        %v3475 = vcombine.low %v3451, %v3467
        %v3476 = vcombine.high %v3451, %v3467
        %v3478 = vunpack.c.l.s4 1934713408
        %v3479 = vunpack.c.0.s8 %v3478
        %v3480 = vlaneseq
        %v3481 = vshrl.u32 %v3480, 7
        %v3482 = vsub.s32 %v3479, %v3481
        %v3483 = vrot.slane %v3475, %v3482
        %v3485 = vunpack.c.l.s4 1934713408
        %v3486 = vunpack.c.0.s8 %v3485
        %v3487 = vlaneseq
        %v3488 = vshrl.u32 %v3487, 7
        %v3489 = vsub.s32 %v3486, %v3488
        %v3490 = vrot.slane %v3476, %v3489
        %v3491 = vcombine.low %v3458, %v3474
        %v3492 = vcombine.high %v3458, %v3474
        %v3494 = vunpack.c.l.s4 1934713408
        %v3495 = vunpack.c.0.s8 %v3494
        %v3496 = vlaneseq
        %v3497 = vshrl.u32 %v3496, 7
        %v3498 = vsub.s32 %v3495, %v3497
        %v3499 = vrot.slane %v3491, %v3498
        %v3501 = vunpack.c.l.s4 1934713408
        %v3502 = vunpack.c.0.s8 %v3501
        %v3503 = vlaneseq
        %v3504 = vshrl.u32 %v3503, 7
        %v3505 = vsub.s32 %v3502, %v3504
        %v3506 = vrot.slane %v3492, %v3505
        %v3507 = vcombine.high %v3483, 0.0
        %v3508 = vcombine.high %v3490, 0.0
        %v3509 = vcombine.high %v3499, 0.0
        %v3510 = vcombine.high %v3506, 0.0
        %v3511 = vcombine.low %v3483, %v3490
        %v3513 = vunpack.c.l.s4 1983009808
        %v3514 = vunpack.c.0.s8 %v3513
        %v3515 = vlaneseq
        %v3516 = vshrl.u32 %v3515, 7
        %v3517 = vsub.s32 %v3514, %v3516
        %v3518 = vrot.slane %v3511, %v3517
        %v3519 = vcombine.low %v3507, %v3508
        %v3521 = vunpack.c.l.s4 1983009808
        %v3522 = vunpack.c.0.s8 %v3521
        %v3523 = vlaneseq
        %v3524 = vshrl.u32 %v3523, 7
        %v3525 = vsub.s32 %v3522, %v3524
        %v3526 = vrot.slane %v3519, %v3525
        %v3527 = vcombine.low %v3499, %v3506
        %v3529 = vunpack.c.l.s4 1983009808
        %v3530 = vunpack.c.0.s8 %v3529
        %v3531 = vlaneseq
        %v3532 = vshrl.u32 %v3531, 7
        %v3533 = vsub.s32 %v3530, %v3532
        %v3534 = vrot.slane %v3527, %v3533
        %v3535 = vcombine.low %v3509, %v3510
        %v3537 = vunpack.c.l.s4 1983009808
        %v3538 = vunpack.c.0.s8 %v3537
        %v3539 = vlaneseq
        %v3540 = vshrl.u32 %v3539, 7
        %v3541 = vsub.s32 %v3538, %v3540
        %v3542 = vrot.slane %v3535, %v3541
        %v3543 = vcombine.low %v3518, %v3526
        %v3544 = vcombine.high %v3518, %v3526
        %v3546 = vunpack.c.l.s4 1934713408
        %v3547 = vunpack.c.0.s8 %v3546
        %v3548 = vlaneseq
        %v3549 = vshrl.u32 %v3548, 7
        %v3550 = vsub.s32 %v3547, %v3549
        %v3551 = vrot.slane %v3543, %v3550
        %v3553 = vunpack.c.l.s4 1934713408
        %v3554 = vunpack.c.0.s8 %v3553
        %v3555 = vlaneseq
        %v3556 = vshrl.u32 %v3555, 7
        %v3557 = vsub.s32 %v3554, %v3556
        %v3558 = vrot.slane %v3544, %v3557
        %v3559 = vcombine.low %v3534, %v3542
        %v3560 = vcombine.high %v3534, %v3542
        %v3562 = vunpack.c.l.s4 1934713408
        %v3563 = vunpack.c.0.s8 %v3562
        %v3564 = vlaneseq
        %v3565 = vshrl.u32 %v3564, 7
        %v3566 = vsub.s32 %v3563, %v3565
        %v3567 = vrot.slane %v3559, %v3566
        %v3569 = vunpack.c.l.s4 1934713408
        %v3570 = vunpack.c.0.s8 %v3569
        %v3571 = vlaneseq
        %v3572 = vshrl.u32 %v3571, 7
        %v3573 = vsub.s32 %v3570, %v3572
        %v3574 = vrot.slane %v3560, %v3573
        %v3575 = vcombine.low %v3551, %v3567
        %v3576 = vcombine.high %v3551, %v3567
        %v3577 = vcombine.low %v3558, %v3574
        %v3578 = vcombine.high %v3558, %v3574
        %3580 = vrot.lane.b32.xlu0 %v3576, 8
        %v3581 = vpop.permute.xlu0 %3580
        %3584 = vrot.lane.b32.xlu0 %v3577, 16
        %v3585 = vpop.permute.xlu0 %3584
        %3588 = vrot.lane.b32.xlu0 %v3578, 24
        %v3589 = vpop.permute.xlu0 %3588
        %v3591 = vsel %vm1163, %v3575, %v3581
        %v3592 = vsel %vm1953, %v3591, %v3585
        %v3593 = vsel %vm1955, %v3592, %v3589
        %s3594 = scalar_lea.vmem %s5, 32
        %v3595 = vld [vmem:[%s3594] sm:$0xff]
        %v3596 = vld [vmem:[%s3594 + $0x8] sm:$0xff]
        %v3597 = vld [vmem:[%s3594 + $0x10] sm:$0xff]
        %v3598 = vld [vmem:[%s3594 + $0x18] sm:$0xff]
        %s3599 = scalar_lea.vmem %s6, 1
        %v3600 = vld [vmem:[%s3599] sm:$0x1]
        %v3602 = vlaneseq
        %v3603 = vshrl.u32 %v3602, 7
        %v3604 = vsub.s32 0, %v3603
        %v3605 = vrot.slane %v3600, %v3604
        %v3608 = vsel %vm647, %v3593, 0
        %3610 = vmatprep.subr.mxu0 0.0
        %3611 = vmatpush1.msra.mxu0 0.0
        %3612 = vmatprep.subr.mxu0 0.0
        %3613 = vmatpush1.msra.mxu0 0.0
        %3614 = vmatprep.subr.mxu0 0.0
        %3615 = vmatpush1.msra.mxu0 0.0
        %3616 = vmatprep.subr.mxu0 0.0
        %3617 = vmatpush1.msra.mxu0 0.0
        %3618 = vmatprep.subr.mxu0 0.0
        %3619 = vmatpush1.msra.mxu0 0.0
        %3620 = vmatprep.subr.mxu0 0.0
        %3621 = vmatpush1.msra.mxu0 0.0
        %3622 = vmatprep.subr.mxu0 0.0
        %3623 = vmatpush1.msra.mxu0 0.0
        %3624 = vmatprep.subr.mxu0 0.0
        %3625 = vmatpush1.msra.mxu0 0.0
        %3626 = vmatprep.subr.mxu0 0.0
        %3627 = vmatpush1.msra.mxu0 0.0
        %3628 = vmatprep.subr.mxu0 0.0
        %3629 = vmatpush1.msra.mxu0 0.0
        %3630 = vmatprep.subr.mxu0 0.0
        %3631 = vmatpush1.msra.mxu0 0.0
        %3632 = vmatprep.subr.mxu0 0.0
        %3633 = vmatpush1.msra.mxu0 0.0
        %3634 = vmatprep.subr.mxu0 0.0
        %3635 = vmatpush1.msra.mxu0 %v3598
        %3636 = vmatprep.subr.mxu0 0.0
        %3637 = vmatpush1.msra.mxu0 %v3597
        %3638 = vmatprep.subr.mxu0 0.0
        %3639 = vmatpush1.msra.mxu0 %v3596
        %3640 = vmatprep.subr.mxu0 0.0
        %3641 = vmatpush1.msra.mxu0 %v3595
        %3642 = vmatprep.subr.mxu0 0.0
        %3643 = vmatpush2.msra.mxu0 0.0
        %3644 = vmatprep.subr.mxu0 0.0
        %3645 = vmatpush2.msra.mxu0 0.0
        %3646 = vmatprep.subr.mxu0 0.0
        %3647 = vmatpush2.msra.mxu0 0.0
        %3648 = vmatprep.subr.mxu0 0.0
        %3649 = vmatpush2.msra.mxu0 0.0
        %3650 = vmatprep.subr.mxu0 0.0
        %3651 = vmatpush2.msra.mxu0 0.0
        %3652 = vmatprep.subr.mxu0 0.0
        %3653 = vmatpush2.msra.mxu0 0.0
        %3654 = vmatprep.subr.mxu0 0.0
        %3655 = vmatpush2.msra.mxu0 0.0
        %3656 = vmatprep.subr.mxu0 0.0
        %3657 = vmatpush2.msra.mxu0 0.0
        %3658 = vmatprep.subr.mxu0 0.0
        %3659 = vmatpush2.msra.mxu0 0.0
        %3660 = vmatprep.subr.mxu0 0.0
        %3661 = vmatpush2.msra.mxu0 0.0
        %3662 = vmatprep.subr.mxu0 0.0
        %3663 = vmatpush2.msra.mxu0 0.0
        %3664 = vmatprep.subr.mxu0 0.0
        %3665 = vmatpush2.msra.mxu0 0.0
        %3666 = vmatprep.subr.mxu0 0.0
        %3667 = vmatpush2.msra.mxu0 0.0
        %3668 = vmatprep.subr.mxu0 0.0
        %3669 = vmatpush2.msra.mxu0 0.0
        %3670 = vmatprep.subr.mxu0 0.0
        %3671 = vmatpush2.msra.mxu0 0.0
        %3672 = vmatprep.subr.mxu0 0.0
        %3673 = vmatpush2.msra.mxu0 0.0
        %3674 = vmatprep.mubr.f32.mxu0 0.0
        %3675 = vmatmul.mubr.f32.gmra.mxu0 %v3608
        %v3676 = vpop.f32.mrf.mxu0
        %v3677 = vadd.f32 %v3605, %v3676
        %v3678 = vpop.f32.mrf.mxu0
        %3679 = vdwg.mxu0
        %v3680 = vadd.f32 %v2274, %v3677
        %s3681 = scalar_lea.vmem %s7, 1
        %v3682 = vld [vmem:[%s3681] sm:$0x1]
        %s3683 = scalar_lea.vmem %s8, 1
        %v3684 = vld [vmem:[%s3683] sm:$0x1]
        %v3685 = vsel %vm647, %v3680, 0.0
        %3686 = vadd.xlane.f32.xlu0 %v3685
        %v3687 = vpop.xlane.xlu0 %3686
        %v3688 = vmul.f32 %v3687, %v2047
        %v3689 = vsub.f32 %v3680, %v3688
        %v3690 = vmul.f32 %v3689, %v3689
        %v3691 = vsel %vm647, %v3690, 0.0
        %3692 = vadd.xlane.f32.xlu0 %v3691
        %v3693 = vpop.xlane.xlu0 %3692
        %v3694 = vmul.f32 %v3693, %v2047
        %v3695 = vadd.f32 %v3694, 1e-05
        %v3696 = vrsqrt.pop %v3695
        %v3697 = vmul.f32 %v3689, %v3696
        %v3699 = vlaneseq
        %v3700 = vshrl.u32 %v3699, 7
        %v3701 = vsub.s32 0, %v3700
        %v3702 = vrot.slane %v3682, %v3701
        %v3704 = vmul.f32 %v3697, %v3702
        %v3706 = vlaneseq
        %v3707 = vshrl.u32 %v3706, 7
        %v3708 = vsub.s32 0, %v3707
        %v3709 = vrot.slane %v3684, %v3708
        %v3711 = vadd.f32 %v3704, %v3709
        %s3712 = scalar_lea.vmem %s9, 32
        %v3713 = vld [vmem:[%s3712] sm:$0xff]
        %v3714 = vld [vmem:[%s3712 + $0x8] sm:$0xff]
        %v3715 = vld [vmem:[%s3712 + $0x10] sm:$0xff]
        %v3716 = vld [vmem:[%s3712 + $0x18] sm:$0xff]
        %s3717 = scalar_lea.vmem %s10, 1
        %v3718 = vld [vmem:[%s3717] sm:$0x1]
        %v3720 = vlaneseq
        %v3721 = vshrl.u32 %v3720, 7
        %v3722 = vsub.s32 0, %v3721
        %v3723 = vrot.slane %v3718, %v3722
        %v3726 = vsel %vm647, %v3711, 0
        %3728 = vmatprep.subr.mxu0 0.0
        %3729 = vmatpush1.msra.mxu0 0.0
        %3730 = vmatprep.subr.mxu0 0.0
        %3731 = vmatpush1.msra.mxu0 0.0
        %3732 = vmatprep.subr.mxu0 0.0
        %3733 = vmatpush1.msra.mxu0 0.0
        %3734 = vmatprep.subr.mxu0 0.0
        %3735 = vmatpush1.msra.mxu0 0.0
        %3736 = vmatprep.subr.mxu0 0.0
        %3737 = vmatpush1.msra.mxu0 0.0
        %3738 = vmatprep.subr.mxu0 0.0
        %3739 = vmatpush1.msra.mxu0 0.0
        %3740 = vmatprep.subr.mxu0 0.0
        %3741 = vmatpush1.msra.mxu0 0.0
        %3742 = vmatprep.subr.mxu0 0.0
        %3743 = vmatpush1.msra.mxu0 0.0
        %3744 = vmatprep.subr.mxu0 0.0
        %3745 = vmatpush1.msra.mxu0 0.0
        %3746 = vmatprep.subr.mxu0 0.0
        %3747 = vmatpush1.msra.mxu0 0.0
        %3748 = vmatprep.subr.mxu0 0.0
        %3749 = vmatpush1.msra.mxu0 0.0
        %3750 = vmatprep.subr.mxu0 0.0
        %3751 = vmatpush1.msra.mxu0 0.0
        %3752 = vmatprep.subr.mxu0 0.0
        %3753 = vmatpush1.msra.mxu0 %v3716
        %3754 = vmatprep.subr.mxu0 0.0
        %3755 = vmatpush1.msra.mxu0 %v3715
        %3756 = vmatprep.subr.mxu0 0.0
        %3757 = vmatpush1.msra.mxu0 %v3714
        %3758 = vmatprep.subr.mxu0 0.0
        %3759 = vmatpush1.msra.mxu0 %v3713
        %3760 = vmatprep.subr.mxu0 0.0
        %3761 = vmatpush2.msra.mxu0 0.0
        %3762 = vmatprep.subr.mxu0 0.0
        %3763 = vmatpush2.msra.mxu0 0.0
        %3764 = vmatprep.subr.mxu0 0.0
        %3765 = vmatpush2.msra.mxu0 0.0
        %3766 = vmatprep.subr.mxu0 0.0
        %3767 = vmatpush2.msra.mxu0 0.0
        %3768 = vmatprep.subr.mxu0 0.0
        %3769 = vmatpush2.msra.mxu0 0.0
        %3770 = vmatprep.subr.mxu0 0.0
        %3771 = vmatpush2.msra.mxu0 0.0
        %3772 = vmatprep.subr.mxu0 0.0
        %3773 = vmatpush2.msra.mxu0 0.0
        %3774 = vmatprep.subr.mxu0 0.0
        %3775 = vmatpush2.msra.mxu0 0.0
        %3776 = vmatprep.subr.mxu0 0.0
        %3777 = vmatpush2.msra.mxu0 0.0
        %3778 = vmatprep.subr.mxu0 0.0
        %3779 = vmatpush2.msra.mxu0 0.0
        %3780 = vmatprep.subr.mxu0 0.0
        %3781 = vmatpush2.msra.mxu0 0.0
        %3782 = vmatprep.subr.mxu0 0.0
        %3783 = vmatpush2.msra.mxu0 0.0
        %3784 = vmatprep.subr.mxu0 0.0
        %3785 = vmatpush2.msra.mxu0 0.0
        %3786 = vmatprep.subr.mxu0 0.0
        %3787 = vmatpush2.msra.mxu0 0.0
        %3788 = vmatprep.subr.mxu0 0.0
        %3789 = vmatpush2.msra.mxu0 0.0
        %3790 = vmatprep.subr.mxu0 0.0
        %3791 = vmatpush2.msra.mxu0 0.0
        %3792 = vmatprep.mubr.f32.mxu0 0.0
        %3793 = vmatmul.mubr.f32.gmra.mxu0 %v3726
        %v3794 = vpop.f32.mrf.mxu0
        %v3795 = vadd.f32 %v3723, %v3794
        %v3796 = vpop.f32.mrf.mxu0
        %3797 = vdwg.mxu0
        %v3798 = vmax.f32 %v3795, 0.0
        %s3799 = scalar_lea.vmem %s11, 64
        %v3800 = vld [vmem:[%s3799] sm:$0xff]
        %v3801 = vld [vmem:[%s3799 + $0x8] sm:$0xff]
        %v3802 = vld [vmem:[%s3799 + $0x10] sm:$0xff]
        %v3803 = vld [vmem:[%s3799 + $0x18] sm:$0xff]
        %v3804 = vld [vmem:[%s3799 + $0x20] sm:$0xff]
        %v3805 = vld [vmem:[%s3799 + $0x28] sm:$0xff]
        %v3806 = vld [vmem:[%s3799 + $0x30] sm:$0xff]
        %v3807 = vld [vmem:[%s3799 + $0x38] sm:$0xff]
        %s3808 = scalar_lea.vmem %s12, 1
        %v3809 = vld [vmem:[%s3808] sm:$0x1]
        %v3811 = vlaneseq
        %v3812 = vshrl.u32 %v3811, 7
        %v3813 = vsub.s32 0, %v3812
        %v3814 = vrot.slane %v3809, %v3813
        %v3817 = vsel %vm562, %v3798, 0
        %3819 = vmatprep.subr.mxu0 0.0
        %3820 = vmatpush1.msra.mxu0 0.0
        %3821 = vmatprep.subr.mxu0 0.0
        %3822 = vmatpush1.msra.mxu0 0.0
        %3823 = vmatprep.subr.mxu0 0.0
        %3824 = vmatpush1.msra.mxu0 0.0
        %3825 = vmatprep.subr.mxu0 0.0
        %3826 = vmatpush1.msra.mxu0 0.0
        %3827 = vmatprep.subr.mxu0 0.0
        %3828 = vmatpush1.msra.mxu0 0.0
        %3829 = vmatprep.subr.mxu0 0.0
        %3830 = vmatpush1.msra.mxu0 0.0
        %3831 = vmatprep.subr.mxu0 0.0
        %3832 = vmatpush1.msra.mxu0 0.0
        %3833 = vmatprep.subr.mxu0 0.0
        %3834 = vmatpush1.msra.mxu0 0.0
        %3835 = vmatprep.subr.mxu0 0.0
        %3836 = vmatpush1.msra.mxu0 %v3807
        %3837 = vmatprep.subr.mxu0 0.0
        %3838 = vmatpush1.msra.mxu0 %v3806
        %3839 = vmatprep.subr.mxu0 0.0
        %3840 = vmatpush1.msra.mxu0 %v3805
        %3841 = vmatprep.subr.mxu0 0.0
        %3842 = vmatpush1.msra.mxu0 %v3804
        %3843 = vmatprep.subr.mxu0 0.0
        %3844 = vmatpush1.msra.mxu0 %v3803
        %3845 = vmatprep.subr.mxu0 0.0
        %3846 = vmatpush1.msra.mxu0 %v3802
        %3847 = vmatprep.subr.mxu0 0.0
        %3848 = vmatpush1.msra.mxu0 %v3801
        %3849 = vmatprep.subr.mxu0 0.0
        %3850 = vmatpush1.msra.mxu0 %v3800
        %3851 = vmatprep.subr.mxu0 0.0
        %3852 = vmatpush2.msra.mxu0 0.0
        %3853 = vmatprep.subr.mxu0 0.0
        %3854 = vmatpush2.msra.mxu0 0.0
        %3855 = vmatprep.subr.mxu0 0.0
        %3856 = vmatpush2.msra.mxu0 0.0
        %3857 = vmatprep.subr.mxu0 0.0
        %3858 = vmatpush2.msra.mxu0 0.0
        %3859 = vmatprep.subr.mxu0 0.0
        %3860 = vmatpush2.msra.mxu0 0.0
        %3861 = vmatprep.subr.mxu0 0.0
        %3862 = vmatpush2.msra.mxu0 0.0
        %3863 = vmatprep.subr.mxu0 0.0
        %3864 = vmatpush2.msra.mxu0 0.0
        %3865 = vmatprep.subr.mxu0 0.0
        %3866 = vmatpush2.msra.mxu0 0.0
        %3867 = vmatprep.subr.mxu0 0.0
        %3868 = vmatpush2.msra.mxu0 0.0
        %3869 = vmatprep.subr.mxu0 0.0
        %3870 = vmatpush2.msra.mxu0 0.0
        %3871 = vmatprep.subr.mxu0 0.0
        %3872 = vmatpush2.msra.mxu0 0.0
        %3873 = vmatprep.subr.mxu0 0.0
        %3874 = vmatpush2.msra.mxu0 0.0
        %3875 = vmatprep.subr.mxu0 0.0
        %3876 = vmatpush2.msra.mxu0 0.0
        %3877 = vmatprep.subr.mxu0 0.0
        %3878 = vmatpush2.msra.mxu0 0.0
        %3879 = vmatprep.subr.mxu0 0.0
        %3880 = vmatpush2.msra.mxu0 0.0
        %3881 = vmatprep.subr.mxu0 0.0
        %3882 = vmatpush2.msra.mxu0 0.0
        %3883 = vmatprep.mubr.f32.mxu0 0.0
        %3884 = vmatmul.mubr.f32.gmra.mxu0 %v3817
        %v3885 = vpop.f32.mrf.mxu0
        %v3886 = vadd.f32 %v3814, %v3885
        %v3887 = vpop.f32.mrf.mxu0
        %3888 = vdwg.mxu0
        %v3889 = vadd.f32 %v3711, %v3886
        %s3890 = scalar_lea.vmem %s13, 1
        %v3891 = vld [vmem:[%s3890] sm:$0x1]
        %s3892 = scalar_lea.vmem %s14, 1
        %v3893 = vld [vmem:[%s3892] sm:$0x1]
        %v3894 = vsel %vm647, %v3889, 0.0
        %3895 = vadd.xlane.f32.xlu0 %v3894
        %v3896 = vpop.xlane.xlu0 %3895
        %v3897 = vmul.f32 %v3896, %v2047
        %v3898 = vsub.f32 %v3889, %v3897
        %v3899 = vmul.f32 %v3898, %v3898
        %v3900 = vsel %vm647, %v3899, 0.0
        %3901 = vadd.xlane.f32.xlu0 %v3900
        %v3902 = vpop.xlane.xlu0 %3901
        %v3903 = vmul.f32 %v3902, %v2047
        %v3904 = vadd.f32 %v3903, 1e-05
        %v3905 = vrsqrt.pop %v3904
        %v3906 = vmul.f32 %v3898, %v3905
        %v3908 = vlaneseq
        %v3909 = vshrl.u32 %v3908, 7
        %v3910 = vsub.s32 0, %v3909
        %v3911 = vrot.slane %v3891, %v3910
        %v3913 = vmul.f32 %v3906, %v3911
        %v3915 = vlaneseq
        %v3916 = vshrl.u32 %v3915, 7
        %v3917 = vsub.s32 0, %v3916
        %v3918 = vrot.slane %v3893, %v3917
        %v3920 = vadd.f32 %v3913, %v3918
        %v3921 = vld [vmem:[%s15] sm:$0xff]
        %v3922 = vld [vmem:[%s15 + $0x8] sm:$0xff]
        %v3923 = vld [vmem:[%s15 + $0x10] sm:$0xff]
        %v3924 = vld [vmem:[%s15 + $0x18] sm:$0xff]
        %v3925 = vld [vmem:[%s16] sm:$0x1]
        %v3927 = vlaneseq
        %v3928 = vshrl.u32 %v3927, 7
        %v3929 = vsub.s32 0, %v3928
        %v3930 = vrot.slane %v3925, %v3929
        %v3933 = vsel %vm647, %v3920, 0
        %3935 = vmatprep.subr.mxu0 0.0
        %3936 = vmatpush1.msra.mxu0 0.0
        %3937 = vmatprep.subr.mxu0 0.0
        %3938 = vmatpush1.msra.mxu0 0.0
        %3939 = vmatprep.subr.mxu0 0.0
        %3940 = vmatpush1.msra.mxu0 0.0
        %3941 = vmatprep.subr.mxu0 0.0
        %3942 = vmatpush1.msra.mxu0 0.0
        %3943 = vmatprep.subr.mxu0 0.0
        %3944 = vmatpush1.msra.mxu0 0.0
        %3945 = vmatprep.subr.mxu0 0.0
        %3946 = vmatpush1.msra.mxu0 0.0
        %3947 = vmatprep.subr.mxu0 0.0
        %3948 = vmatpush1.msra.mxu0 0.0
        %3949 = vmatprep.subr.mxu0 0.0
        %3950 = vmatpush1.msra.mxu0 0.0
        %3951 = vmatprep.subr.mxu0 0.0
        %3952 = vmatpush1.msra.mxu0 0.0
        %3953 = vmatprep.subr.mxu0 0.0
        %3954 = vmatpush1.msra.mxu0 0.0
        %3955 = vmatprep.subr.mxu0 0.0
        %3956 = vmatpush1.msra.mxu0 0.0
        %3957 = vmatprep.subr.mxu0 0.0
        %3958 = vmatpush1.msra.mxu0 0.0
        %3959 = vmatprep.subr.mxu0 0.0
        %3960 = vmatpush1.msra.mxu0 %v3924
        %3961 = vmatprep.subr.mxu0 0.0
        %3962 = vmatpush1.msra.mxu0 %v3923
        %3963 = vmatprep.subr.mxu0 0.0
        %3964 = vmatpush1.msra.mxu0 %v3922
        %3965 = vmatprep.subr.mxu0 0.0
        %3966 = vmatpush1.msra.mxu0 %v3921
        %3967 = vmatprep.subr.mxu0 0.0
        %3968 = vmatpush2.msra.mxu0 0.0
        %3969 = vmatprep.subr.mxu0 0.0
        %3970 = vmatpush2.msra.mxu0 0.0
        %3971 = vmatprep.subr.mxu0 0.0
        %3972 = vmatpush2.msra.mxu0 0.0
        %3973 = vmatprep.subr.mxu0 0.0
        %3974 = vmatpush2.msra.mxu0 0.0
        %3975 = vmatprep.subr.mxu0 0.0
        %3976 = vmatpush2.msra.mxu0 0.0
        %3977 = vmatprep.subr.mxu0 0.0
        %3978 = vmatpush2.msra.mxu0 0.0
        %3979 = vmatprep.subr.mxu0 0.0
        %3980 = vmatpush2.msra.mxu0 0.0
        %3981 = vmatprep.subr.mxu0 0.0
        %3982 = vmatpush2.msra.mxu0 0.0
        %3983 = vmatprep.subr.mxu0 0.0
        %3984 = vmatpush2.msra.mxu0 0.0
        %3985 = vmatprep.subr.mxu0 0.0
        %3986 = vmatpush2.msra.mxu0 0.0
        %3987 = vmatprep.subr.mxu0 0.0
        %3988 = vmatpush2.msra.mxu0 0.0
        %3989 = vmatprep.subr.mxu0 0.0
        %3990 = vmatpush2.msra.mxu0 0.0
        %3991 = vmatprep.subr.mxu0 0.0
        %3992 = vmatpush2.msra.mxu0 0.0
        %3993 = vmatprep.subr.mxu0 0.0
        %3994 = vmatpush2.msra.mxu0 0.0
        %3995 = vmatprep.subr.mxu0 0.0
        %3996 = vmatpush2.msra.mxu0 0.0
        %3997 = vmatprep.subr.mxu0 0.0
        %3998 = vmatpush2.msra.mxu0 0.0
        %3999 = vmatprep.mubr.f32.mxu0 0.0
        %4000 = vmatmul.mubr.f32.gmra.mxu0 %v3933
        %v4001 = vpop.f32.mrf.mxu0
        %v4002 = vadd.f32 %v3930, %v4001
        %v4003 = vpop.f32.mrf.mxu0
        %4004 = vdwg.mxu0
        %4005 = vst.msk [vmem:[%s539] sm:$0xff] %vm562, %v4002
        %s4006 = sand.u32 %s401, 1
        %s4007 = scalar_lea.sflag [#allocation3], %s4006
        %s4008 = sand.u32 %s401, 1
        %s4009 = smul.addr %s4008, 8
        %s4010 = scalar_lea.vmem [#allocation2], %s4009
        // Predicated region
        $region89: #{tpu_custom_call.1} parent=87 // pred_check
          %p4011 = pneg %p411
        $region90: #{tpu_custom_call.1} parent=87 // pred_check_branch
          %4013 = sbr.rel (%p4011) target = $region92
        $region91: #{tpu_custom_call.1} parent=87 // pred_region
          %s4015 = ssub.s32 128, 128
          %4016 = vsyncadd %s4007, %s4015
          %s4017 = smul.addr %s31, 128
          %s4018 = scalar_lea.hbm %s17, %s4017
          %s4020 = sshll.u32 %s4010, 4
          %s4021 = int_to_ptr.vmem [resolvable:$true] %s4020
          %4023 = dma.vmem_to_hbm [thread:$0]  %s4021, 128, %s4018, %s4007
        $region92: #{tpu_custom_call.1} parent=87 // pred_fallthru
          _
      $region88: #{tpu_custom_call.1} parent=5 // pred_fallthru
        _
      %p4024 = scmp.le.s32.totalorder 2, %s26
      // Predicated region
      $region93: #{tpu_custom_call.1} parent=5 // pred_check
        %p4025 = pneg %p4024
      $region94: #{tpu_custom_call.1} parent=5 // pred_check_branch
        %4027 = sbr.rel (%p4025) target = $region96
      $region95: #{tpu_custom_call.1} parent=5 // pred_region
        %s4028 = ssub.s32 %s26, 2
        // Predicated region
        $region97: #{tpu_custom_call.1} parent=95 // pred_check
          %p4029 = pneg %p417
        $region98: #{tpu_custom_call.1} parent=95 // pred_check_branch
          %4031 = sbr.rel (%p4029) target = $region100
        $region99: #{tpu_custom_call.1} parent=95 // pred_region
          %s4032 = sand.u32 %s402, 1
          %s4033 = scalar_lea.sflag [#allocation3], %s4032
          %s4034 = sand.u32 %s402, 1
          %s4035 = smul.addr %s4034, 8
          %s4036 = scalar_lea.vmem [#allocation2], %s4035
          %4037 = dma.done %s4033, 128
        $region100: #{tpu_custom_call.1} parent=95 // pred_fallthru
          _
      $region96: #{tpu_custom_call.1} parent=5 // pred_fallthru
        _
    $region6: #{tpu_custom_call.1} parent=1 // loop_footer
      %s30 = sadd.s32 1, %s26
    $region7: #{tpu_custom_call.1} parent=1 // loop_footer_branch
      %25 = sbr.rel target = $region3
    $region8: #{tpu_custom_call.1} parent=1 // loop_exit
      _
    %4038 = vsyncpa [#allocation3], 1
    %s4039 = scalar_lea.sflag [#allocation3], 1
    %4040 = vsyncpa %s4039, 1

</llo_original>
